<compile_context>
chip_gen: v7x
topology: tpu7x:2x2x1
jax: 0.10.0
libtpu: 0.0.40
codegen_flags: <defaults>
</compile_context>

<pallas_src>
import jax
import jax.numpy as jnp
from jax import lax
from jax.experimental import pallas as pl
from jax.experimental.pallas import tpu as pltpu

EPS = 1e-5


def _pick_tile_rows(H):
    # 8 output rows per tile -> ~0.5 MiB f32 per tile at CycleGAN size
    # (W=64, C=256) and still >1 tile at the small test size (H=16 -> 2).
    return 8 if H % 8 == 0 else H


def _make_resnet_block_kernel(H, W, C, TH):
    n_tiles = H // TH
    THW = TH * W
    inv_hw = 1.0 / float(H * W)

    def kernel(x_ref, w1_ref, w2_ref, o_ref, slab_ref, acc_ref):
        # x_ref : (1, H, W, C) f32         w*_ref : (3, 3C, C) bf16
        # o_ref : (1, H, W, C) f32
        # slab_ref : ((H+2)*W, 3C) bf16    -- shared im2col slab (both convs)
        # acc_ref  : (H*W, C)     f32      -- shared conv-output accumulator

        def write_slab_tile(t, tile_bf):
            """tile_bf: (TH, W, C) bf16 -> slab rows [(t*TH+1)*W, +TH*W).

            Lane-dense kx taps with the horizontal reflect boundary folded in:
              left[:, w]  = t[:, w-1]  (w=0   -> t[:, 1])
              right[:, w] = t[:, w+1]  (w=W-1 -> t[:, W-2])
            Channel order (kx*C + ci) matches the (3C, C) weight layout.
            """
            left = jnp.concatenate([tile_bf[:, 1:2], tile_bf[:, :W - 1]], axis=1)
            right = jnp.concatenate([tile_bf[:, 1:], tile_bf[:, W - 2:W - 1]], axis=1)
            slab_t = jnp.concatenate([left, tile_bf, right], axis=-1)
            start = (t * TH + 1) * W            # static, W-aligned offset
            slab_ref[start:start + THW, :] = slab_t.reshape(THW, 3 * C)

        def write_reflect_rows():
            # Vertical reflect pad, done in-place in flat row-major space:
            # padded row 0   = input row 1    (slab rows [2W, 3W))
            # padded row H+1 = input row H-2  (slab rows [(H-1)W, HW))
            slab_ref[0:W, :] = slab_ref[2 * W:3 * W, :]
            slab_ref[(H + 1) * W:(H + 2) * W, :] = slab_ref[(H - 1) * W:H * W, :]

        def conv_pass(w_ref):
            """3 MXU dots (K=3C) per row-tile into acc_ref; fused IN stats.

            Returns (mean, inv_std), each (1, C) f32.  Bias intentionally
            omitted: the affine-free InstanceNorm that immediately follows
            cancels any per-channel constant exactly.
            """
            ssum = jnp.zeros((1, C), jnp.float32)
            ssq = jnp.zeros((1, C), jnp.float32)
            for t in range(n_tiles):                 # static unroll
                r0w = t * THW
                # ky windows are static, row-aligned slices of the slab
                # scratch (offsets are multiples of W) -> no relayout copies.
                acc = jnp.dot(slab_ref[r0w:r0w + THW, :], w_ref[0],
                              preferred_element_type=jnp.float32)
                for dy in (1, 2):
                    acc = acc + jnp.dot(
                        slab_ref[r0w + dy * W:r0w + dy * W + THW, :], w_ref[dy],
                        preferred_element_type=jnp.float32)
                acc_ref[r0w:r0w + THW, :] = acc
                ssum = ssum + jnp.sum(acc, axis=0, keepdims=True)
                ssq = ssq + jnp.sum(acc * acc, axis=0, keepdims=True)
            mean = ssum * inv_hw
            var = jnp.maximum(ssq * inv_hw - mean * mean, 0.0)
            return mean, lax.rsqrt(var + EPS)

        # ---- conv1: build slab from x, dots + stats -----------------------
        for t in range(n_tiles):
            write_slab_tile(t, x_ref[0, t * TH:(t + 1) * TH].astype(jnp.bfloat16))
        write_reflect_rows()
        mean1, inv1 = conv_pass(w1_ref)

        # ---- IN1 + ReLU fused into building conv2's slab (h1 stays bf16) --
        for t in range(n_tiles):
            r0w = t * THW
            h = jnp.maximum((acc_ref[r0w:r0w + THW, :] - mean1) * inv1, 0.0)
            write_slab_tile(t, h.astype(jnp.bfloat16).reshape(TH, W, C))
        write_reflect_rows()
        mean2, inv2 = conv_pass(w2_ref)

        # ---- IN2 + residual add, per tile ---------------------------------
        for t in range(n_tiles):
            r0w = t * THW
            y = (acc_ref[r0w:r0w + THW, :] - mean2) * inv2
            o_ref[0, t * TH:(t + 1) * TH] = (
                x_ref[0, t * TH:(t + 1) * TH] + y.reshape(TH, W, C)
            ).astype(o_ref.dtype)

    return kernel


def resnet_block(x_nchw, w1, b1, w2, b2):
    """x_nchw: (N, C, H, W) f32; w*: (3, 3, C, C) HWIO; b*: (C,) (unused:
    exact no-ops under affine-free InstanceNorm -- see kernel docstring).

    NOTE: output lane width = C; for C < 128 (like the small test) the MXU /
    stores are lane-padded -- fine for tests; production CycleGAN C=256 is
    already lane-dense on all generations.
    """
    del b1, b2
    x = jnp.transpose(x_nchw, (0, 2, 3, 1)).astype(jnp.float32)  # -> NHWC
    N, H, W, C = x.shape
    TH = _pick_tile_rows(H)
    # Pre-fold the kx taps into the contraction axis: (ky, kx*C+ci, co), bf16.
    w1_r = jnp.asarray(w1, jnp.float32).reshape(3, 3 * C, C).astype(jnp.bfloat16)
    w2_r = jnp.asarray(w2, jnp.float32).reshape(3, 3 * C, C).astype(jnp.bfloat16)

    kernel = _make_resnet_block_kernel(H, W, C, TH)
    out = pl.pallas_call(
        kernel,
        out_shape=jax.ShapeDtypeStruct((N, H, W, C), x.dtype),
        grid_spec=pltpu.PrefetchScalarGridSpec(
            num_scalar_prefetch=0,
            grid=(N,),
            in_specs=[
                pl.BlockSpec((1, H, W, C), lambda b: (b, 0, 0, 0)),
                # Weights: constant index_map -> fetched once, reused across
                # the batch grid.
                pl.BlockSpec((3, 3 * C, C), lambda b: (0, 0, 0)),
                pl.BlockSpec((3, 3 * C, C), lambda b: (0, 0, 0)),
            ],
            out_specs=pl.BlockSpec((1, H, W, C), lambda b: (b, 0, 0, 0)),
            scratch_shapes=[
                # One im2col slab (bf16) shared by both convs + one f32
                # conv-output accumulator; persist across grid steps and are
                # fully rewritten per image.
                pltpu.VMEM(((H + 2) * W, 3 * C), jnp.bfloat16),
                pltpu.VMEM((H * W, C), jnp.float32),
            ],
        ),
        compiler_params=pltpu.CompilerParams(
            dimension_semantics=("parallel",),
            # Re-derived for the tiled working set (~28 MiB at C=256, 64x64):
            # above v5e's 16 MiB scoped default, below v7x's 64 MiB physical.
            vmem_limit_bytes=40 * 1024 * 1024),
    )(x, w1_r, w2_r)

    return jnp.transpose(out, (0, 3, 1, 2))  # back to NCHW


def resnet_block_ref(x_nchw, w1, b1, w2, b2, conv_dtype=jnp.float32):
    """Pure-JAX reference.  conv_dtype=bf16 mirrors the kernel's MXU operand
    precision (f32 accumulation); conv_dtype=f32 is the full-precision spec."""
    x = jnp.transpose(x_nchw, (0, 2, 3, 1)).astype(jnp.float32)

    def conv(t, w, b):
        tp = jnp.pad(t, ((0, 0), (1, 1), (1, 1), (0, 0)), mode="reflect")
        y = jax.lax.conv_general_dilated(
            tp.astype(conv_dtype), w.astype(conv_dtype), (1, 1), "VALID",
            dimension_numbers=("NHWC", "HWIO", "NHWC"),
            preferred_element_type=jnp.float32,
            precision=jax.lax.Precision.HIGHEST)
        return y + b  # bias kept in the reference (cancels in IN)

    def inorm(t):
        m = jnp.mean(t, axis=(1, 2), keepdims=True)
        c = t - m
        v = jnp.mean(c * c, axis=(1, 2), keepdims=True)
        return c * jax.lax.rsqrt(v + EPS)

    h = jnp.maximum(inorm(conv(x, w1, b1)), 0.0)
    h = inorm(conv(h, w2, b2))
    return jnp.transpose(x + h, (0, 3, 1, 2))


if __name__ == "__main__":
    N, C, H, W = 2, 4, 16, 16  # dim = 4 (small test config; 2 row-tiles)
    key = jax.random.PRNGKey(0)
    kx, kw1, kb1, kw2, kb2 = jax.random.split(key, 5)

    x = jax.random.normal(kx, (N, C, H, W), jnp.float32)
    # Conv2d(dim, dim, kernel_size=3, bias=True) params, stored HWIO.
    w1 = jax.random.normal(kw1, (3, 3, C, C), jnp.float32) * 0.1
    b1 = jax.random.normal(kb1, (C,), jnp.float32) * 0.1
    w2 = jax.random.normal(kw2, (3, 3, C, C), jnp.float32) * 0.1
    b2 = jax.random.normal(kb2, (C,), jnp.float32) * 0.1

    out = resnet_block(x, w1, b1, w2, b2)
    jax.block_until_ready(out)
    assert out.shape == (N, C, H, W), out.shape

    # Tight check against a reference using the same MXU operand precision
    # (validates padding / conv / InstanceNorm / residual logic).
    ref_bf16 = resnet_block_ref(x, w1, b1, w2, b2, conv_dtype=jnp.bfloat16)
    err_bf16 = float(jnp.max(jnp.abs(out - ref_bf16)))
    assert err_bf16 < 2e-3, f"mismatch vs bf16-operand reference: {err_bf16}"

    # Looser envelope against the full-f32 reference (bf16 MXU operand
    # rounding only).
    ref_f32 = resnet_block_ref(x, w1, b1, w2, b2, conv_dtype=jnp.float32)
    err_f32 = float(jnp.max(jnp.abs(out - ref_f32)))
    assert err_f32 < 5e-2, f"mismatch vs f32 reference: {err_f32}"

    print("KERNEL_OK")
</pallas_src>

<mosaic_0001>
module attributes {stable_mosaic.version = 11 : i64} {
  func.func @kernel(%arg0: i32, %arg1: memref<1x16x16x4xf32, #tpu.memory_space<vmem>>, %arg2: memref<3x12x4xbf16, #tpu.memory_space<vmem>>, %arg3: memref<3x12x4xbf16, #tpu.memory_space<vmem>>, %arg4: memref<1x16x16x4xf32, #tpu.memory_space<vmem>>, %arg5: memref<288x12xbf16, #tpu.memory_space<vmem>>, %arg6: memref<256x4xf32, #tpu.memory_space<vmem>>) attributes {dimension_semantics = [#tpu.dimension_semantics<parallel>], iteration_bounds = array<i64: 2>, scalar_prefetch = 0 : i64, scratch_operands = 2 : i64, tpu.core_type = #tpu.core_type<tc>, window_params = [{transform_indices = @transform_0, window_bounds = array<i64: 1, 16, 16, 4>}, {pipeline_mode = #tpu.pipeline_mode<synchronous>, transform_indices = @transform_1, window_bounds = array<i64: 3, 12, 4>}, {pipeline_mode = #tpu.pipeline_mode<synchronous>, transform_indices = @transform_2, window_bounds = array<i64: 3, 12, 4>}, {transform_indices = @transform_3, window_bounds = array<i64: 1, 16, 16, 4>}]} {
    %c0 = arith.constant 0 : index
    %c0_0 = arith.constant 0 : index
    %c0_1 = arith.constant 0 : index
    %c0_2 = arith.constant 0 : index
    %0 = vector.load %arg1[%c0, %c0_0, %c0_1, %c0_2] : memref<1x16x16x4xf32, #tpu.memory_space<vmem>>, vector<1x8x16x4xf32>
    %1 = vector.shape_cast %0 : vector<1x8x16x4xf32> to vector<8x16x4xf32>
    %2 = arith.truncf %1 : vector<8x16x4xf32> to vector<8x16x4xbf16>
    %3 = vector.extract_strided_slice %2 {offsets = [0, 1, 0], sizes = [8, 1, 4], strides = [1, 1, 1]} : vector<8x16x4xbf16> to vector<8x1x4xbf16>
    %4 = vector.extract_strided_slice %2 {offsets = [0, 0, 0], sizes = [8, 15, 4], strides = [1, 1, 1]} : vector<8x16x4xbf16> to vector<8x15x4xbf16>
    %5 = tpu.concatenate %3, %4 in 1 : vector<8x1x4xbf16>, vector<8x15x4xbf16> -> vector<8x16x4xbf16>
    %6 = vector.extract_strided_slice %2 {offsets = [0, 1, 0], sizes = [8, 15, 4], strides = [1, 1, 1]} : vector<8x16x4xbf16> to vector<8x15x4xbf16>
    %7 = vector.extract_strided_slice %2 {offsets = [0, 14, 0], sizes = [8, 1, 4], strides = [1, 1, 1]} : vector<8x16x4xbf16> to vector<8x1x4xbf16>
    %8 = tpu.concatenate %6, %7 in 1 : vector<8x15x4xbf16>, vector<8x1x4xbf16> -> vector<8x16x4xbf16>
    %9 = tpu.concatenate %5, %2, %8 in 2 : vector<8x16x4xbf16>, vector<8x16x4xbf16>, vector<8x16x4xbf16> -> vector<8x16x12xbf16>
    %10 = vector.shape_cast %9 : vector<8x16x12xbf16> to vector<128x12xbf16>
    %c16 = arith.constant 16 : index
    %c0_3 = arith.constant 0 : index
    %11 = vector.load %arg5[%c16, %c0_3] : memref<288x12xbf16, #tpu.memory_space<vmem>>, vector<128x12xbf16>
    tpu.vector_store %arg5[%c16, %c0_3], %10 {strides = array<i32>} : memref<288x12xbf16, #tpu.memory_space<vmem>>, vector<128x12xbf16>,
    %c0_4 = arith.constant 0 : index
    %c8 = arith.constant 8 : index
    %c0_5 = arith.constant 0 : index
    %c0_6 = arith.constant 0 : index
    %12 = vector.load %arg1[%c0_4, %c8, %c0_5, %c0_6] : memref<1x16x16x4xf32, #tpu.memory_space<vmem>>, vector<1x8x16x4xf32>
    %13 = vector.shape_cast %12 : vector<1x8x16x4xf32> to vector<8x16x4xf32>
    %14 = arith.truncf %13 : vector<8x16x4xf32> to vector<8x16x4xbf16>
    %15 = vector.extract_strided_slice %14 {offsets = [0, 1, 0], sizes = [8, 1, 4], strides = [1, 1, 1]} : vector<8x16x4xbf16> to vector<8x1x4xbf16>
    %16 = vector.extract_strided_slice %14 {offsets = [0, 0, 0], sizes = [8, 15, 4], strides = [1, 1, 1]} : vector<8x16x4xbf16> to vector<8x15x4xbf16>
    %17 = tpu.concatenate %15, %16 in 1 : vector<8x1x4xbf16>, vector<8x15x4xbf16> -> vector<8x16x4xbf16>
    %18 = vector.extract_strided_slice %14 {offsets = [0, 1, 0], sizes = [8, 15, 4], strides = [1, 1, 1]} : vector<8x16x4xbf16> to vector<8x15x4xbf16>
    %19 = vector.extract_strided_slice %14 {offsets = [0, 14, 0], sizes = [8, 1, 4], strides = [1, 1, 1]} : vector<8x16x4xbf16> to vector<8x1x4xbf16>
    %20 = tpu.concatenate %18, %19 in 1 : vector<8x15x4xbf16>, vector<8x1x4xbf16> -> vector<8x16x4xbf16>
    %21 = tpu.concatenate %17, %14, %20 in 2 : vector<8x16x4xbf16>, vector<8x16x4xbf16>, vector<8x16x4xbf16> -> vector<8x16x12xbf16>
    %22 = vector.shape_cast %21 : vector<8x16x12xbf16> to vector<128x12xbf16>
    %c144 = arith.constant 144 : index
    %c0_7 = arith.constant 0 : index
    %23 = vector.load %arg5[%c144, %c0_7] : memref<288x12xbf16, #tpu.memory_space<vmem>>, vector<128x12xbf16>
    tpu.vector_store %arg5[%c144, %c0_7], %22 {strides = array<i32>} : memref<288x12xbf16, #tpu.memory_space<vmem>>, vector<128x12xbf16>,
    %c32 = arith.constant 32 : index
    %c0_8 = arith.constant 0 : index
    %24 = vector.load %arg5[%c32, %c0_8] : memref<288x12xbf16, #tpu.memory_space<vmem>>, vector<16x12xbf16>
    %c0_9 = arith.constant 0 : index
    %c0_10 = arith.constant 0 : index
    %25 = vector.load %arg5[%c0_9, %c0_10] : memref<288x12xbf16, #tpu.memory_space<vmem>>, vector<16x12xbf16>
    tpu.vector_store %arg5[%c0_9, %c0_10], %24 {strides = array<i32>} : memref<288x12xbf16, #tpu.memory_space<vmem>>, vector<16x12xbf16>,
    %c240 = arith.constant 240 : index
    %c0_11 = arith.constant 0 : index
    %26 = vector.load %arg5[%c240, %c0_11] : memref<288x12xbf16, #tpu.memory_space<vmem>>, vector<16x12xbf16>
    %c272 = arith.constant 272 : index
    %c0_12 = arith.constant 0 : index
    %27 = vector.load %arg5[%c272, %c0_12] : memref<288x12xbf16, #tpu.memory_space<vmem>>, vector<16x12xbf16>
    tpu.vector_store %arg5[%c272, %c0_12], %26 {strides = array<i32>} : memref<288x12xbf16, #tpu.memory_space<vmem>>, vector<16x12xbf16>,
    %cst = arith.constant 0.000000e+00 : f32
    %28 = vector.broadcast %cst : f32 to vector<1x4xf32>
    %cst_13 = arith.constant 0.000000e+00 : f32
    %29 = vector.broadcast %cst_13 : f32 to vector<1x4xf32>
    %c0_14 = arith.constant 0 : index
    %c0_15 = arith.constant 0 : index
    %30 = vector.load %arg5[%c0_14, %c0_15] : memref<288x12xbf16, #tpu.memory_space<vmem>>, vector<128x12xbf16>
    %c0_16 = arith.constant 0 : index
    %c0_17 = arith.constant 0 : index
    %c0_18 = arith.constant 0 : index
    %31 = vector.load %arg2[%c0_16, %c0_17, %c0_18] : memref<3x12x4xbf16, #tpu.memory_space<vmem>>, vector<1x12x4xbf16>
    %32 = vector.shape_cast %31 : vector<1x12x4xbf16> to vector<12x4xbf16>
    %cst_19 = arith.constant dense<0.000000e+00> : vector<128x4xf32>
    %33 = tpu.matmul %30, %32, %cst_19 {dimension_numbers = #tpu.dot_dimension_numbers<[1], [0], [0], [1], [0, 0, 1, 1], [], []>} : vector<128x12xbf16>, vector<12x4xbf16>, vector<128x4xf32> -> vector<128x4xf32>
    %c16_20 = arith.constant 16 : index
    %c0_21 = arith.constant 0 : index
    %34 = vector.load %arg5[%c16_20, %c0_21] : memref<288x12xbf16, #tpu.memory_space<vmem>>, vector<128x12xbf16>
    %c1 = arith.constant 1 : index
    %c0_22 = arith.constant 0 : index
    %c0_23 = arith.constant 0 : index
    %35 = vector.load %arg2[%c1, %c0_22, %c0_23] : memref<3x12x4xbf16, #tpu.memory_space<vmem>>, vector<1x12x4xbf16>
    %36 = vector.shape_cast %35 : vector<1x12x4xbf16> to vector<12x4xbf16>
    %cst_24 = arith.constant dense<0.000000e+00> : vector<128x4xf32>
    %37 = tpu.matmul %34, %36, %cst_24 {dimension_numbers = #tpu.dot_dimension_numbers<[1], [0], [0], [1], [0, 0, 1, 1], [], []>} : vector<128x12xbf16>, vector<12x4xbf16>, vector<128x4xf32> -> vector<128x4xf32>
    %38 = arith.addf %33, %37 : vector<128x4xf32>
    %c32_25 = arith.constant 32 : index
    %c0_26 = arith.constant 0 : index
    %39 = vector.load %arg5[%c32_25, %c0_26] : memref<288x12xbf16, #tpu.memory_space<vmem>>, vector<128x12xbf16>
    %c2 = arith.constant 2 : index
    %c0_27 = arith.constant 0 : index
    %c0_28 = arith.constant 0 : index
    %40 = vector.load %arg2[%c2, %c0_27, %c0_28] : memref<3x12x4xbf16, #tpu.memory_space<vmem>>, vector<1x12x4xbf16>
    %41 = vector.shape_cast %40 : vector<1x12x4xbf16> to vector<12x4xbf16>
    %cst_29 = arith.constant dense<0.000000e+00> : vector<128x4xf32>
    %42 = tpu.matmul %39, %41, %cst_29 {dimension_numbers = #tpu.dot_dimension_numbers<[1], [0], [0], [1], [0, 0, 1, 1], [], []>} : vector<128x12xbf16>, vector<12x4xbf16>, vector<128x4xf32> -> vector<128x4xf32>
    %43 = arith.addf %38, %42 : vector<128x4xf32>
    %c0_30 = arith.constant 0 : index
    %c0_31 = arith.constant 0 : index
    %44 = vector.load %arg6[%c0_30, %c0_31] : memref<256x4xf32, #tpu.memory_space<vmem>>, vector<128x4xf32>
    tpu.vector_store %arg6[%c0_30, %c0_31], %43 {strides = array<i32>} : memref<256x4xf32, #tpu.memory_space<vmem>>, vector<128x4xf32>,
    %cst_32 = arith.constant dense<0.000000e+00> : vector<4xf32>
    %45 = vector.multi_reduction <add>, %43, %cst_32 [0] : vector<128x4xf32> to vector<4xf32>
    %46 = vector.shape_cast %45 : vector<4xf32> to vector<1x4xf32>
    %47 = arith.addf %28, %46 : vector<1x4xf32>
    %48 = arith.mulf %43, %43 : vector<128x4xf32>
    %cst_33 = arith.constant dense<0.000000e+00> : vector<4xf32>
    %49 = vector.multi_reduction <add>, %48, %cst_33 [0] : vector<128x4xf32> to vector<4xf32>
    %50 = vector.shape_cast %49 : vector<4xf32> to vector<1x4xf32>
    %51 = arith.addf %29, %50 : vector<1x4xf32>
    %c128 = arith.constant 128 : index
    %c0_34 = arith.constant 0 : index
    %52 = vector.load %arg5[%c128, %c0_34] : memref<288x12xbf16, #tpu.memory_space<vmem>>, vector<128x12xbf16>
    %c0_35 = arith.constant 0 : index
    %c0_36 = arith.constant 0 : index
    %c0_37 = arith.constant 0 : index
    %53 = vector.load %arg2[%c0_35, %c0_36, %c0_37] : memref<3x12x4xbf16, #tpu.memory_space<vmem>>, vector<1x12x4xbf16>
    %54 = vector.shape_cast %53 : vector<1x12x4xbf16> to vector<12x4xbf16>
    %cst_38 = arith.constant dense<0.000000e+00> : vector<128x4xf32>
    %55 = tpu.matmul %52, %54, %cst_38 {dimension_numbers = #tpu.dot_dimension_numbers<[1], [0], [0], [1], [0, 0, 1, 1], [], []>} : vector<128x12xbf16>, vector<12x4xbf16>, vector<128x4xf32> -> vector<128x4xf32>
    %c144_39 = arith.constant 144 : index
    %c0_40 = arith.constant 0 : index
    %56 = vector.load %arg5[%c144_39, %c0_40] : memref<288x12xbf16, #tpu.memory_space<vmem>>, vector<128x12xbf16>
    %c1_41 = arith.constant 1 : index
    %c0_42 = arith.constant 0 : index
    %c0_43 = arith.constant 0 : index
    %57 = vector.load %arg2[%c1_41, %c0_42, %c0_43] : memref<3x12x4xbf16, #tpu.memory_space<vmem>>, vector<1x12x4xbf16>
    %58 = vector.shape_cast %57 : vector<1x12x4xbf16> to vector<12x4xbf16>
    %cst_44 = arith.constant dense<0.000000e+00> : vector<128x4xf32>
    %59 = tpu.matmul %56, %58, %cst_44 {dimension_numbers = #tpu.dot_dimension_numbers<[1], [0], [0], [1], [0, 0, 1, 1], [], []>} : vector<128x12xbf16>, vector<12x4xbf16>, vector<128x4xf32> -> vector<128x4xf32>
    %60 = arith.addf %55, %59 : vector<128x4xf32>
    %c160 = arith.constant 160 : index
    %c0_45 = arith.constant 0 : index
    %61 = vector.load %arg5[%c160, %c0_45] : memref<288x12xbf16, #tpu.memory_space<vmem>>, vector<128x12xbf16>
    %c2_46 = arith.constant 2 : index
    %c0_47 = arith.constant 0 : index
    %c0_48 = arith.constant 0 : index
    %62 = vector.load %arg2[%c2_46, %c0_47, %c0_48] : memref<3x12x4xbf16, #tpu.memory_space<vmem>>, vector<1x12x4xbf16>
    %63 = vector.shape_cast %62 : vector<1x12x4xbf16> to vector<12x4xbf16>
    %cst_49 = arith.constant dense<0.000000e+00> : vector<128x4xf32>
    %64 = tpu.matmul %61, %63, %cst_49 {dimension_numbers = #tpu.dot_dimension_numbers<[1], [0], [0], [1], [0, 0, 1, 1], [], []>} : vector<128x12xbf16>, vector<12x4xbf16>, vector<128x4xf32> -> vector<128x4xf32>
    %65 = arith.addf %60, %64 : vector<128x4xf32>
    %c128_50 = arith.constant 128 : index
    %c0_51 = arith.constant 0 : index
    %66 = vector.load %arg6[%c128_50, %c0_51] : memref<256x4xf32, #tpu.memory_space<vmem>>, vector<128x4xf32>
    tpu.vector_store %arg6[%c128_50, %c0_51], %65 {strides = array<i32>} : memref<256x4xf32, #tpu.memory_space<vmem>>, vector<128x4xf32>,
    %cst_52 = arith.constant dense<0.000000e+00> : vector<4xf32>
    %67 = vector.multi_reduction <add>, %65, %cst_52 [0] : vector<128x4xf32> to vector<4xf32>
    %68 = vector.shape_cast %67 : vector<4xf32> to vector<1x4xf32>
    %69 = arith.addf %47, %68 : vector<1x4xf32>
    %70 = arith.mulf %65, %65 : vector<128x4xf32>
    %cst_53 = arith.constant dense<0.000000e+00> : vector<4xf32>
    %71 = vector.multi_reduction <add>, %70, %cst_53 [0] : vector<128x4xf32> to vector<4xf32>
    %72 = vector.shape_cast %71 : vector<4xf32> to vector<1x4xf32>
    %73 = arith.addf %51, %72 : vector<1x4xf32>
    %cst_54 = arith.constant 3.906250e-03 : f32
    %74 = vector.broadcast %cst_54 : f32 to vector<1x4xf32>
    %75 = arith.mulf %69, %74 : vector<1x4xf32>
    %cst_55 = arith.constant 3.906250e-03 : f32
    %76 = vector.broadcast %cst_55 : f32 to vector<1x4xf32>
    %77 = arith.mulf %73, %76 : vector<1x4xf32>
    %78 = arith.mulf %75, %75 : vector<1x4xf32>
    %79 = arith.subf %77, %78 : vector<1x4xf32>
    %cst_56 = arith.constant 0.000000e+00 : f32
    %80 = vector.broadcast %cst_56 : f32 to vector<1x4xf32>
    %81 = arith.maximumf %79, %80 : vector<1x4xf32>
    %cst_57 = arith.constant 9.99999974E-6 : f32
    %82 = vector.broadcast %cst_57 : f32 to vector<1x4xf32>
    %83 = arith.addf %81, %82 : vector<1x4xf32>
    %84 = math.rsqrt %83 : vector<1x4xf32>
    %c0_58 = arith.constant 0 : index
    %c0_59 = arith.constant 0 : index
    %85 = vector.load %arg6[%c0_58, %c0_59] : memref<256x4xf32, #tpu.memory_space<vmem>>, vector<128x4xf32>
    %86 = vector.broadcast %75 : vector<1x4xf32> to vector<128x4xf32>
    %87 = arith.subf %85, %86 : vector<128x4xf32>
    %88 = vector.broadcast %84 : vector<1x4xf32> to vector<128x4xf32>
    %89 = arith.mulf %87, %88 : vector<128x4xf32>
    %cst_60 = arith.constant 0.000000e+00 : f32
    %90 = vector.broadcast %cst_60 : f32 to vector<128x4xf32>
    %91 = arith.maximumf %89, %90 : vector<128x4xf32>
    %92 = arith.truncf %91 : vector<128x4xf32> to vector<128x4xbf16>
    %93 = vector.shape_cast %92 : vector<128x4xbf16> to vector<8x16x4xbf16>
    %94 = vector.extract_strided_slice %93 {offsets = [0, 1, 0], sizes = [8, 1, 4], strides = [1, 1, 1]} : vector<8x16x4xbf16> to vector<8x1x4xbf16>
    %95 = vector.extract_strided_slice %93 {offsets = [0, 0, 0], sizes = [8, 15, 4], strides = [1, 1, 1]} : vector<8x16x4xbf16> to vector<8x15x4xbf16>
    %96 = tpu.concatenate %94, %95 in 1 : vector<8x1x4xbf16>, vector<8x15x4xbf16> -> vector<8x16x4xbf16>
    %97 = vector.extract_strided_slice %93 {offsets = [0, 1, 0], sizes = [8, 15, 4], strides = [1, 1, 1]} : vector<8x16x4xbf16> to vector<8x15x4xbf16>
    %98 = vector.extract_strided_slice %93 {offsets = [0, 14, 0], sizes = [8, 1, 4], strides = [1, 1, 1]} : vector<8x16x4xbf16> to vector<8x1x4xbf16>
    %99 = tpu.concatenate %97, %98 in 1 : vector<8x15x4xbf16>, vector<8x1x4xbf16> -> vector<8x16x4xbf16>
    %100 = tpu.concatenate %96, %93, %99 in 2 : vector<8x16x4xbf16>, vector<8x16x4xbf16>, vector<8x16x4xbf16> -> vector<8x16x12xbf16>
    %101 = vector.shape_cast %100 : vector<8x16x12xbf16> to vector<128x12xbf16>
    %c16_61 = arith.constant 16 : index
    %c0_62 = arith.constant 0 : index
    %102 = vector.load %arg5[%c16_61, %c0_62] : memref<288x12xbf16, #tpu.memory_space<vmem>>, vector<128x12xbf16>
    tpu.vector_store %arg5[%c16_61, %c0_62], %101 {strides = array<i32>} : memref<288x12xbf16, #tpu.memory_space<vmem>>, vector<128x12xbf16>,
    %c128_63 = arith.constant 128 : index
    %c0_64 = arith.constant 0 : index
    %103 = vector.load %arg6[%c128_63, %c0_64] : memref<256x4xf32, #tpu.memory_space<vmem>>, vector<128x4xf32>
    %104 = vector.broadcast %75 : vector<1x4xf32> to vector<128x4xf32>
    %105 = arith.subf %103, %104 : vector<128x4xf32>
    %106 = vector.broadcast %84 : vector<1x4xf32> to vector<128x4xf32>
    %107 = arith.mulf %105, %106 : vector<128x4xf32>
    %cst_65 = arith.constant 0.000000e+00 : f32
    %108 = vector.broadcast %cst_65 : f32 to vector<128x4xf32>
    %109 = arith.maximumf %107, %108 : vector<128x4xf32>
    %110 = arith.truncf %109 : vector<128x4xf32> to vector<128x4xbf16>
    %111 = vector.shape_cast %110 : vector<128x4xbf16> to vector<8x16x4xbf16>
    %112 = vector.extract_strided_slice %111 {offsets = [0, 1, 0], sizes = [8, 1, 4], strides = [1, 1, 1]} : vector<8x16x4xbf16> to vector<8x1x4xbf16>
    %113 = vector.extract_strided_slice %111 {offsets = [0, 0, 0], sizes = [8, 15, 4], strides = [1, 1, 1]} : vector<8x16x4xbf16> to vector<8x15x4xbf16>
    %114 = tpu.concatenate %112, %113 in 1 : vector<8x1x4xbf16>, vector<8x15x4xbf16> -> vector<8x16x4xbf16>
    %115 = vector.extract_strided_slice %111 {offsets = [0, 1, 0], sizes = [8, 15, 4], strides = [1, 1, 1]} : vector<8x16x4xbf16> to vector<8x15x4xbf16>
    %116 = vector.extract_strided_slice %111 {offsets = [0, 14, 0], sizes = [8, 1, 4], strides = [1, 1, 1]} : vector<8x16x4xbf16> to vector<8x1x4xbf16>
    %117 = tpu.concatenate %115, %116 in 1 : vector<8x15x4xbf16>, vector<8x1x4xbf16> -> vector<8x16x4xbf16>
    %118 = tpu.concatenate %114, %111, %117 in 2 : vector<8x16x4xbf16>, vector<8x16x4xbf16>, vector<8x16x4xbf16> -> vector<8x16x12xbf16>
    %119 = vector.shape_cast %118 : vector<8x16x12xbf16> to vector<128x12xbf16>
    %c144_66 = arith.constant 144 : index
    %c0_67 = arith.constant 0 : index
    %120 = vector.load %arg5[%c144_66, %c0_67] : memref<288x12xbf16, #tpu.memory_space<vmem>>, vector<128x12xbf16>
    tpu.vector_store %arg5[%c144_66, %c0_67], %119 {strides = array<i32>} : memref<288x12xbf16, #tpu.memory_space<vmem>>, vector<128x12xbf16>,
    %c32_68 = arith.constant 32 : index
    %c0_69 = arith.constant 0 : index
    %121 = vector.load %arg5[%c32_68, %c0_69] : memref<288x12xbf16, #tpu.memory_space<vmem>>, vector<16x12xbf16>
    %c0_70 = arith.constant 0 : index
    %c0_71 = arith.constant 0 : index
    %122 = vector.load %arg5[%c0_70, %c0_71] : memref<288x12xbf16, #tpu.memory_space<vmem>>, vector<16x12xbf16>
    tpu.vector_store %arg5[%c0_70, %c0_71], %121 {strides = array<i32>} : memref<288x12xbf16, #tpu.memory_space<vmem>>, vector<16x12xbf16>,
    %c240_72 = arith.constant 240 : index
    %c0_73 = arith.constant 0 : index
    %123 = vector.load %arg5[%c240_72, %c0_73] : memref<288x12xbf16, #tpu.memory_space<vmem>>, vector<16x12xbf16>
    %c272_74 = arith.constant 272 : index
    %c0_75 = arith.constant 0 : index
    %124 = vector.load %arg5[%c272_74, %c0_75] : memref<288x12xbf16, #tpu.memory_space<vmem>>, vector<16x12xbf16>
    tpu.vector_store %arg5[%c272_74, %c0_75], %123 {strides = array<i32>} : memref<288x12xbf16, #tpu.memory_space<vmem>>, vector<16x12xbf16>,
    %cst_76 = arith.constant 0.000000e+00 : f32
    %125 = vector.broadcast %cst_76 : f32 to vector<1x4xf32>
    %cst_77 = arith.constant 0.000000e+00 : f32
    %126 = vector.broadcast %cst_77 : f32 to vector<1x4xf32>
    %c0_78 = arith.constant 0 : index
    %c0_79 = arith.constant 0 : index
    %127 = vector.load %arg5[%c0_78, %c0_79] : memref<288x12xbf16, #tpu.memory_space<vmem>>, vector<128x12xbf16>
    %c0_80 = arith.constant 0 : index
    %c0_81 = arith.constant 0 : index
    %c0_82 = arith.constant 0 : index
    %128 = vector.load %arg3[%c0_80, %c0_81, %c0_82] : memref<3x12x4xbf16, #tpu.memory_space<vmem>>, vector<1x12x4xbf16>
    %129 = vector.shape_cast %128 : vector<1x12x4xbf16> to vector<12x4xbf16>
    %cst_83 = arith.constant dense<0.000000e+00> : vector<128x4xf32>
    %130 = tpu.matmul %127, %129, %cst_83 {dimension_numbers = #tpu.dot_dimension_numbers<[1], [0], [0], [1], [0, 0, 1, 1], [], []>} : vector<128x12xbf16>, vector<12x4xbf16>, vector<128x4xf32> -> vector<128x4xf32>
    %c16_84 = arith.constant 16 : index
    %c0_85 = arith.constant 0 : index
    %131 = vector.load %arg5[%c16_84, %c0_85] : memref<288x12xbf16, #tpu.memory_space<vmem>>, vector<128x12xbf16>
    %c1_86 = arith.constant 1 : index
    %c0_87 = arith.constant 0 : index
    %c0_88 = arith.constant 0 : index
    %132 = vector.load %arg3[%c1_86, %c0_87, %c0_88] : memref<3x12x4xbf16, #tpu.memory_space<vmem>>, vector<1x12x4xbf16>
    %133 = vector.shape_cast %132 : vector<1x12x4xbf16> to vector<12x4xbf16>
    %cst_89 = arith.constant dense<0.000000e+00> : vector<128x4xf32>
    %134 = tpu.matmul %131, %133, %cst_89 {dimension_numbers = #tpu.dot_dimension_numbers<[1], [0], [0], [1], [0, 0, 1, 1], [], []>} : vector<128x12xbf16>, vector<12x4xbf16>, vector<128x4xf32> -> vector<128x4xf32>
    %135 = arith.addf %130, %134 : vector<128x4xf32>
    %c32_90 = arith.constant 32 : index
    %c0_91 = arith.constant 0 : index
    %136 = vector.load %arg5[%c32_90, %c0_91] : memref<288x12xbf16, #tpu.memory_space<vmem>>, vector<128x12xbf16>
    %c2_92 = arith.constant 2 : index
    %c0_93 = arith.constant 0 : index
    %c0_94 = arith.constant 0 : index
    %137 = vector.load %arg3[%c2_92, %c0_93, %c0_94] : memref<3x12x4xbf16, #tpu.memory_space<vmem>>, vector<1x12x4xbf16>
    %138 = vector.shape_cast %137 : vector<1x12x4xbf16> to vector<12x4xbf16>
    %cst_95 = arith.constant dense<0.000000e+00> : vector<128x4xf32>
    %139 = tpu.matmul %136, %138, %cst_95 {dimension_numbers = #tpu.dot_dimension_numbers<[1], [0], [0], [1], [0, 0, 1, 1], [], []>} : vector<128x12xbf16>, vector<12x4xbf16>, vector<128x4xf32> -> vector<128x4xf32>
    %140 = arith.addf %135, %139 : vector<128x4xf32>
    %c0_96 = arith.constant 0 : index
    %c0_97 = arith.constant 0 : index
    %141 = vector.load %arg6[%c0_96, %c0_97] : memref<256x4xf32, #tpu.memory_space<vmem>>, vector<128x4xf32>
    tpu.vector_store %arg6[%c0_96, %c0_97], %140 {strides = array<i32>} : memref<256x4xf32, #tpu.memory_space<vmem>>, vector<128x4xf32>,
    %cst_98 = arith.constant dense<0.000000e+00> : vector<4xf32>
    %142 = vector.multi_reduction <add>, %140, %cst_98 [0] : vector<128x4xf32> to vector<4xf32>
    %143 = vector.shape_cast %142 : vector<4xf32> to vector<1x4xf32>
    %144 = arith.addf %125, %143 : vector<1x4xf32>
    %145 = arith.mulf %140, %140 : vector<128x4xf32>
    %cst_99 = arith.constant dense<0.000000e+00> : vector<4xf32>
    %146 = vector.multi_reduction <add>, %145, %cst_99 [0] : vector<128x4xf32> to vector<4xf32>
    %147 = vector.shape_cast %146 : vector<4xf32> to vector<1x4xf32>
    %148 = arith.addf %126, %147 : vector<1x4xf32>
    %c128_100 = arith.constant 128 : index
    %c0_101 = arith.constant 0 : index
    %149 = vector.load %arg5[%c128_100, %c0_101] : memref<288x12xbf16, #tpu.memory_space<vmem>>, vector<128x12xbf16>
    %c0_102 = arith.constant 0 : index
    %c0_103 = arith.constant 0 : index
    %c0_104 = arith.constant 0 : index
    %150 = vector.load %arg3[%c0_102, %c0_103, %c0_104] : memref<3x12x4xbf16, #tpu.memory_space<vmem>>, vector<1x12x4xbf16>
    %151 = vector.shape_cast %150 : vector<1x12x4xbf16> to vector<12x4xbf16>
    %cst_105 = arith.constant dense<0.000000e+00> : vector<128x4xf32>
    %152 = tpu.matmul %149, %151, %cst_105 {dimension_numbers = #tpu.dot_dimension_numbers<[1], [0], [0], [1], [0, 0, 1, 1], [], []>} : vector<128x12xbf16>, vector<12x4xbf16>, vector<128x4xf32> -> vector<128x4xf32>
    %c144_106 = arith.constant 144 : index
    %c0_107 = arith.constant 0 : index
    %153 = vector.load %arg5[%c144_106, %c0_107] : memref<288x12xbf16, #tpu.memory_space<vmem>>, vector<128x12xbf16>
    %c1_108 = arith.constant 1 : index
    %c0_109 = arith.constant 0 : index
    %c0_110 = arith.constant 0 : index
    %154 = vector.load %arg3[%c1_108, %c0_109, %c0_110] : memref<3x12x4xbf16, #tpu.memory_space<vmem>>, vector<1x12x4xbf16>
    %155 = vector.shape_cast %154 : vector<1x12x4xbf16> to vector<12x4xbf16>
    %cst_111 = arith.constant dense<0.000000e+00> : vector<128x4xf32>
    %156 = tpu.matmul %153, %155, %cst_111 {dimension_numbers = #tpu.dot_dimension_numbers<[1], [0], [0], [1], [0, 0, 1, 1], [], []>} : vector<128x12xbf16>, vector<12x4xbf16>, vector<128x4xf32> -> vector<128x4xf32>
    %157 = arith.addf %152, %156 : vector<128x4xf32>
    %c160_112 = arith.constant 160 : index
    %c0_113 = arith.constant 0 : index
    %158 = vector.load %arg5[%c160_112, %c0_113] : memref<288x12xbf16, #tpu.memory_space<vmem>>, vector<128x12xbf16>
    %c2_114 = arith.constant 2 : index
    %c0_115 = arith.constant 0 : index
    %c0_116 = arith.constant 0 : index
    %159 = vector.load %arg3[%c2_114, %c0_115, %c0_116] : memref<3x12x4xbf16, #tpu.memory_space<vmem>>, vector<1x12x4xbf16>
    %160 = vector.shape_cast %159 : vector<1x12x4xbf16> to vector<12x4xbf16>
    %cst_117 = arith.constant dense<0.000000e+00> : vector<128x4xf32>
    %161 = tpu.matmul %158, %160, %cst_117 {dimension_numbers = #tpu.dot_dimension_numbers<[1], [0], [0], [1], [0, 0, 1, 1], [], []>} : vector<128x12xbf16>, vector<12x4xbf16>, vector<128x4xf32> -> vector<128x4xf32>
    %162 = arith.addf %157, %161 : vector<128x4xf32>
    %c128_118 = arith.constant 128 : index
    %c0_119 = arith.constant 0 : index
    %163 = vector.load %arg6[%c128_118, %c0_119] : memref<256x4xf32, #tpu.memory_space<vmem>>, vector<128x4xf32>
    tpu.vector_store %arg6[%c128_118, %c0_119], %162 {strides = array<i32>} : memref<256x4xf32, #tpu.memory_space<vmem>>, vector<128x4xf32>,
    %cst_120 = arith.constant dense<0.000000e+00> : vector<4xf32>
    %164 = vector.multi_reduction <add>, %162, %cst_120 [0] : vector<128x4xf32> to vector<4xf32>
    %165 = vector.shape_cast %164 : vector<4xf32> to vector<1x4xf32>
    %166 = arith.addf %144, %165 : vector<1x4xf32>
    %167 = arith.mulf %162, %162 : vector<128x4xf32>
    %cst_121 = arith.constant dense<0.000000e+00> : vector<4xf32>
    %168 = vector.multi_reduction <add>, %167, %cst_121 [0] : vector<128x4xf32> to vector<4xf32>
    %169 = vector.shape_cast %168 : vector<4xf32> to vector<1x4xf32>
    %170 = arith.addf %148, %169 : vector<1x4xf32>
    %cst_122 = arith.constant 3.906250e-03 : f32
    %171 = vector.broadcast %cst_122 : f32 to vector<1x4xf32>
    %172 = arith.mulf %166, %171 : vector<1x4xf32>
    %cst_123 = arith.constant 3.906250e-03 : f32
    %173 = vector.broadcast %cst_123 : f32 to vector<1x4xf32>
    %174 = arith.mulf %170, %173 : vector<1x4xf32>
    %175 = arith.mulf %172, %172 : vector<1x4xf32>
    %176 = arith.subf %174, %175 : vector<1x4xf32>
    %cst_124 = arith.constant 0.000000e+00 : f32
    %177 = vector.broadcast %cst_124 : f32 to vector<1x4xf32>
    %178 = arith.maximumf %176, %177 : vector<1x4xf32>
    %cst_125 = arith.constant 9.99999974E-6 : f32
    %179 = vector.broadcast %cst_125 : f32 to vector<1x4xf32>
    %180 = arith.addf %178, %179 : vector<1x4xf32>
    %181 = math.rsqrt %180 : vector<1x4xf32>
    %c0_126 = arith.constant 0 : index
    %c0_127 = arith.constant 0 : index
    %182 = vector.load %arg6[%c0_126, %c0_127] : memref<256x4xf32, #tpu.memory_space<vmem>>, vector<128x4xf32>
    %183 = vector.broadcast %172 : vector<1x4xf32> to vector<128x4xf32>
    %184 = arith.subf %182, %183 : vector<128x4xf32>
    %185 = vector.broadcast %181 : vector<1x4xf32> to vector<128x4xf32>
    %186 = arith.mulf %184, %185 : vector<128x4xf32>
    %c0_128 = arith.constant 0 : index
    %c0_129 = arith.constant 0 : index
    %c0_130 = arith.constant 0 : index
    %c0_131 = arith.constant 0 : index
    %187 = vector.load %arg1[%c0_128, %c0_129, %c0_130, %c0_131] : memref<1x16x16x4xf32, #tpu.memory_space<vmem>>, vector<1x8x16x4xf32>
    %188 = vector.shape_cast %187 : vector<1x8x16x4xf32> to vector<8x16x4xf32>
    %189 = vector.shape_cast %186 : vector<128x4xf32> to vector<8x16x4xf32>
    %190 = arith.addf %188, %189 : vector<8x16x4xf32>
    %c0_132 = arith.constant 0 : index
    %c0_133 = arith.constant 0 : index
    %c0_134 = arith.constant 0 : index
    %c0_135 = arith.constant 0 : index
    %191 = vector.load %arg4[%c0_132, %c0_133, %c0_134, %c0_135] : memref<1x16x16x4xf32, #tpu.memory_space<vmem>>, vector<1x8x16x4xf32>
    %192 = vector.shape_cast %191 : vector<1x8x16x4xf32> to vector<8x16x4xf32>
    %193 = vector.shape_cast %190 : vector<8x16x4xf32> to vector<1x8x16x4xf32>
    tpu.vector_store %arg4[%c0_132, %c0_133, %c0_134, %c0_135], %193 {strides = array<i32>} : memref<1x16x16x4xf32, #tpu.memory_space<vmem>>, vector<1x8x16x4xf32>,
    %c128_136 = arith.constant 128 : index
    %c0_137 = arith.constant 0 : index
    %194 = vector.load %arg6[%c128_136, %c0_137] : memref<256x4xf32, #tpu.memory_space<vmem>>, vector<128x4xf32>
    %195 = vector.broadcast %172 : vector<1x4xf32> to vector<128x4xf32>
    %196 = arith.subf %194, %195 : vector<128x4xf32>
    %197 = vector.broadcast %181 : vector<1x4xf32> to vector<128x4xf32>
    %198 = arith.mulf %196, %197 : vector<128x4xf32>
    %c0_138 = arith.constant 0 : index
    %c8_139 = arith.constant 8 : index
    %c0_140 = arith.constant 0 : index
    %c0_141 = arith.constant 0 : index
    %199 = vector.load %arg1[%c0_138, %c8_139, %c0_140, %c0_141] : memref<1x16x16x4xf32, #tpu.memory_space<vmem>>, vector<1x8x16x4xf32>
    %200 = vector.shape_cast %199 : vector<1x8x16x4xf32> to vector<8x16x4xf32>
    %201 = vector.shape_cast %198 : vector<128x4xf32> to vector<8x16x4xf32>
    %202 = arith.addf %200, %201 : vector<8x16x4xf32>
    %c0_142 = arith.constant 0 : index
    %c8_143 = arith.constant 8 : index
    %c0_144 = arith.constant 0 : index
    %c0_145 = arith.constant 0 : index
    %203 = vector.load %arg4[%c0_142, %c8_143, %c0_144, %c0_145] : memref<1x16x16x4xf32, #tpu.memory_space<vmem>>, vector<1x8x16x4xf32>
    %204 = vector.shape_cast %203 : vector<1x8x16x4xf32> to vector<8x16x4xf32>
    %205 = vector.shape_cast %202 : vector<8x16x4xf32> to vector<1x8x16x4xf32>
    tpu.vector_store %arg4[%c0_142, %c8_143, %c0_144, %c0_145], %205 {strides = array<i32>} : memref<1x16x16x4xf32, #tpu.memory_space<vmem>>, vector<1x8x16x4xf32>,
    return
  }
  func.func @transform_0(%arg0: i32) -> (i32, i32, i32, i32) {
    %c0_i32 = arith.constant 0 : i32
    %c0_i32_0 = arith.constant 0 : i32
    %c0_i32_1 = arith.constant 0 : i32
    %c0_i32_2 = arith.constant 0 : i32
    return %arg0, %c0_i32, %c0_i32_0, %c0_i32_1 : i32, i32, i32, i32
  }
  func.func @transform_1(%arg0: i32) -> (i32, i32, i32) {
    %c0_i32 = arith.constant 0 : i32
    %c0_i32_0 = arith.constant 0 : i32
    %c0_i32_1 = arith.constant 0 : i32
    %c0_i32_2 = arith.constant 0 : i32
    return %c0_i32, %c0_i32_0, %c0_i32_1 : i32, i32, i32
  }
  func.func @transform_2(%arg0: i32) -> (i32, i32, i32) {
    %c0_i32 = arith.constant 0 : i32
    %c0_i32_0 = arith.constant 0 : i32
    %c0_i32_1 = arith.constant 0 : i32
    %c0_i32_2 = arith.constant 0 : i32
    return %c0_i32, %c0_i32_0, %c0_i32_1 : i32, i32, i32
  }
  func.func @transform_3(%arg0: i32) -> (i32, i32, i32, i32) {
    %c0_i32 = arith.constant 0 : i32
    %c0_i32_0 = arith.constant 0 : i32
    %c0_i32_1 = arith.constant 0 : i32
    %c0_i32_2 = arith.constant 0 : i32
    return %arg0, %c0_i32, %c0_i32_0, %c0_i32_1 : i32, i32, i32, i32
  }
}

</mosaic_0001>

<llo_original>
// kernel: tpu_custom_call.1
$region0: #{tpu_custom_call.1}
  #allocation0 [shape = 'u32[]', space=smem, size = 0x4, offset = 0x4, fixed_abs, tag = 'smem constant byte address 0x4 - core index']
  #allocation1 [shape = 'u32[144,128]{1,0:T(1,128)}', space=vmem, size = 0x12000, scoped, tag = 'internal scratch']
  #allocation2 [shape = 'bf16[288,12]{1,0:T(16,128)(2,1)}', space=vmem, size = 0x12000, scoped, tag = 'scratch operand']
  #allocation3 [shape = 'f32[256,4]{1,0:T(8,128)}', space=vmem, size = 0x20000, scoped, tag = 'scratch operand']
  %s0 = inlined_call_operand.vmem [shape: f32[2,16,16,4], index: 0, kind: input, shape index: {}]
  %s1 = inlined_call_operand.vmem [shape: bf16[3,12,4], index: 1, kind: input, shape index: {}]
  %s2 = inlined_call_operand.vmem [shape: bf16[3,12,4], index: 2, kind: input, shape index: {}]
  %s3 = inlined_call_operand.vmem [shape: f32[2,16,16,4], index: 3, kind: output, shape index: {}]
  %s4 = sld [smem:[#allocation0]]
  $region45: #{tpu_custom_call.1} parent=0
    _
  %s6 = ssub.s32 1, %s4
  %s7 = scalar_select 0, %s6, %s4
  loop: start=0, step=1, limit=4
  $region2: #{tpu_custom_call.1} parent=0 // loop_pre_header
    _
  $region3: #{tpu_custom_call.1} parent=0 // loop_header
    %s9 = sphi 0, %s13
    %p10 = scmp.ge.s32.totalorder %s9, 4
    %s19 = sphi 0, %s21
    %s22 = sphi 0, %s19
    %s23 = sphi 0, %s22
    %s39 = sphi 0, %s23
    %s43 = sphi 0, %s43
    %s45 = sphi 0, %s43
    %s46 = sphi 0, %s45
    %s60 = sphi 0, %s46
    %s64 = sphi 0, %s64
    %s66 = sphi 0, %s64
    %s67 = sphi 0, %s66
    %s81 = sphi 0, %s67
    %s87 = sphi 0, %s89
    %s90 = sphi 0, %s87
    %s91 = sphi 0, %s90
    %s107 = sphi 0, %s91
  $region4: #{tpu_custom_call.1} parent=0 // loop_header_branch
    %12 = sbr.rel (%p10) target = $region8
  $region5: #{tpu_custom_call.1} parent=0 // loop_body
    %s14 = ssub.s32 %s9, 1
    %s15 = ssub.s32 %s9, 2
    %s16 = sadd.s32 %s9, 1
    %s17 = ssub.s32 %s9, %s16
    %p18 = scmp.eq.s32.totalorder %s17, 0
    %s20 = sadd.s32 %s19, 1
    %s21 = scalar_select %p18, %s19, %s20
    %p24 = pneg %p18
    %p25 = scmp.eq.s32.totalorder %s9, 1
    %p26 = por %p24, %p25
    %p27 = scmp.ne.s32.totalorder %s19, %s22
    %p28 = scmp.eq.s32.totalorder %s9, 0
    %p29 = por %p27, %p28
    %p30 = scmp.ne.s32.totalorder %s19, %s22
    %p31 = scmp.eq.s32.totalorder %s14, 1
    %p32 = por %p30, %p31
    %p33 = scmp.ne.s32.totalorder %s22, %s23
    %p34 = scmp.eq.s32.totalorder %s14, 0
    %p35 = por %p33, %p34
    %p36 = scmp.ne.s32.totalorder %s22, %s23
    %p37 = scmp.eq.s32.totalorder %s15, 1
    %p38 = por %p36, %p37
    %p40 = scmp.ne.s32.totalorder %s23, %s39
    %p41 = scmp.eq.s32.totalorder %s15, 0
    %p42 = por %p40, %p41
    %s44 = sadd.s32 %s43, 1
    %p47 = scmp.eq.s32.totalorder %s9, 1
    %p48 = scmp.ne.s32.totalorder %s43, %s45
    %p49 = scmp.eq.s32.totalorder %s9, 0
    %p50 = por %p48, %p49
    %p51 = scmp.ne.s32.totalorder %s43, %s45
    %p52 = scmp.eq.s32.totalorder %s14, 1
    %p53 = por %p51, %p52
    %p54 = scmp.ne.s32.totalorder %s45, %s46
    %p55 = scmp.eq.s32.totalorder %s14, 0
    %p56 = por %p54, %p55
    %p57 = scmp.ne.s32.totalorder %s45, %s46
    %p58 = scmp.eq.s32.totalorder %s15, 1
    %p59 = por %p57, %p58
    %p61 = scmp.ne.s32.totalorder %s46, %s60
    %p62 = scmp.eq.s32.totalorder %s15, 0
    %p63 = por %p61, %p62
    %s65 = sadd.s32 %s64, 1
    %p68 = scmp.eq.s32.totalorder %s9, 1
    %p69 = scmp.ne.s32.totalorder %s64, %s66
    %p70 = scmp.eq.s32.totalorder %s9, 0
    %p71 = por %p69, %p70
    %p72 = scmp.ne.s32.totalorder %s64, %s66
    %p73 = scmp.eq.s32.totalorder %s14, 1
    %p74 = por %p72, %p73
    %p75 = scmp.ne.s32.totalorder %s66, %s67
    %p76 = scmp.eq.s32.totalorder %s14, 0
    %p77 = por %p75, %p76
    %p78 = scmp.ne.s32.totalorder %s66, %s67
    %p79 = scmp.eq.s32.totalorder %s15, 1
    %p80 = por %p78, %p79
    %p82 = scmp.ne.s32.totalorder %s67, %s81
    %p83 = scmp.eq.s32.totalorder %s15, 0
    %p84 = por %p82, %p83
    %s85 = ssub.s32 %s9, %s16
    %p86 = scmp.eq.s32.totalorder %s85, 0
    %s88 = sadd.s32 %s87, 1
    %s89 = scalar_select %p86, %s87, %s88
    %p92 = pneg %p86
    %p93 = scmp.eq.s32.totalorder %s9, 1
    %p94 = por %p92, %p93
    %p95 = scmp.ne.s32.totalorder %s87, %s90
    %p96 = scmp.eq.s32.totalorder %s9, 0
    %p97 = por %p95, %p96
    %p98 = scmp.ne.s32.totalorder %s87, %s90
    %p99 = scmp.eq.s32.totalorder %s14, 1
    %p100 = por %p98, %p99
    %p101 = scmp.ne.s32.totalorder %s90, %s91
    %p102 = scmp.eq.s32.totalorder %s14, 0
    %p103 = por %p101, %p102
    %p104 = scmp.ne.s32.totalorder %s90, %s91
    %p105 = scmp.eq.s32.totalorder %s15, 1
    %p106 = por %p104, %p105
    %p108 = scmp.ne.s32.totalorder %s91, %s107
    %p109 = scmp.eq.s32.totalorder %s15, 0
    %p110 = por %p108, %p109
    %p111 = scmp.le.s32.totalorder 1, %s9
    %p112 = scmp.lt.s32.totalorder %s9, 3
    %p113 = pnand %p111, %p112
    %p114 = pneg %p113
    // Predicated region
    $region9: #{tpu_custom_call.1} parent=5 // pred_check
      _
    $region10: #{tpu_custom_call.1} parent=5 // pred_check_branch
      %116 = sbr.rel (%p113) target = $region12
    $region11: #{tpu_custom_call.1} parent=5 // pred_region
      %s117 = ssub.s32 %s9, 1
      // Predicated region
      $region13: #{tpu_custom_call.1} parent=11 // pred_check
        %p118 = pneg %p56
      $region14: #{tpu_custom_call.1} parent=11 // pred_check_branch
        %120 = sbr.rel (%p118) target = $region16
      $region15: #{tpu_custom_call.1} parent=11 // pred_region
        _
      $region16: #{tpu_custom_call.1} parent=11 // pred_fallthru
        _
      // Predicated region
      $region17: #{tpu_custom_call.1} parent=11 // pred_check
        %p121 = pneg %p77
      $region18: #{tpu_custom_call.1} parent=11 // pred_check_branch
        %123 = sbr.rel (%p121) target = $region20
      $region19: #{tpu_custom_call.1} parent=11 // pred_region
        _
      $region20: #{tpu_custom_call.1} parent=11 // pred_fallthru
        _
    $region12: #{tpu_custom_call.1} parent=5 // pred_fallthru
      _
    %p124 = scmp.lt.s32.totalorder %s9, 2
    // Predicated region
    $region21: #{tpu_custom_call.1} parent=5 // pred_check
      %p125 = pneg %p124
    $region22: #{tpu_custom_call.1} parent=5 // pred_check_branch
      %127 = sbr.rel (%p125) target = $region24
    $region23: #{tpu_custom_call.1} parent=5 // pred_region
      // Predicated region
      $region25: #{tpu_custom_call.1} parent=23 // pred_check
        %p128 = pneg %p29
      $region26: #{tpu_custom_call.1} parent=23 // pred_check_branch
        %130 = sbr.rel (%p128) target = $region28
      $region27: #{tpu_custom_call.1} parent=23 // pred_region
        %p131 = scmp.lt.s32.totalorder %s9, 1
        %s132 = scalar_select %p131, %s9, 1
        %s133 = smul.addr %s132, 32
        %s134 = smul.addr %s133, 8
        %s135 = scalar_lea.vmem %s0, %s134
      $region28: #{tpu_custom_call.1} parent=23 // pred_fallthru
        _
    $region24: #{tpu_custom_call.1} parent=5 // pred_fallthru
      _
    %p136 = scmp.le.s32.totalorder 1, %s9
    %p137 = scmp.lt.s32.totalorder %s9, 3
    %p138 = pnand %p136, %p137
    %p139 = pneg %p138
    // Predicated region
    $region29: #{tpu_custom_call.1} parent=5 // pred_check
      _
    $region30: #{tpu_custom_call.1} parent=5 // pred_check_branch
      %141 = sbr.rel (%p138) target = $region32
    $region31: #{tpu_custom_call.1} parent=5 // pred_region
      %s142 = ssub.s32 %s9, 1
      %p143 = scmp.lt.s32.totalorder %s14, 1
      %s144 = scalar_select %p143, %s14, 1
      %s145 = smul.addr %s144, 32
      %s146 = smul.addr %s145, 8
      %s147 = scalar_lea.vmem %s0, %s146
      %p148 = pneg %p35
      %p149 = pneg %p32
      %p150 = pneg %p56
      %p151 = pneg %p53
      %p152 = pneg %p77
      %p153 = pneg %p74
      %p154 = pneg %p103
      %p155 = pneg %p100
      %p156 = scmp.lt.s32.totalorder %s14, 1
      %s157 = scalar_select %p156, %s14, 1
      %s158 = smul.addr %s157, 32
      %s159 = smul.addr %s158, 8
      %s160 = scalar_lea.vmem %s3, %s159
      %p161 = scmp.lt.s32.totalorder %s14, 1
      %s162 = scalar_select %p161, %s14, 1
      %s163 = smul.addr %s162, 32
      %s164 = smul.addr %s163, 8
      %s165 = scalar_lea.vmem %s0, %s164
      %p166 = scmp.lt.s32.totalorder %s14, 1
      %s167 = scalar_select %p166, %s14, 1
      %s168 = smul.addr %s167, 32
      %s169 = smul.addr %s168, 8
      %s170 = scalar_lea.vmem %s3, %s169
      %v172 = vld [vmem:[%s165] sm:$0xff]
      %v173 = vld [vmem:[%s165 + $0x8] sm:$0xff]
      %v174 = vld [vmem:[%s165 + $0x10] sm:$0xff]
      %v175 = vld [vmem:[%s165 + $0x18] sm:$0xff]
      %v176 = vld [vmem:[%s165 + $0x20] sm:$0xff]
      %v177 = vld [vmem:[%s165 + $0x28] sm:$0xff]
      %v178 = vld [vmem:[%s165 + $0x30] sm:$0xff]
      %v179 = vld [vmem:[%s165 + $0x38] sm:$0xff]
      %v180 = vld [vmem:[%s165 + $0x40] sm:$0xff]
      %v181 = vld [vmem:[%s165 + $0x48] sm:$0xff]
      %v182 = vld [vmem:[%s165 + $0x50] sm:$0xff]
      %v183 = vld [vmem:[%s165 + $0x58] sm:$0xff]
      %v184 = vld [vmem:[%s165 + $0x60] sm:$0xff]
      %v185 = vld [vmem:[%s165 + $0x68] sm:$0xff]
      %v186 = vld [vmem:[%s165 + $0x70] sm:$0xff]
      %v187 = vld [vmem:[%s165 + $0x78] sm:$0xff]
      %v188 = vpack.c.bf16 %v173, %v172
      %v189 = vpack.c.bf16 %v175, %v174
      %v190 = vpack.c.bf16 %v177, %v176
      %v191 = vpack.c.bf16 %v179, %v178
      %v192 = vpack.c.bf16 %v181, %v180
      %v193 = vpack.c.bf16 %v183, %v182
      %v194 = vpack.c.bf16 %v185, %v184
      %v195 = vpack.c.bf16 %v187, %v186
      %v197 = vshrl.u32 %v188, 16
      %v200 = vshrl.u32 %v189, 16
      %v203 = vshrl.u32 %v190, 16
      %v206 = vshrl.u32 %v191, 16
      %v209 = vshrl.u32 %v192, 16
      %v212 = vshrl.u32 %v193, 16
      %v215 = vshrl.u32 %v194, 16
      %v218 = vshrl.u32 %v195, 16
      %v228 = vrot.slane %v197, 7
      %v229 = vshll.u32 %v188, 16
      %v231 = vor.u32 %v228, %v229
      %v232 = vrot.slane %v200, 7
      %v233 = vshll.u32 %v189, 16
      %v235 = vor.u32 %v232, %v233
      %v236 = vrot.slane %v203, 7
      %v237 = vshll.u32 %v190, 16
      %v239 = vor.u32 %v236, %v237
      %v240 = vrot.slane %v206, 7
      %v241 = vshll.u32 %v191, 16
      %v243 = vor.u32 %v240, %v241
      %v244 = vrot.slane %v209, 7
      %v245 = vshll.u32 %v192, 16
      %v247 = vor.u32 %v244, %v245
      %v248 = vrot.slane %v212, 7
      %v249 = vshll.u32 %v193, 16
      %v251 = vor.u32 %v248, %v249
      %v252 = vrot.slane %v215, 7
      %v253 = vshll.u32 %v194, 16
      %v255 = vor.u32 %v252, %v253
      %v256 = vrot.slane %v218, 7
      %v257 = vshll.u32 %v195, 16
      %v259 = vor.u32 %v256, %v257
      %vm268 = vcmask 1040384
      %vm269 = vsmask.f32 256
      %vm270 = vmand %vm268, %vm269
      %v271 = vsel %vm270, %v197, %v231
      %v272 = vsel %vm270, %v200, %v235
      %v273 = vsel %vm270, %v203, %v239
      %v274 = vsel %vm270, %v206, %v243
      %v275 = vsel %vm270, %v209, %v247
      %v276 = vsel %vm270, %v212, %v251
      %v277 = vsel %vm270, %v215, %v255
      %v278 = vsel %vm270, %v218, %v259
      %v279 = vrot.slane %v229, 1
      %v280 = vor.u32 %v197, %v279
      %v281 = vrot.slane %v233, 1
      %v282 = vor.u32 %v200, %v281
      %v283 = vrot.slane %v237, 1
      %v284 = vor.u32 %v203, %v283
      %v285 = vrot.slane %v241, 1
      %v286 = vor.u32 %v206, %v285
      %v287 = vrot.slane %v245, 1
      %v288 = vor.u32 %v209, %v287
      %v289 = vrot.slane %v249, 1
      %v290 = vor.u32 %v212, %v289
      %v291 = vrot.slane %v253, 1
      %v292 = vor.u32 %v215, %v291
      %v293 = vrot.slane %v257, 1
      %v294 = vor.u32 %v218, %v293
      %vm311 = vcmask 1047552
      %vm312 = vsmask.f32 7424
      %vm313 = vmand %vm311, %vm312
      %v314 = vsel %vm313, %v280, %v229
      %v315 = vsel %vm313, %v282, %v233
      %v316 = vsel %vm313, %v284, %v237
      %v317 = vsel %vm313, %v286, %v241
      %v318 = vsel %vm313, %v288, %v245
      %v319 = vsel %vm313, %v290, %v249
      %v320 = vsel %vm313, %v292, %v253
      %v321 = vsel %vm313, %v294, %v257
      %330 = vrot.lane.b32.xlu0 %v188, 4
      %v331 = vpop.permute.xlu0 %330
      %332 = vrot.lane.b32.xlu0 %v189, 4
      %v333 = vpop.permute.xlu0 %332
      %334 = vrot.lane.b32.xlu0 %v190, 4
      %v335 = vpop.permute.xlu0 %334
      %336 = vrot.lane.b32.xlu0 %v191, 4
      %v337 = vpop.permute.xlu0 %336
      %338 = vrot.lane.b32.xlu0 %v192, 4
      %v339 = vpop.permute.xlu0 %338
      %340 = vrot.lane.b32.xlu0 %v193, 4
      %v341 = vpop.permute.xlu0 %340
      %342 = vrot.lane.b32.xlu0 %v194, 4
      %v343 = vpop.permute.xlu0 %342
      %344 = vrot.lane.b32.xlu0 %v195, 4
      %v345 = vpop.permute.xlu0 %344
      %354 = vrot.lane.b32.xlu0 %v314, 8
      %v355 = vpop.permute.xlu0 %354
      %356 = vrot.lane.b32.xlu0 %v315, 8
      %v357 = vpop.permute.xlu0 %356
      %358 = vrot.lane.b32.xlu0 %v316, 8
      %v359 = vpop.permute.xlu0 %358
      %360 = vrot.lane.b32.xlu0 %v317, 8
      %v361 = vpop.permute.xlu0 %360
      %362 = vrot.lane.b32.xlu0 %v318, 8
      %v363 = vpop.permute.xlu0 %362
      %364 = vrot.lane.b32.xlu0 %v319, 8
      %v365 = vpop.permute.xlu0 %364
      %366 = vrot.lane.b32.xlu0 %v320, 8
      %v367 = vpop.permute.xlu0 %366
      %368 = vrot.lane.b32.xlu0 %v321, 8
      %v369 = vpop.permute.xlu0 %368
      %vm370 = vcmask 31744
      %v373 = vsel %vm370, %v271, %v331
      %v376 = vsel %vm370, %v272, %v333
      %v379 = vsel %vm370, %v273, %v335
      %v382 = vsel %vm370, %v274, %v337
      %v385 = vsel %vm370, %v275, %v339
      %v388 = vsel %vm370, %v276, %v341
      %v391 = vsel %vm370, %v277, %v343
      %v394 = vsel %vm370, %v278, %v345
      %vm395 = vcmask 64512
      %v397 = vsel %vm395, %v373, %v355
      %v400 = vsel %vm395, %v376, %v357
      %v403 = vsel %vm395, %v379, %v359
      %v406 = vsel %vm395, %v382, %v361
      %v409 = vsel %vm395, %v385, %v363
      %v412 = vsel %vm395, %v388, %v365
      %v415 = vsel %vm395, %v391, %v367
      %v418 = vsel %vm395, %v394, %v369
      %vm420 = vcmask 97280
      %421 = vst.msk [vmem:[#allocation2 + $0x8] sm:$0xff] %vm420, %v397
      %422 = vst.msk [vmem:[#allocation2 + $0x10] sm:$0xff] %vm420, %v400
      %423 = vst.msk [vmem:[#allocation2 + $0x18] sm:$0xff] %vm420, %v403
      %424 = vst.msk [vmem:[#allocation2 + $0x20] sm:$0xff] %vm420, %v406
      %425 = vst.msk [vmem:[#allocation2 + $0x28] sm:$0xff] %vm420, %v409
      %426 = vst.msk [vmem:[#allocation2 + $0x30] sm:$0xff] %vm420, %v412
      %427 = vst.msk [vmem:[#allocation2 + $0x38] sm:$0xff] %vm420, %v415
      %428 = vst.msk [vmem:[#allocation2 + $0x40] sm:$0xff] %vm420, %v418
      %s429 = scalar_lea.vmem %s165, 128
      %v430 = vld [vmem:[%s429] sm:$0xff]
      %v431 = vld [vmem:[%s429 + $0x8] sm:$0xff]
      %v432 = vld [vmem:[%s429 + $0x10] sm:$0xff]
      %v433 = vld [vmem:[%s429 + $0x18] sm:$0xff]
      %v434 = vld [vmem:[%s429 + $0x20] sm:$0xff]
      %v435 = vld [vmem:[%s429 + $0x28] sm:$0xff]
      %v436 = vld [vmem:[%s429 + $0x30] sm:$0xff]
      %v437 = vld [vmem:[%s429 + $0x38] sm:$0xff]
      %v438 = vld [vmem:[%s429 + $0x40] sm:$0xff]
      %v439 = vld [vmem:[%s429 + $0x48] sm:$0xff]
      %v440 = vld [vmem:[%s429 + $0x50] sm:$0xff]
      %v441 = vld [vmem:[%s429 + $0x58] sm:$0xff]
      %v442 = vld [vmem:[%s429 + $0x60] sm:$0xff]
      %v443 = vld [vmem:[%s429 + $0x68] sm:$0xff]
      %v444 = vld [vmem:[%s429 + $0x70] sm:$0xff]
      %v445 = vld [vmem:[%s429 + $0x78] sm:$0xff]
      %v446 = vpack.c.bf16 %v431, %v430
      %v447 = vpack.c.bf16 %v433, %v432
      %v448 = vpack.c.bf16 %v435, %v434
      %v449 = vpack.c.bf16 %v437, %v436
      %v450 = vpack.c.bf16 %v439, %v438
      %v451 = vpack.c.bf16 %v441, %v440
      %v452 = vpack.c.bf16 %v443, %v442
      %v453 = vpack.c.bf16 %v445, %v444
      %v455 = vshrl.u32 %v446, 16
      %v458 = vshrl.u32 %v447, 16
      %v461 = vshrl.u32 %v448, 16
      %v464 = vshrl.u32 %v449, 16
      %v467 = vshrl.u32 %v450, 16
      %v470 = vshrl.u32 %v451, 16
      %v473 = vshrl.u32 %v452, 16
      %v476 = vshrl.u32 %v453, 16
      %v486 = vrot.slane %v455, 7
      %v487 = vshll.u32 %v446, 16
      %v489 = vor.u32 %v486, %v487
      %v490 = vrot.slane %v458, 7
      %v491 = vshll.u32 %v447, 16
      %v493 = vor.u32 %v490, %v491
      %v494 = vrot.slane %v461, 7
      %v495 = vshll.u32 %v448, 16
      %v497 = vor.u32 %v494, %v495
      %v498 = vrot.slane %v464, 7
      %v499 = vshll.u32 %v449, 16
      %v501 = vor.u32 %v498, %v499
      %v502 = vrot.slane %v467, 7
      %v503 = vshll.u32 %v450, 16
      %v505 = vor.u32 %v502, %v503
      %v506 = vrot.slane %v470, 7
      %v507 = vshll.u32 %v451, 16
      %v509 = vor.u32 %v506, %v507
      %v510 = vrot.slane %v473, 7
      %v511 = vshll.u32 %v452, 16
      %v513 = vor.u32 %v510, %v511
      %v514 = vrot.slane %v476, 7
      %v515 = vshll.u32 %v453, 16
      %v517 = vor.u32 %v514, %v515
      %v526 = vsel %vm270, %v455, %v489
      %v527 = vsel %vm270, %v458, %v493
      %v528 = vsel %vm270, %v461, %v497
      %v529 = vsel %vm270, %v464, %v501
      %v530 = vsel %vm270, %v467, %v505
      %v531 = vsel %vm270, %v470, %v509
      %v532 = vsel %vm270, %v473, %v513
      %v533 = vsel %vm270, %v476, %v517
      %v534 = vrot.slane %v487, 1
      %v535 = vor.u32 %v455, %v534
      %v536 = vrot.slane %v491, 1
      %v537 = vor.u32 %v458, %v536
      %v538 = vrot.slane %v495, 1
      %v539 = vor.u32 %v461, %v538
      %v540 = vrot.slane %v499, 1
      %v541 = vor.u32 %v464, %v540
      %v542 = vrot.slane %v503, 1
      %v543 = vor.u32 %v467, %v542
      %v544 = vrot.slane %v507, 1
      %v545 = vor.u32 %v470, %v544
      %v546 = vrot.slane %v511, 1
      %v547 = vor.u32 %v473, %v546
      %v548 = vrot.slane %v515, 1
      %v549 = vor.u32 %v476, %v548
      %v566 = vsel %vm313, %v535, %v487
      %v567 = vsel %vm313, %v537, %v491
      %v568 = vsel %vm313, %v539, %v495
      %v569 = vsel %vm313, %v541, %v499
      %v570 = vsel %vm313, %v543, %v503
      %v571 = vsel %vm313, %v545, %v507
      %v572 = vsel %vm313, %v547, %v511
      %v573 = vsel %vm313, %v549, %v515
      %582 = vrot.lane.b32.xlu0 %v446, 4
      %v583 = vpop.permute.xlu0 %582
      %584 = vrot.lane.b32.xlu0 %v447, 4
      %v585 = vpop.permute.xlu0 %584
      %586 = vrot.lane.b32.xlu0 %v448, 4
      %v587 = vpop.permute.xlu0 %586
      %588 = vrot.lane.b32.xlu0 %v449, 4
      %v589 = vpop.permute.xlu0 %588
      %590 = vrot.lane.b32.xlu0 %v450, 4
      %v591 = vpop.permute.xlu0 %590
      %592 = vrot.lane.b32.xlu0 %v451, 4
      %v593 = vpop.permute.xlu0 %592
      %594 = vrot.lane.b32.xlu0 %v452, 4
      %v595 = vpop.permute.xlu0 %594
      %596 = vrot.lane.b32.xlu0 %v453, 4
      %v597 = vpop.permute.xlu0 %596
      %606 = vrot.lane.b32.xlu0 %v566, 8
      %v607 = vpop.permute.xlu0 %606
      %608 = vrot.lane.b32.xlu0 %v567, 8
      %v609 = vpop.permute.xlu0 %608
      %610 = vrot.lane.b32.xlu0 %v568, 8
      %v611 = vpop.permute.xlu0 %610
      %612 = vrot.lane.b32.xlu0 %v569, 8
      %v613 = vpop.permute.xlu0 %612
      %614 = vrot.lane.b32.xlu0 %v570, 8
      %v615 = vpop.permute.xlu0 %614
      %616 = vrot.lane.b32.xlu0 %v571, 8
      %v617 = vpop.permute.xlu0 %616
      %618 = vrot.lane.b32.xlu0 %v572, 8
      %v619 = vpop.permute.xlu0 %618
      %620 = vrot.lane.b32.xlu0 %v573, 8
      %v621 = vpop.permute.xlu0 %620
      %v624 = vsel %vm370, %v526, %v583
      %v627 = vsel %vm370, %v527, %v585
      %v630 = vsel %vm370, %v528, %v587
      %v633 = vsel %vm370, %v529, %v589
      %v636 = vsel %vm370, %v530, %v591
      %v639 = vsel %vm370, %v531, %v593
      %v642 = vsel %vm370, %v532, %v595
      %v645 = vsel %vm370, %v533, %v597
      %v647 = vsel %vm395, %v624, %v607
      %v650 = vsel %vm395, %v627, %v609
      %v653 = vsel %vm395, %v630, %v611
      %v656 = vsel %vm395, %v633, %v613
      %v659 = vsel %vm395, %v636, %v615
      %v662 = vsel %vm395, %v639, %v617
      %v665 = vsel %vm395, %v642, %v619
      %v668 = vsel %vm395, %v645, %v621
      %670 = vst.msk [vmem:[#allocation2 + $0x48] sm:$0xff] %vm420, %v647
      %671 = vst.msk [vmem:[#allocation2 + $0x50] sm:$0xff] %vm420, %v650
      %672 = vst.msk [vmem:[#allocation2 + $0x58] sm:$0xff] %vm420, %v653
      %673 = vst.msk [vmem:[#allocation2 + $0x60] sm:$0xff] %vm420, %v656
      %674 = vst.msk [vmem:[#allocation2 + $0x68] sm:$0xff] %vm420, %v659
      %675 = vst.msk [vmem:[#allocation2 + $0x70] sm:$0xff] %vm420, %v662
      %676 = vst.msk [vmem:[#allocation2 + $0x78] sm:$0xff] %vm420, %v665
      %677 = vst.msk [vmem:[#allocation2 + $0x80] sm:$0xff] %vm420, %v668
      %v678 = vld [vmem:[#allocation2 + $0x10] sm:$0xff]
      %679 = vst.msk [vmem:[#allocation2] sm:$0xff] %vm420, %v678
      %v680 = vld [vmem:[#allocation2 + $0x78] sm:$0xff]
      %681 = vst.msk [vmem:[#allocation2 + $0x88] sm:$0xff] %vm420, %v680
      %v682 = vld [vmem:[#allocation2] sm:$0xff]
      %v683 = vld [vmem:[#allocation2 + $0x8] sm:$0xff]
      %v684 = vld [vmem:[#allocation2 + $0x10] sm:$0xff]
      %v685 = vld [vmem:[#allocation2 + $0x18] sm:$0xff]
      %v686 = vld [vmem:[#allocation2 + $0x20] sm:$0xff]
      %v687 = vld [vmem:[#allocation2 + $0x28] sm:$0xff]
      %v688 = vld [vmem:[#allocation2 + $0x30] sm:$0xff]
      %v689 = vld [vmem:[#allocation2 + $0x38] sm:$0xff]
      %v690 = vld [vmem:[%s1] sm:$0xf]
      %v691 = vld [vmem:[%s1 + $0x4] sm:$0x3]
      %v692 = vld [vmem:[#allocation2 + $0x40] sm:$0xff]
      %s693 = scalar_lea.vmem %s1, 8
      %v694 = vld [vmem:[%s693] sm:$0xf]
      %v695 = vld [vmem:[%s693 + $0x4] sm:$0x3]
      %v698 = vunpack.c.l.b16 %v694
      %v699 = vunpack.c.l.b16 %v695
      %v700 = vpack.c.b16 %v699, %v698
      %v702 = vsel %vm420, %v683, 0
      %v705 = vsel %vm420, %v684, 0
      %v708 = vsel %vm420, %v685, 0
      %v711 = vsel %vm420, %v686, 0
      %v714 = vsel %vm420, %v687, 0
      %v717 = vsel %vm420, %v688, 0
      %v720 = vsel %vm420, %v689, 0
      %v723 = vsel %vm420, %v692, 0
      %vm725 = vcmask 1045504
      %v727 = vsel %vm725, %v700, 0
      %729 = vmatprep.subr.bf16.mxu0 0
      %730 = vmatpush1.bf16.msra.mxu0 %v727
      %731 = vmatprep.subr.bf16.mxu0 0
      %732 = vmatpush1.bf16.msra.mxu0 0
      %733 = vmatprep.subr.bf16.mxu0 0
      %734 = vmatpush1.bf16.msra.mxu0 0
      %735 = vmatprep.subr.bf16.mxu0 0
      %736 = vmatpush1.bf16.msra.mxu0 0
      %737 = vmatprep.subr.bf16.mxu0 0
      %738 = vmatpush1.bf16.msra.mxu0 0
      %739 = vmatprep.subr.bf16.mxu0 0
      %740 = vmatpush1.bf16.msra.mxu0 0
      %741 = vmatprep.subr.bf16.mxu0 0
      %742 = vmatpush1.bf16.msra.mxu0 0
      %743 = vmatprep.subr.bf16.mxu0 0
      %744 = vmatpush1.bf16.msra.mxu0 0
      %745 = vmatprep.subr.bf16.mxu0 0
      %746 = vmatpush1.bf16.msra.mxu0 0
      %747 = vmatprep.subr.bf16.mxu0 0
      %748 = vmatpush1.bf16.msra.mxu0 0
      %749 = vmatprep.subr.bf16.mxu0 0
      %750 = vmatpush1.bf16.msra.mxu0 0
      %751 = vmatprep.subr.bf16.mxu0 0
      %752 = vmatpush1.bf16.msra.mxu0 0
      %753 = vmatprep.subr.bf16.mxu0 0
      %754 = vmatpush1.bf16.msra.mxu0 0
      %755 = vmatprep.subr.bf16.mxu0 0
      %756 = vmatpush1.bf16.msra.mxu0 0
      %757 = vmatprep.subr.bf16.mxu0 0
      %758 = vmatpush1.bf16.msra.mxu0 0
      %759 = vmatprep.subr.bf16.mxu0 0
      %760 = vmatpush1.bf16.msra.mxu0 0
      %761 = vmatprep.mubr.bf16.mxu0 0
      %762 = vmatmul.mubr.bf16.gmra.mrb[0].mxu0 %v702
      %v763 = vpop.f32.mrb[0].mxu0
      %v764 = vadd.f32 0.0, %v763
      %v765 = vpop.f32.mrb[0].mxu0
      %v766 = vpop.f32.mrb[0].mxu0
      %v767 = vadd.f32 0.0, %v766
      %v768 = vpop.f32.mrb[0].mxu0
      %769 = vmatprep.mubr.bf16.mxu0 0
      %770 = vmatmul.mubr.bf16.gmra.mrb[0].mxu0 %v705
      %v771 = vpop.f32.mrb[0].mxu0
      %v772 = vadd.f32 0.0, %v771
      %v773 = vpop.f32.mrb[0].mxu0
      %v774 = vpop.f32.mrb[0].mxu0
      %v775 = vadd.f32 0.0, %v774
      %v776 = vpop.f32.mrb[0].mxu0
      %777 = vmatprep.mubr.bf16.mxu0 0
      %778 = vmatmul.mubr.bf16.gmra.mrb[0].mxu0 %v708
      %v779 = vpop.f32.mrb[0].mxu0
      %v780 = vadd.f32 0.0, %v779
      %v781 = vpop.f32.mrb[0].mxu0
      %v782 = vpop.f32.mrb[0].mxu0
      %v783 = vadd.f32 0.0, %v782
      %v784 = vpop.f32.mrb[0].mxu0
      %785 = vmatprep.mubr.bf16.mxu0 0
      %786 = vmatmul.mubr.bf16.gmra.mrb[0].mxu0 %v711
      %v787 = vpop.f32.mrb[0].mxu0
      %v788 = vadd.f32 0.0, %v787
      %v789 = vpop.f32.mrb[0].mxu0
      %v790 = vpop.f32.mrb[0].mxu0
      %v791 = vadd.f32 0.0, %v790
      %v792 = vpop.f32.mrb[0].mxu0
      %793 = vmatprep.mubr.bf16.mxu0 0
      %794 = vmatmul.mubr.bf16.gmra.mrb[0].mxu0 %v714
      %v795 = vpop.f32.mrb[0].mxu0
      %v796 = vadd.f32 0.0, %v795
      %v797 = vpop.f32.mrb[0].mxu0
      %v798 = vpop.f32.mrb[0].mxu0
      %v799 = vadd.f32 0.0, %v798
      %v800 = vpop.f32.mrb[0].mxu0
      %801 = vmatprep.mubr.bf16.mxu0 0
      %802 = vmatmul.mubr.bf16.gmra.mrb[0].mxu0 %v717
      %v803 = vpop.f32.mrb[0].mxu0
      %v804 = vadd.f32 0.0, %v803
      %v805 = vpop.f32.mrb[0].mxu0
      %v806 = vpop.f32.mrb[0].mxu0
      %v807 = vadd.f32 0.0, %v806
      %v808 = vpop.f32.mrb[0].mxu0
      %809 = vmatprep.mubr.bf16.mxu0 0
      %810 = vmatmul.mubr.bf16.gmra.mrb[0].mxu0 %v720
      %v811 = vpop.f32.mrb[0].mxu0
      %v812 = vadd.f32 0.0, %v811
      %v813 = vpop.f32.mrb[0].mxu0
      %v814 = vpop.f32.mrb[0].mxu0
      %v815 = vadd.f32 0.0, %v814
      %v816 = vpop.f32.mrb[0].mxu0
      %817 = vmatprep.mubr.bf16.mxu0 0
      %818 = vmatmul.mubr.bf16.gmra.mrb[0].mxu0 %v723
      %v819 = vpop.f32.mrb[0].mxu0
      %v820 = vadd.f32 0.0, %v819
      %v821 = vpop.f32.mrb[0].mxu0
      %v822 = vpop.f32.mrb[0].mxu0
      %v823 = vadd.f32 0.0, %v822
      %v824 = vpop.f32.mrb[0].mxu0
      %825 = vdwg.mxu0
      %v828 = vunpack.c.l.b16 %v690
      %v829 = vunpack.c.l.b16 %v691
      %v830 = vpack.c.b16 %v829, %v828
      %v832 = vsel %vm420, %v682, 0
      %v835 = vsel %vm725, %v830, 0
      %837 = vmatprep.subr.bf16.mxu0 0
      %838 = vmatpush1.bf16.msra.mxu0 %v835
      %839 = vmatprep.subr.bf16.mxu0 0
      %840 = vmatpush1.bf16.msra.mxu0 0
      %841 = vmatprep.subr.bf16.mxu0 0
      %842 = vmatpush1.bf16.msra.mxu0 0
      %843 = vmatprep.subr.bf16.mxu0 0
      %844 = vmatpush1.bf16.msra.mxu0 0
      %845 = vmatprep.subr.bf16.mxu0 0
      %846 = vmatpush1.bf16.msra.mxu0 0
      %847 = vmatprep.subr.bf16.mxu0 0
      %848 = vmatpush1.bf16.msra.mxu0 0
      %849 = vmatprep.subr.bf16.mxu0 0
      %850 = vmatpush1.bf16.msra.mxu0 0
      %851 = vmatprep.subr.bf16.mxu0 0
      %852 = vmatpush1.bf16.msra.mxu0 0
      %853 = vmatprep.subr.bf16.mxu0 0
      %854 = vmatpush1.bf16.msra.mxu0 0
      %855 = vmatprep.subr.bf16.mxu0 0
      %856 = vmatpush1.bf16.msra.mxu0 0
      %857 = vmatprep.subr.bf16.mxu0 0
      %858 = vmatpush1.bf16.msra.mxu0 0
      %859 = vmatprep.subr.bf16.mxu0 0
      %860 = vmatpush1.bf16.msra.mxu0 0
      %861 = vmatprep.subr.bf16.mxu0 0
      %862 = vmatpush1.bf16.msra.mxu0 0
      %863 = vmatprep.subr.bf16.mxu0 0
      %864 = vmatpush1.bf16.msra.mxu0 0
      %865 = vmatprep.subr.bf16.mxu0 0
      %866 = vmatpush1.bf16.msra.mxu0 0
      %867 = vmatprep.subr.bf16.mxu0 0
      %868 = vmatpush1.bf16.msra.mxu0 0
      %869 = vmatprep.mubr.bf16.mxu0 0
      %870 = vmatmul.mubr.bf16.gmra.mrb[0].mxu0 %v832
      %v871 = vpop.f32.mrb[0].mxu0
      %v872 = vadd.f32 %v764, %v871
      %v873 = vpop.f32.mrb[0].mxu0
      %v874 = vpop.f32.mrb[0].mxu0
      %v875 = vadd.f32 %v767, %v874
      %v876 = vpop.f32.mrb[0].mxu0
      %877 = vmatprep.mubr.bf16.mxu0 0
      %878 = vmatmul.mubr.bf16.gmra.mrb[0].mxu0 %v702
      %v879 = vpop.f32.mrb[0].mxu0
      %v880 = vadd.f32 %v772, %v879
      %v881 = vpop.f32.mrb[0].mxu0
      %v882 = vpop.f32.mrb[0].mxu0
      %v883 = vadd.f32 %v775, %v882
      %v884 = vpop.f32.mrb[0].mxu0
      %885 = vmatprep.mubr.bf16.mxu0 0
      %886 = vmatmul.mubr.bf16.gmra.mrb[0].mxu0 %v705
      %v887 = vpop.f32.mrb[0].mxu0
      %v888 = vadd.f32 %v780, %v887
      %v889 = vpop.f32.mrb[0].mxu0
      %v890 = vpop.f32.mrb[0].mxu0
      %v891 = vadd.f32 %v783, %v890
      %v892 = vpop.f32.mrb[0].mxu0
      %893 = vmatprep.mubr.bf16.mxu0 0
      %894 = vmatmul.mubr.bf16.gmra.mrb[0].mxu0 %v708
      %v895 = vpop.f32.mrb[0].mxu0
      %v896 = vadd.f32 %v788, %v895
      %v897 = vpop.f32.mrb[0].mxu0
      %v898 = vpop.f32.mrb[0].mxu0
      %v899 = vadd.f32 %v791, %v898
      %v900 = vpop.f32.mrb[0].mxu0
      %901 = vmatprep.mubr.bf16.mxu0 0
      %902 = vmatmul.mubr.bf16.gmra.mrb[0].mxu0 %v711
      %v903 = vpop.f32.mrb[0].mxu0
      %v904 = vadd.f32 %v796, %v903
      %v905 = vpop.f32.mrb[0].mxu0
      %v906 = vpop.f32.mrb[0].mxu0
      %v907 = vadd.f32 %v799, %v906
      %v908 = vpop.f32.mrb[0].mxu0
      %909 = vmatprep.mubr.bf16.mxu0 0
      %910 = vmatmul.mubr.bf16.gmra.mrb[0].mxu0 %v714
      %v911 = vpop.f32.mrb[0].mxu0
      %v912 = vadd.f32 %v804, %v911
      %v913 = vpop.f32.mrb[0].mxu0
      %v914 = vpop.f32.mrb[0].mxu0
      %v915 = vadd.f32 %v807, %v914
      %v916 = vpop.f32.mrb[0].mxu0
      %917 = vmatprep.mubr.bf16.mxu0 0
      %918 = vmatmul.mubr.bf16.gmra.mrb[0].mxu0 %v717
      %v919 = vpop.f32.mrb[0].mxu0
      %v920 = vadd.f32 %v812, %v919
      %v921 = vpop.f32.mrb[0].mxu0
      %v922 = vpop.f32.mrb[0].mxu0
      %v923 = vadd.f32 %v815, %v922
      %v924 = vpop.f32.mrb[0].mxu0
      %925 = vmatprep.mubr.bf16.mxu0 0
      %926 = vmatmul.mubr.bf16.gmra.mrb[0].mxu0 %v720
      %v927 = vpop.f32.mrb[0].mxu0
      %v928 = vadd.f32 %v820, %v927
      %v929 = vpop.f32.mrb[0].mxu0
      %v930 = vpop.f32.mrb[0].mxu0
      %v931 = vadd.f32 %v823, %v930
      %v932 = vpop.f32.mrb[0].mxu0
      %933 = vdwg.mxu0
      %v934 = vld [vmem:[#allocation2 + $0x10] sm:$0xff]
      %v935 = vld [vmem:[#allocation2 + $0x18] sm:$0xff]
      %v936 = vld [vmem:[#allocation2 + $0x20] sm:$0xff]
      %v937 = vld [vmem:[#allocation2 + $0x28] sm:$0xff]
      %v938 = vld [vmem:[#allocation2 + $0x30] sm:$0xff]
      %v939 = vld [vmem:[#allocation2 + $0x38] sm:$0xff]
      %v940 = vld [vmem:[#allocation2 + $0x40] sm:$0xff]
      %v941 = vld [vmem:[#allocation2 + $0x48] sm:$0xff]
      %s942 = scalar_lea.vmem %s1, 16
      %v943 = vld [vmem:[%s942] sm:$0xf]
      %v944 = vld [vmem:[%s942 + $0x4] sm:$0x3]
      %v947 = vunpack.c.l.b16 %v943
      %v948 = vunpack.c.l.b16 %v944
      %v949 = vpack.c.b16 %v948, %v947
      %v951 = vsel %vm420, %v934, 0
      %v954 = vsel %vm420, %v935, 0
      %v957 = vsel %vm420, %v936, 0
      %v960 = vsel %vm420, %v937, 0
      %v963 = vsel %vm420, %v938, 0
      %v966 = vsel %vm420, %v939, 0
      %v969 = vsel %vm420, %v940, 0
      %v972 = vsel %vm420, %v941, 0
      %v975 = vsel %vm725, %v949, 0
      %977 = vmatprep.subr.bf16.mxu0 0
      %978 = vmatpush1.bf16.msra.mxu0 %v975
      %979 = vmatprep.subr.bf16.mxu0 0
      %980 = vmatpush1.bf16.msra.mxu0 0
      %981 = vmatprep.subr.bf16.mxu0 0
      %982 = vmatpush1.bf16.msra.mxu0 0
      %983 = vmatprep.subr.bf16.mxu0 0
      %984 = vmatpush1.bf16.msra.mxu0 0
      %985 = vmatprep.subr.bf16.mxu0 0
      %986 = vmatpush1.bf16.msra.mxu0 0
      %987 = vmatprep.subr.bf16.mxu0 0
      %988 = vmatpush1.bf16.msra.mxu0 0
      %989 = vmatprep.subr.bf16.mxu0 0
      %990 = vmatpush1.bf16.msra.mxu0 0
      %991 = vmatprep.subr.bf16.mxu0 0
      %992 = vmatpush1.bf16.msra.mxu0 0
      %993 = vmatprep.subr.bf16.mxu0 0
      %994 = vmatpush1.bf16.msra.mxu0 0
      %995 = vmatprep.subr.bf16.mxu0 0
      %996 = vmatpush1.bf16.msra.mxu0 0
      %997 = vmatprep.subr.bf16.mxu0 0
      %998 = vmatpush1.bf16.msra.mxu0 0
      %999 = vmatprep.subr.bf16.mxu0 0
      %1000 = vmatpush1.bf16.msra.mxu0 0
      %1001 = vmatprep.subr.bf16.mxu0 0
      %1002 = vmatpush1.bf16.msra.mxu0 0
      %1003 = vmatprep.subr.bf16.mxu0 0
      %1004 = vmatpush1.bf16.msra.mxu0 0
      %1005 = vmatprep.subr.bf16.mxu0 0
      %1006 = vmatpush1.bf16.msra.mxu0 0
      %1007 = vmatprep.subr.bf16.mxu0 0
      %1008 = vmatpush1.bf16.msra.mxu0 0
      %1009 = vmatprep.mubr.bf16.mxu0 0
      %1010 = vmatmul.mubr.bf16.gmra.mrb[0].mxu0 %v951
      %v1011 = vpop.f32.mrb[0].mxu0
      %v1012 = vadd.f32 0.0, %v1011
      %v1013 = vpop.f32.mrb[0].mxu0
      %v1014 = vpop.f32.mrb[0].mxu0
      %v1015 = vadd.f32 0.0, %v1014
      %v1016 = vpop.f32.mrb[0].mxu0
      %1017 = vmatprep.mubr.bf16.mxu0 0
      %1018 = vmatmul.mubr.bf16.gmra.mrb[0].mxu0 %v954
      %v1019 = vpop.f32.mrb[0].mxu0
      %v1020 = vadd.f32 0.0, %v1019
      %v1021 = vpop.f32.mrb[0].mxu0
      %v1022 = vpop.f32.mrb[0].mxu0
      %v1023 = vadd.f32 0.0, %v1022
      %v1024 = vpop.f32.mrb[0].mxu0
      %1025 = vmatprep.mubr.bf16.mxu0 0
      %1026 = vmatmul.mubr.bf16.gmra.mrb[0].mxu0 %v957
      %v1027 = vpop.f32.mrb[0].mxu0
      %v1028 = vadd.f32 0.0, %v1027
      %v1029 = vpop.f32.mrb[0].mxu0
      %v1030 = vpop.f32.mrb[0].mxu0
      %v1031 = vadd.f32 0.0, %v1030
      %v1032 = vpop.f32.mrb[0].mxu0
      %1033 = vmatprep.mubr.bf16.mxu0 0
      %1034 = vmatmul.mubr.bf16.gmra.mrb[0].mxu0 %v960
      %v1035 = vpop.f32.mrb[0].mxu0
      %v1036 = vadd.f32 0.0, %v1035
      %v1037 = vpop.f32.mrb[0].mxu0
      %v1038 = vpop.f32.mrb[0].mxu0
      %v1039 = vadd.f32 0.0, %v1038
      %v1040 = vpop.f32.mrb[0].mxu0
      %1041 = vmatprep.mubr.bf16.mxu0 0
      %1042 = vmatmul.mubr.bf16.gmra.mrb[0].mxu0 %v963
      %v1043 = vpop.f32.mrb[0].mxu0
      %v1044 = vadd.f32 0.0, %v1043
      %v1045 = vpop.f32.mrb[0].mxu0
      %v1046 = vpop.f32.mrb[0].mxu0
      %v1047 = vadd.f32 0.0, %v1046
      %v1048 = vpop.f32.mrb[0].mxu0
      %1049 = vmatprep.mubr.bf16.mxu0 0
      %1050 = vmatmul.mubr.bf16.gmra.mrb[0].mxu0 %v966
      %v1051 = vpop.f32.mrb[0].mxu0
      %v1052 = vadd.f32 0.0, %v1051
      %v1053 = vpop.f32.mrb[0].mxu0
      %v1054 = vpop.f32.mrb[0].mxu0
      %v1055 = vadd.f32 0.0, %v1054
      %v1056 = vpop.f32.mrb[0].mxu0
      %1057 = vmatprep.mubr.bf16.mxu0 0
      %1058 = vmatmul.mubr.bf16.gmra.mrb[0].mxu0 %v969
      %v1059 = vpop.f32.mrb[0].mxu0
      %v1060 = vadd.f32 0.0, %v1059
      %v1061 = vpop.f32.mrb[0].mxu0
      %v1062 = vpop.f32.mrb[0].mxu0
      %v1063 = vadd.f32 0.0, %v1062
      %v1064 = vpop.f32.mrb[0].mxu0
      %1065 = vmatprep.mubr.bf16.mxu0 0
      %1066 = vmatmul.mubr.bf16.gmra.mrb[0].mxu0 %v972
      %v1067 = vpop.f32.mrb[0].mxu0
      %v1068 = vadd.f32 0.0, %v1067
      %v1069 = vpop.f32.mrb[0].mxu0
      %v1070 = vpop.f32.mrb[0].mxu0
      %v1071 = vadd.f32 0.0, %v1070
      %v1072 = vpop.f32.mrb[0].mxu0
      %1073 = vdwg.mxu0
      %v1074 = vadd.f32 %v872, %v1012
      %v1075 = vadd.f32 %v875, %v1015
      %v1076 = vadd.f32 %v880, %v1020
      %v1077 = vadd.f32 %v883, %v1023
      %v1078 = vadd.f32 %v888, %v1028
      %v1079 = vadd.f32 %v891, %v1031
      %v1080 = vadd.f32 %v896, %v1036
      %v1081 = vadd.f32 %v899, %v1039
      %v1082 = vadd.f32 %v904, %v1044
      %v1083 = vadd.f32 %v907, %v1047
      %v1084 = vadd.f32 %v912, %v1052
      %v1085 = vadd.f32 %v915, %v1055
      %v1086 = vadd.f32 %v920, %v1060
      %v1087 = vadd.f32 %v923, %v1063
      %v1088 = vadd.f32 %v928, %v1068
      %v1089 = vadd.f32 %v931, %v1071
      %1090 = vst.msk [vmem:[#allocation3] sm:$0xff] %vm370, %v1074
      %1091 = vst.msk [vmem:[#allocation3 + $0x8] sm:$0xff] %vm370, %v1075
      %1092 = vst.msk [vmem:[#allocation3 + $0x10] sm:$0xff] %vm370, %v1076
      %1093 = vst.msk [vmem:[#allocation3 + $0x18] sm:$0xff] %vm370, %v1077
      %1094 = vst.msk [vmem:[#allocation3 + $0x20] sm:$0xff] %vm370, %v1078
      %1095 = vst.msk [vmem:[#allocation3 + $0x28] sm:$0xff] %vm370, %v1079
      %1096 = vst.msk [vmem:[#allocation3 + $0x30] sm:$0xff] %vm370, %v1080
      %1097 = vst.msk [vmem:[#allocation3 + $0x38] sm:$0xff] %vm370, %v1081
      %1098 = vst.msk [vmem:[#allocation3 + $0x40] sm:$0xff] %vm370, %v1082
      %1099 = vst.msk [vmem:[#allocation3 + $0x48] sm:$0xff] %vm370, %v1083
      %1100 = vst.msk [vmem:[#allocation3 + $0x50] sm:$0xff] %vm370, %v1084
      %1101 = vst.msk [vmem:[#allocation3 + $0x58] sm:$0xff] %vm370, %v1085
      %1102 = vst.msk [vmem:[#allocation3 + $0x60] sm:$0xff] %vm370, %v1086
      %1103 = vst.msk [vmem:[#allocation3 + $0x68] sm:$0xff] %vm370, %v1087
      %1104 = vst.msk [vmem:[#allocation3 + $0x70] sm:$0xff] %vm370, %v1088
      %1105 = vst.msk [vmem:[#allocation3 + $0x78] sm:$0xff] %vm370, %v1089
      %v1106 = vsel %vm370, %v1074, 0.0
      %v1107 = vsel %vm370, %v1075, 0.0
      %v1108 = vadd.f32 %v1106, %v1107
      %v1109 = vsel %vm370, %v1076, 0.0
      %v1110 = vadd.f32 %v1108, %v1109
      %v1111 = vsel %vm370, %v1077, 0.0
      %v1112 = vadd.f32 %v1110, %v1111
      %v1113 = vsel %vm370, %v1078, 0.0
      %v1114 = vadd.f32 %v1112, %v1113
      %v1115 = vsel %vm370, %v1079, 0.0
      %v1116 = vadd.f32 %v1114, %v1115
      %v1117 = vsel %vm370, %v1080, 0.0
      %v1118 = vadd.f32 %v1116, %v1117
      %v1119 = vsel %vm370, %v1081, 0.0
      %v1120 = vadd.f32 %v1118, %v1119
      %v1121 = vsel %vm370, %v1082, 0.0
      %v1122 = vadd.f32 %v1120, %v1121
      %v1123 = vsel %vm370, %v1083, 0.0
      %v1124 = vadd.f32 %v1122, %v1123
      %v1125 = vsel %vm370, %v1084, 0.0
      %v1126 = vadd.f32 %v1124, %v1125
      %v1127 = vsel %vm370, %v1085, 0.0
      %v1128 = vadd.f32 %v1126, %v1127
      %v1129 = vsel %vm370, %v1086, 0.0
      %v1130 = vadd.f32 %v1128, %v1129
      %v1131 = vsel %vm370, %v1087, 0.0
      %v1132 = vadd.f32 %v1130, %v1131
      %v1133 = vsel %vm370, %v1088, 0.0
      %v1134 = vadd.f32 %v1132, %v1133
      %v1135 = vsel %vm370, %v1089, 0.0
      %v1136 = vadd.f32 %v1134, %v1135
      %v1137 = vrot.slane %v1136, 4
      %v1138 = vadd.f32 %v1136, %v1137
      %v1139 = vrot.slane %v1138, 2
      %v1140 = vadd.f32 %v1138, %v1139
      %v1141 = vrot.slane %v1140, 1
      %v1142 = vadd.f32 %v1140, %v1141
      %v1143 = vadd.f32 %v1142, 0.0
      %v1144 = vmul.f32 %v1074, %v1074
      %v1145 = vmul.f32 %v1075, %v1075
      %v1146 = vmul.f32 %v1076, %v1076
      %v1147 = vmul.f32 %v1077, %v1077
      %v1148 = vmul.f32 %v1078, %v1078
      %v1149 = vmul.f32 %v1079, %v1079
      %v1150 = vmul.f32 %v1080, %v1080
      %v1151 = vmul.f32 %v1081, %v1081
      %v1152 = vmul.f32 %v1082, %v1082
      %v1153 = vmul.f32 %v1083, %v1083
      %v1154 = vmul.f32 %v1084, %v1084
      %v1155 = vmul.f32 %v1085, %v1085
      %v1156 = vmul.f32 %v1086, %v1086
      %v1157 = vmul.f32 %v1087, %v1087
      %v1158 = vmul.f32 %v1088, %v1088
      %v1159 = vmul.f32 %v1089, %v1089
      %v1160 = vsel %vm370, %v1144, 0.0
      %v1161 = vsel %vm370, %v1145, 0.0
      %v1162 = vadd.f32 %v1160, %v1161
      %v1163 = vsel %vm370, %v1146, 0.0
      %v1164 = vadd.f32 %v1162, %v1163
      %v1165 = vsel %vm370, %v1147, 0.0
      %v1166 = vadd.f32 %v1164, %v1165
      %v1167 = vsel %vm370, %v1148, 0.0
      %v1168 = vadd.f32 %v1166, %v1167
      %v1169 = vsel %vm370, %v1149, 0.0
      %v1170 = vadd.f32 %v1168, %v1169
      %v1171 = vsel %vm370, %v1150, 0.0
      %v1172 = vadd.f32 %v1170, %v1171
      %v1173 = vsel %vm370, %v1151, 0.0
      %v1174 = vadd.f32 %v1172, %v1173
      %v1175 = vsel %vm370, %v1152, 0.0
      %v1176 = vadd.f32 %v1174, %v1175
      %v1177 = vsel %vm370, %v1153, 0.0
      %v1178 = vadd.f32 %v1176, %v1177
      %v1179 = vsel %vm370, %v1154, 0.0
      %v1180 = vadd.f32 %v1178, %v1179
      %v1181 = vsel %vm370, %v1155, 0.0
      %v1182 = vadd.f32 %v1180, %v1181
      %v1183 = vsel %vm370, %v1156, 0.0
      %v1184 = vadd.f32 %v1182, %v1183
      %v1185 = vsel %vm370, %v1157, 0.0
      %v1186 = vadd.f32 %v1184, %v1185
      %v1187 = vsel %vm370, %v1158, 0.0
      %v1188 = vadd.f32 %v1186, %v1187
      %v1189 = vsel %vm370, %v1159, 0.0
      %v1190 = vadd.f32 %v1188, %v1189
      %v1191 = vrot.slane %v1190, 4
      %v1192 = vadd.f32 %v1190, %v1191
      %v1193 = vrot.slane %v1192, 2
      %v1194 = vadd.f32 %v1192, %v1193
      %v1195 = vrot.slane %v1194, 1
      %v1196 = vadd.f32 %v1194, %v1195
      %v1197 = vadd.f32 %v1196, 0.0
      %v1198 = vld [vmem:[#allocation2 + $0x40] sm:$0xff]
      %v1199 = vld [vmem:[#allocation2 + $0x48] sm:$0xff]
      %v1200 = vld [vmem:[#allocation2 + $0x50] sm:$0xff]
      %v1201 = vld [vmem:[#allocation2 + $0x58] sm:$0xff]
      %v1202 = vld [vmem:[#allocation2 + $0x60] sm:$0xff]
      %v1203 = vld [vmem:[#allocation2 + $0x68] sm:$0xff]
      %v1204 = vld [vmem:[#allocation2 + $0x70] sm:$0xff]
      %v1205 = vld [vmem:[#allocation2 + $0x78] sm:$0xff]
      %v1206 = vld [vmem:[%s1] sm:$0xf]
      %v1207 = vld [vmem:[%s1 + $0x4] sm:$0x3]
      %v1208 = vld [vmem:[#allocation2 + $0x80] sm:$0xff]
      %v1209 = vld [vmem:[%s693] sm:$0xf]
      %v1210 = vld [vmem:[%s693 + $0x4] sm:$0x3]
      %v1213 = vunpack.c.l.b16 %v1209
      %v1214 = vunpack.c.l.b16 %v1210
      %v1215 = vpack.c.b16 %v1214, %v1213
      %v1217 = vsel %vm420, %v1199, 0
      %v1220 = vsel %vm420, %v1200, 0
      %v1223 = vsel %vm420, %v1201, 0
      %v1226 = vsel %vm420, %v1202, 0
      %v1229 = vsel %vm420, %v1203, 0
      %v1232 = vsel %vm420, %v1204, 0
      %v1235 = vsel %vm420, %v1205, 0
      %v1238 = vsel %vm420, %v1208, 0
      %v1241 = vsel %vm725, %v1215, 0
      %1243 = vmatprep.subr.bf16.mxu0 0
      %1244 = vmatpush1.bf16.msra.mxu0 %v1241
      %1245 = vmatprep.subr.bf16.mxu0 0
      %1246 = vmatpush1.bf16.msra.mxu0 0
      %1247 = vmatprep.subr.bf16.mxu0 0
      %1248 = vmatpush1.bf16.msra.mxu0 0
      %1249 = vmatprep.subr.bf16.mxu0 0
      %1250 = vmatpush1.bf16.msra.mxu0 0
      %1251 = vmatprep.subr.bf16.mxu0 0
      %1252 = vmatpush1.bf16.msra.mxu0 0
      %1253 = vmatprep.subr.bf16.mxu0 0
      %1254 = vmatpush1.bf16.msra.mxu0 0
      %1255 = vmatprep.subr.bf16.mxu0 0
      %1256 = vmatpush1.bf16.msra.mxu0 0
      %1257 = vmatprep.subr.bf16.mxu0 0
      %1258 = vmatpush1.bf16.msra.mxu0 0
      %1259 = vmatprep.subr.bf16.mxu0 0
      %1260 = vmatpush1.bf16.msra.mxu0 0
      %1261 = vmatprep.subr.bf16.mxu0 0
      %1262 = vmatpush1.bf16.msra.mxu0 0
      %1263 = vmatprep.subr.bf16.mxu0 0
      %1264 = vmatpush1.bf16.msra.mxu0 0
      %1265 = vmatprep.subr.bf16.mxu0 0
      %1266 = vmatpush1.bf16.msra.mxu0 0
      %1267 = vmatprep.subr.bf16.mxu0 0
      %1268 = vmatpush1.bf16.msra.mxu0 0
      %1269 = vmatprep.subr.bf16.mxu0 0
      %1270 = vmatpush1.bf16.msra.mxu0 0
      %1271 = vmatprep.subr.bf16.mxu0 0
      %1272 = vmatpush1.bf16.msra.mxu0 0
      %1273 = vmatprep.subr.bf16.mxu0 0
      %1274 = vmatpush1.bf16.msra.mxu0 0
      %1275 = vmatprep.mubr.bf16.mxu0 0
      %1276 = vmatmul.mubr.bf16.gmra.mrb[0].mxu0 %v1217
      %v1277 = vpop.f32.mrb[0].mxu0
      %v1278 = vadd.f32 0.0, %v1277
      %v1279 = vpop.f32.mrb[0].mxu0
      %v1280 = vpop.f32.mrb[0].mxu0
      %v1281 = vadd.f32 0.0, %v1280
      %v1282 = vpop.f32.mrb[0].mxu0
      %1283 = vmatprep.mubr.bf16.mxu0 0
      %1284 = vmatmul.mubr.bf16.gmra.mrb[0].mxu0 %v1220
      %v1285 = vpop.f32.mrb[0].mxu0
      %v1286 = vadd.f32 0.0, %v1285
      %v1287 = vpop.f32.mrb[0].mxu0
      %v1288 = vpop.f32.mrb[0].mxu0
      %v1289 = vadd.f32 0.0, %v1288
      %v1290 = vpop.f32.mrb[0].mxu0
      %1291 = vmatprep.mubr.bf16.mxu0 0
      %1292 = vmatmul.mubr.bf16.gmra.mrb[0].mxu0 %v1223
      %v1293 = vpop.f32.mrb[0].mxu0
      %v1294 = vadd.f32 0.0, %v1293
      %v1295 = vpop.f32.mrb[0].mxu0
      %v1296 = vpop.f32.mrb[0].mxu0
      %v1297 = vadd.f32 0.0, %v1296
      %v1298 = vpop.f32.mrb[0].mxu0
      %1299 = vmatprep.mubr.bf16.mxu0 0
      %1300 = vmatmul.mubr.bf16.gmra.mrb[0].mxu0 %v1226
      %v1301 = vpop.f32.mrb[0].mxu0
      %v1302 = vadd.f32 0.0, %v1301
      %v1303 = vpop.f32.mrb[0].mxu0
      %v1304 = vpop.f32.mrb[0].mxu0
      %v1305 = vadd.f32 0.0, %v1304
      %v1306 = vpop.f32.mrb[0].mxu0
      %1307 = vmatprep.mubr.bf16.mxu0 0
      %1308 = vmatmul.mubr.bf16.gmra.mrb[0].mxu0 %v1229
      %v1309 = vpop.f32.mrb[0].mxu0
      %v1310 = vadd.f32 0.0, %v1309
      %v1311 = vpop.f32.mrb[0].mxu0
      %v1312 = vpop.f32.mrb[0].mxu0
      %v1313 = vadd.f32 0.0, %v1312
      %v1314 = vpop.f32.mrb[0].mxu0
      %1315 = vmatprep.mubr.bf16.mxu0 0
      %1316 = vmatmul.mubr.bf16.gmra.mrb[0].mxu0 %v1232
      %v1317 = vpop.f32.mrb[0].mxu0
      %v1318 = vadd.f32 0.0, %v1317
      %v1319 = vpop.f32.mrb[0].mxu0
      %v1320 = vpop.f32.mrb[0].mxu0
      %v1321 = vadd.f32 0.0, %v1320
      %v1322 = vpop.f32.mrb[0].mxu0
      %1323 = vmatprep.mubr.bf16.mxu0 0
      %1324 = vmatmul.mubr.bf16.gmra.mrb[0].mxu0 %v1235
      %v1325 = vpop.f32.mrb[0].mxu0
      %v1326 = vadd.f32 0.0, %v1325
      %v1327 = vpop.f32.mrb[0].mxu0
      %v1328 = vpop.f32.mrb[0].mxu0
      %v1329 = vadd.f32 0.0, %v1328
      %v1330 = vpop.f32.mrb[0].mxu0
      %1331 = vmatprep.mubr.bf16.mxu0 0
      %1332 = vmatmul.mubr.bf16.gmra.mrb[0].mxu0 %v1238
      %v1333 = vpop.f32.mrb[0].mxu0
      %v1334 = vadd.f32 0.0, %v1333
      %v1335 = vpop.f32.mrb[0].mxu0
      %v1336 = vpop.f32.mrb[0].mxu0
      %v1337 = vadd.f32 0.0, %v1336
      %v1338 = vpop.f32.mrb[0].mxu0
      %1339 = vdwg.mxu0
      %v1342 = vunpack.c.l.b16 %v1206
      %v1343 = vunpack.c.l.b16 %v1207
      %v1344 = vpack.c.b16 %v1343, %v1342
      %v1346 = vsel %vm420, %v1198, 0
      %v1349 = vsel %vm725, %v1344, 0
      %1351 = vmatprep.subr.bf16.mxu0 0
      %1352 = vmatpush1.bf16.msra.mxu0 %v1349
      %1353 = vmatprep.subr.bf16.mxu0 0
      %1354 = vmatpush1.bf16.msra.mxu0 0
      %1355 = vmatprep.subr.bf16.mxu0 0
      %1356 = vmatpush1.bf16.msra.mxu0 0
      %1357 = vmatprep.subr.bf16.mxu0 0
      %1358 = vmatpush1.bf16.msra.mxu0 0
      %1359 = vmatprep.subr.bf16.mxu0 0
      %1360 = vmatpush1.bf16.msra.mxu0 0
      %1361 = vmatprep.subr.bf16.mxu0 0
      %1362 = vmatpush1.bf16.msra.mxu0 0
      %1363 = vmatprep.subr.bf16.mxu0 0
      %1364 = vmatpush1.bf16.msra.mxu0 0
      %1365 = vmatprep.subr.bf16.mxu0 0
      %1366 = vmatpush1.bf16.msra.mxu0 0
      %1367 = vmatprep.subr.bf16.mxu0 0
      %1368 = vmatpush1.bf16.msra.mxu0 0
      %1369 = vmatprep.subr.bf16.mxu0 0
      %1370 = vmatpush1.bf16.msra.mxu0 0
      %1371 = vmatprep.subr.bf16.mxu0 0
      %1372 = vmatpush1.bf16.msra.mxu0 0
      %1373 = vmatprep.subr.bf16.mxu0 0
      %1374 = vmatpush1.bf16.msra.mxu0 0
      %1375 = vmatprep.subr.bf16.mxu0 0
      %1376 = vmatpush1.bf16.msra.mxu0 0
      %1377 = vmatprep.subr.bf16.mxu0 0
      %1378 = vmatpush1.bf16.msra.mxu0 0
      %1379 = vmatprep.subr.bf16.mxu0 0
      %1380 = vmatpush1.bf16.msra.mxu0 0
      %1381 = vmatprep.subr.bf16.mxu0 0
      %1382 = vmatpush1.bf16.msra.mxu0 0
      %1383 = vmatprep.mubr.bf16.mxu0 0
      %1384 = vmatmul.mubr.bf16.gmra.mrb[0].mxu0 %v1346
      %v1385 = vpop.f32.mrb[0].mxu0
      %v1386 = vadd.f32 %v1278, %v1385
      %v1387 = vpop.f32.mrb[0].mxu0
      %v1388 = vpop.f32.mrb[0].mxu0
      %v1389 = vadd.f32 %v1281, %v1388
      %v1390 = vpop.f32.mrb[0].mxu0
      %1391 = vmatprep.mubr.bf16.mxu0 0
      %1392 = vmatmul.mubr.bf16.gmra.mrb[0].mxu0 %v1217
      %v1393 = vpop.f32.mrb[0].mxu0
      %v1394 = vadd.f32 %v1286, %v1393
      %v1395 = vpop.f32.mrb[0].mxu0
      %v1396 = vpop.f32.mrb[0].mxu0
      %v1397 = vadd.f32 %v1289, %v1396
      %v1398 = vpop.f32.mrb[0].mxu0
      %1399 = vmatprep.mubr.bf16.mxu0 0
      %1400 = vmatmul.mubr.bf16.gmra.mrb[0].mxu0 %v1220
      %v1401 = vpop.f32.mrb[0].mxu0
      %v1402 = vadd.f32 %v1294, %v1401
      %v1403 = vpop.f32.mrb[0].mxu0
      %v1404 = vpop.f32.mrb[0].mxu0
      %v1405 = vadd.f32 %v1297, %v1404
      %v1406 = vpop.f32.mrb[0].mxu0
      %1407 = vmatprep.mubr.bf16.mxu0 0
      %1408 = vmatmul.mubr.bf16.gmra.mrb[0].mxu0 %v1223
      %v1409 = vpop.f32.mrb[0].mxu0
      %v1410 = vadd.f32 %v1302, %v1409
      %v1411 = vpop.f32.mrb[0].mxu0
      %v1412 = vpop.f32.mrb[0].mxu0
      %v1413 = vadd.f32 %v1305, %v1412
      %v1414 = vpop.f32.mrb[0].mxu0
      %1415 = vmatprep.mubr.bf16.mxu0 0
      %1416 = vmatmul.mubr.bf16.gmra.mrb[0].mxu0 %v1226
      %v1417 = vpop.f32.mrb[0].mxu0
      %v1418 = vadd.f32 %v1310, %v1417
      %v1419 = vpop.f32.mrb[0].mxu0
      %v1420 = vpop.f32.mrb[0].mxu0
      %v1421 = vadd.f32 %v1313, %v1420
      %v1422 = vpop.f32.mrb[0].mxu0
      %1423 = vmatprep.mubr.bf16.mxu0 0
      %1424 = vmatmul.mubr.bf16.gmra.mrb[0].mxu0 %v1229
      %v1425 = vpop.f32.mrb[0].mxu0
      %v1426 = vadd.f32 %v1318, %v1425
      %v1427 = vpop.f32.mrb[0].mxu0
      %v1428 = vpop.f32.mrb[0].mxu0
      %v1429 = vadd.f32 %v1321, %v1428
      %v1430 = vpop.f32.mrb[0].mxu0
      %1431 = vmatprep.mubr.bf16.mxu0 0
      %1432 = vmatmul.mubr.bf16.gmra.mrb[0].mxu0 %v1232
      %v1433 = vpop.f32.mrb[0].mxu0
      %v1434 = vadd.f32 %v1326, %v1433
      %v1435 = vpop.f32.mrb[0].mxu0
      %v1436 = vpop.f32.mrb[0].mxu0
      %v1437 = vadd.f32 %v1329, %v1436
      %v1438 = vpop.f32.mrb[0].mxu0
      %1439 = vmatprep.mubr.bf16.mxu0 0
      %1440 = vmatmul.mubr.bf16.gmra.mrb[0].mxu0 %v1235
      %v1441 = vpop.f32.mrb[0].mxu0
      %v1442 = vadd.f32 %v1334, %v1441
      %v1443 = vpop.f32.mrb[0].mxu0
      %v1444 = vpop.f32.mrb[0].mxu0
      %v1445 = vadd.f32 %v1337, %v1444
      %v1446 = vpop.f32.mrb[0].mxu0
      %1447 = vdwg.mxu0
      %v1448 = vld [vmem:[#allocation2 + $0x50] sm:$0xff]
      %v1449 = vld [vmem:[#allocation2 + $0x58] sm:$0xff]
      %v1450 = vld [vmem:[#allocation2 + $0x60] sm:$0xff]
      %v1451 = vld [vmem:[#allocation2 + $0x68] sm:$0xff]
      %v1452 = vld [vmem:[#allocation2 + $0x70] sm:$0xff]
      %v1453 = vld [vmem:[#allocation2 + $0x78] sm:$0xff]
      %v1454 = vld [vmem:[#allocation2 + $0x80] sm:$0xff]
      %v1455 = vld [vmem:[#allocation2 + $0x88] sm:$0xff]
      %v1456 = vld [vmem:[%s942] sm:$0xf]
      %v1457 = vld [vmem:[%s942 + $0x4] sm:$0x3]
      %v1460 = vunpack.c.l.b16 %v1456
      %v1461 = vunpack.c.l.b16 %v1457
      %v1462 = vpack.c.b16 %v1461, %v1460
      %v1464 = vsel %vm420, %v1448, 0
      %v1467 = vsel %vm420, %v1449, 0
      %v1470 = vsel %vm420, %v1450, 0
      %v1473 = vsel %vm420, %v1451, 0
      %v1476 = vsel %vm420, %v1452, 0
      %v1479 = vsel %vm420, %v1453, 0
      %v1482 = vsel %vm420, %v1454, 0
      %v1485 = vsel %vm420, %v1455, 0
      %v1488 = vsel %vm725, %v1462, 0
      %1490 = vmatprep.subr.bf16.mxu0 0
      %1491 = vmatpush1.bf16.msra.mxu0 %v1488
      %1492 = vmatprep.subr.bf16.mxu0 0
      %1493 = vmatpush1.bf16.msra.mxu0 0
      %1494 = vmatprep.subr.bf16.mxu0 0
      %1495 = vmatpush1.bf16.msra.mxu0 0
      %1496 = vmatprep.subr.bf16.mxu0 0
      %1497 = vmatpush1.bf16.msra.mxu0 0
      %1498 = vmatprep.subr.bf16.mxu0 0
      %1499 = vmatpush1.bf16.msra.mxu0 0
      %1500 = vmatprep.subr.bf16.mxu0 0
      %1501 = vmatpush1.bf16.msra.mxu0 0
      %1502 = vmatprep.subr.bf16.mxu0 0
      %1503 = vmatpush1.bf16.msra.mxu0 0
      %1504 = vmatprep.subr.bf16.mxu0 0
      %1505 = vmatpush1.bf16.msra.mxu0 0
      %1506 = vmatprep.subr.bf16.mxu0 0
      %1507 = vmatpush1.bf16.msra.mxu0 0
      %1508 = vmatprep.subr.bf16.mxu0 0
      %1509 = vmatpush1.bf16.msra.mxu0 0
      %1510 = vmatprep.subr.bf16.mxu0 0
      %1511 = vmatpush1.bf16.msra.mxu0 0
      %1512 = vmatprep.subr.bf16.mxu0 0
      %1513 = vmatpush1.bf16.msra.mxu0 0
      %1514 = vmatprep.subr.bf16.mxu0 0
      %1515 = vmatpush1.bf16.msra.mxu0 0
      %1516 = vmatprep.subr.bf16.mxu0 0
      %1517 = vmatpush1.bf16.msra.mxu0 0
      %1518 = vmatprep.subr.bf16.mxu0 0
      %1519 = vmatpush1.bf16.msra.mxu0 0
      %1520 = vmatprep.subr.bf16.mxu0 0
      %1521 = vmatpush1.bf16.msra.mxu0 0
      %1522 = vmatprep.mubr.bf16.mxu0 0
      %1523 = vmatmul.mubr.bf16.gmra.mrb[0].mxu0 %v1464
      %v1524 = vpop.f32.mrb[0].mxu0
      %v1525 = vadd.f32 0.0, %v1524
      %v1526 = vpop.f32.mrb[0].mxu0
      %v1527 = vpop.f32.mrb[0].mxu0
      %v1528 = vadd.f32 0.0, %v1527
      %v1529 = vpop.f32.mrb[0].mxu0
      %1530 = vmatprep.mubr.bf16.mxu0 0
      %1531 = vmatmul.mubr.bf16.gmra.mrb[0].mxu0 %v1467
      %v1532 = vpop.f32.mrb[0].mxu0
      %v1533 = vadd.f32 0.0, %v1532
      %v1534 = vpop.f32.mrb[0].mxu0
      %v1535 = vpop.f32.mrb[0].mxu0
      %v1536 = vadd.f32 0.0, %v1535
      %v1537 = vpop.f32.mrb[0].mxu0
      %1538 = vmatprep.mubr.bf16.mxu0 0
      %1539 = vmatmul.mubr.bf16.gmra.mrb[0].mxu0 %v1470
      %v1540 = vpop.f32.mrb[0].mxu0
      %v1541 = vadd.f32 0.0, %v1540
      %v1542 = vpop.f32.mrb[0].mxu0
      %v1543 = vpop.f32.mrb[0].mxu0
      %v1544 = vadd.f32 0.0, %v1543
      %v1545 = vpop.f32.mrb[0].mxu0
      %1546 = vmatprep.mubr.bf16.mxu0 0
      %1547 = vmatmul.mubr.bf16.gmra.mrb[0].mxu0 %v1473
      %v1548 = vpop.f32.mrb[0].mxu0
      %v1549 = vadd.f32 0.0, %v1548
      %v1550 = vpop.f32.mrb[0].mxu0
      %v1551 = vpop.f32.mrb[0].mxu0
      %v1552 = vadd.f32 0.0, %v1551
      %v1553 = vpop.f32.mrb[0].mxu0
      %1554 = vmatprep.mubr.bf16.mxu0 0
      %1555 = vmatmul.mubr.bf16.gmra.mrb[0].mxu0 %v1476
      %v1556 = vpop.f32.mrb[0].mxu0
      %v1557 = vadd.f32 0.0, %v1556
      %v1558 = vpop.f32.mrb[0].mxu0
      %v1559 = vpop.f32.mrb[0].mxu0
      %v1560 = vadd.f32 0.0, %v1559
      %v1561 = vpop.f32.mrb[0].mxu0
      %1562 = vmatprep.mubr.bf16.mxu0 0
      %1563 = vmatmul.mubr.bf16.gmra.mrb[0].mxu0 %v1479
      %v1564 = vpop.f32.mrb[0].mxu0
      %v1565 = vadd.f32 0.0, %v1564
      %v1566 = vpop.f32.mrb[0].mxu0
      %v1567 = vpop.f32.mrb[0].mxu0
      %v1568 = vadd.f32 0.0, %v1567
      %v1569 = vpop.f32.mrb[0].mxu0
      %1570 = vmatprep.mubr.bf16.mxu0 0
      %1571 = vmatmul.mubr.bf16.gmra.mrb[0].mxu0 %v1482
      %v1572 = vpop.f32.mrb[0].mxu0
      %v1573 = vadd.f32 0.0, %v1572
      %v1574 = vpop.f32.mrb[0].mxu0
      %v1575 = vpop.f32.mrb[0].mxu0
      %v1576 = vadd.f32 0.0, %v1575
      %v1577 = vpop.f32.mrb[0].mxu0
      %1578 = vmatprep.mubr.bf16.mxu0 0
      %1579 = vmatmul.mubr.bf16.gmra.mrb[0].mxu0 %v1485
      %v1580 = vpop.f32.mrb[0].mxu0
      %v1581 = vadd.f32 0.0, %v1580
      %v1582 = vpop.f32.mrb[0].mxu0
      %v1583 = vpop.f32.mrb[0].mxu0
      %v1584 = vadd.f32 0.0, %v1583
      %v1585 = vpop.f32.mrb[0].mxu0
      %1586 = vdwg.mxu0
      %v1587 = vadd.f32 %v1386, %v1525
      %v1588 = vadd.f32 %v1389, %v1528
      %v1589 = vadd.f32 %v1394, %v1533
      %v1590 = vadd.f32 %v1397, %v1536
      %v1591 = vadd.f32 %v1402, %v1541
      %v1592 = vadd.f32 %v1405, %v1544
      %v1593 = vadd.f32 %v1410, %v1549
      %v1594 = vadd.f32 %v1413, %v1552
      %v1595 = vadd.f32 %v1418, %v1557
      %v1596 = vadd.f32 %v1421, %v1560
      %v1597 = vadd.f32 %v1426, %v1565
      %v1598 = vadd.f32 %v1429, %v1568
      %v1599 = vadd.f32 %v1434, %v1573
      %v1600 = vadd.f32 %v1437, %v1576
      %v1601 = vadd.f32 %v1442, %v1581
      %v1602 = vadd.f32 %v1445, %v1584
      %1603 = vst.msk [vmem:[#allocation3 + $0x80] sm:$0xff] %vm370, %v1587
      %1604 = vst.msk [vmem:[#allocation3 + $0x88] sm:$0xff] %vm370, %v1588
      %1605 = vst.msk [vmem:[#allocation3 + $0x90] sm:$0xff] %vm370, %v1589
      %1606 = vst.msk [vmem:[#allocation3 + $0x98] sm:$0xff] %vm370, %v1590
      %1607 = vst.msk [vmem:[#allocation3 + $0xa0] sm:$0xff] %vm370, %v1591
      %1608 = vst.msk [vmem:[#allocation3 + $0xa8] sm:$0xff] %vm370, %v1592
      %1609 = vst.msk [vmem:[#allocation3 + $0xb0] sm:$0xff] %vm370, %v1593
      %1610 = vst.msk [vmem:[#allocation3 + $0xb8] sm:$0xff] %vm370, %v1594
      %1611 = vst.msk [vmem:[#allocation3 + $0xc0] sm:$0xff] %vm370, %v1595
      %1612 = vst.msk [vmem:[#allocation3 + $0xc8] sm:$0xff] %vm370, %v1596
      %1613 = vst.msk [vmem:[#allocation3 + $0xd0] sm:$0xff] %vm370, %v1597
      %1614 = vst.msk [vmem:[#allocation3 + $0xd8] sm:$0xff] %vm370, %v1598
      %1615 = vst.msk [vmem:[#allocation3 + $0xe0] sm:$0xff] %vm370, %v1599
      %1616 = vst.msk [vmem:[#allocation3 + $0xe8] sm:$0xff] %vm370, %v1600
      %1617 = vst.msk [vmem:[#allocation3 + $0xf0] sm:$0xff] %vm370, %v1601
      %1618 = vst.msk [vmem:[#allocation3 + $0xf8] sm:$0xff] %vm370, %v1602
      %v1619 = vsel %vm370, %v1587, 0.0
      %v1620 = vsel %vm370, %v1588, 0.0
      %v1621 = vadd.f32 %v1619, %v1620
      %v1622 = vsel %vm370, %v1589, 0.0
      %v1623 = vadd.f32 %v1621, %v1622
      %v1624 = vsel %vm370, %v1590, 0.0
      %v1625 = vadd.f32 %v1623, %v1624
      %v1626 = vsel %vm370, %v1591, 0.0
      %v1627 = vadd.f32 %v1625, %v1626
      %v1628 = vsel %vm370, %v1592, 0.0
      %v1629 = vadd.f32 %v1627, %v1628
      %v1630 = vsel %vm370, %v1593, 0.0
      %v1631 = vadd.f32 %v1629, %v1630
      %v1632 = vsel %vm370, %v1594, 0.0
      %v1633 = vadd.f32 %v1631, %v1632
      %v1634 = vsel %vm370, %v1595, 0.0
      %v1635 = vadd.f32 %v1633, %v1634
      %v1636 = vsel %vm370, %v1596, 0.0
      %v1637 = vadd.f32 %v1635, %v1636
      %v1638 = vsel %vm370, %v1597, 0.0
      %v1639 = vadd.f32 %v1637, %v1638
      %v1640 = vsel %vm370, %v1598, 0.0
      %v1641 = vadd.f32 %v1639, %v1640
      %v1642 = vsel %vm370, %v1599, 0.0
      %v1643 = vadd.f32 %v1641, %v1642
      %v1644 = vsel %vm370, %v1600, 0.0
      %v1645 = vadd.f32 %v1643, %v1644
      %v1646 = vsel %vm370, %v1601, 0.0
      %v1647 = vadd.f32 %v1645, %v1646
      %v1648 = vsel %vm370, %v1602, 0.0
      %v1649 = vadd.f32 %v1647, %v1648
      %v1650 = vrot.slane %v1649, 4
      %v1651 = vadd.f32 %v1649, %v1650
      %v1652 = vrot.slane %v1651, 2
      %v1653 = vadd.f32 %v1651, %v1652
      %v1654 = vrot.slane %v1653, 1
      %v1655 = vadd.f32 %v1653, %v1654
      %v1656 = vadd.f32 %v1143, %v1655
      %v1657 = vmul.f32 %v1587, %v1587
      %v1658 = vmul.f32 %v1588, %v1588
      %v1659 = vmul.f32 %v1589, %v1589
      %v1660 = vmul.f32 %v1590, %v1590
      %v1661 = vmul.f32 %v1591, %v1591
      %v1662 = vmul.f32 %v1592, %v1592
      %v1663 = vmul.f32 %v1593, %v1593
      %v1664 = vmul.f32 %v1594, %v1594
      %v1665 = vmul.f32 %v1595, %v1595
      %v1666 = vmul.f32 %v1596, %v1596
      %v1667 = vmul.f32 %v1597, %v1597
      %v1668 = vmul.f32 %v1598, %v1598
      %v1669 = vmul.f32 %v1599, %v1599
      %v1670 = vmul.f32 %v1600, %v1600
      %v1671 = vmul.f32 %v1601, %v1601
      %v1672 = vmul.f32 %v1602, %v1602
      %v1673 = vsel %vm370, %v1657, 0.0
      %v1674 = vsel %vm370, %v1658, 0.0
      %v1675 = vadd.f32 %v1673, %v1674
      %v1676 = vsel %vm370, %v1659, 0.0
      %v1677 = vadd.f32 %v1675, %v1676
      %v1678 = vsel %vm370, %v1660, 0.0
      %v1679 = vadd.f32 %v1677, %v1678
      %v1680 = vsel %vm370, %v1661, 0.0
      %v1681 = vadd.f32 %v1679, %v1680
      %v1682 = vsel %vm370, %v1662, 0.0
      %v1683 = vadd.f32 %v1681, %v1682
      %v1684 = vsel %vm370, %v1663, 0.0
      %v1685 = vadd.f32 %v1683, %v1684
      %v1686 = vsel %vm370, %v1664, 0.0
      %v1687 = vadd.f32 %v1685, %v1686
      %v1688 = vsel %vm370, %v1665, 0.0
      %v1689 = vadd.f32 %v1687, %v1688
      %v1690 = vsel %vm370, %v1666, 0.0
      %v1691 = vadd.f32 %v1689, %v1690
      %v1692 = vsel %vm370, %v1667, 0.0
      %v1693 = vadd.f32 %v1691, %v1692
      %v1694 = vsel %vm370, %v1668, 0.0
      %v1695 = vadd.f32 %v1693, %v1694
      %v1696 = vsel %vm370, %v1669, 0.0
      %v1697 = vadd.f32 %v1695, %v1696
      %v1698 = vsel %vm370, %v1670, 0.0
      %v1699 = vadd.f32 %v1697, %v1698
      %v1700 = vsel %vm370, %v1671, 0.0
      %v1701 = vadd.f32 %v1699, %v1700
      %v1702 = vsel %vm370, %v1672, 0.0
      %v1703 = vadd.f32 %v1701, %v1702
      %v1704 = vrot.slane %v1703, 4
      %v1705 = vadd.f32 %v1703, %v1704
      %v1706 = vrot.slane %v1705, 2
      %v1707 = vadd.f32 %v1705, %v1706
      %v1708 = vrot.slane %v1707, 1
      %v1709 = vadd.f32 %v1707, %v1708
      %v1710 = vadd.f32 %v1197, %v1709
      %v1711 = vmul.f32 %v1656, 0.00390625
      %v1712 = vmul.f32 %v1710, 0.00390625
      %v1713 = vmul.f32 %v1711, %v1711
      %v1714 = vsub.f32 %v1712, %v1713
      %v1715 = vmax.f32 %v1714, 0.0
      %v1716 = vadd.f32 %v1715, 1e-05
      %v1717 = vrsqrt.pop %v1716
      %v1718 = vld [vmem:[#allocation3] sm:$0xff]
      %v1719 = vld [vmem:[#allocation3 + $0x8] sm:$0xff]
      %v1720 = vld [vmem:[#allocation3 + $0x10] sm:$0xff]
      %v1721 = vld [vmem:[#allocation3 + $0x18] sm:$0xff]
      %v1722 = vld [vmem:[#allocation3 + $0x20] sm:$0xff]
      %v1723 = vld [vmem:[#allocation3 + $0x28] sm:$0xff]
      %v1724 = vld [vmem:[#allocation3 + $0x30] sm:$0xff]
      %v1725 = vld [vmem:[#allocation3 + $0x38] sm:$0xff]
      %v1726 = vld [vmem:[#allocation3 + $0x40] sm:$0xff]
      %v1727 = vld [vmem:[#allocation3 + $0x48] sm:$0xff]
      %v1728 = vld [vmem:[#allocation3 + $0x50] sm:$0xff]
      %v1729 = vld [vmem:[#allocation3 + $0x58] sm:$0xff]
      %v1730 = vld [vmem:[#allocation3 + $0x60] sm:$0xff]
      %v1731 = vld [vmem:[#allocation3 + $0x68] sm:$0xff]
      %v1732 = vld [vmem:[#allocation3 + $0x70] sm:$0xff]
      %v1733 = vld [vmem:[#allocation3 + $0x78] sm:$0xff]
      %v1734 = vsub.f32 %v1718, %v1711
      %v1735 = vsub.f32 %v1719, %v1711
      %v1736 = vsub.f32 %v1720, %v1711
      %v1737 = vsub.f32 %v1721, %v1711
      %v1738 = vsub.f32 %v1722, %v1711
      %v1739 = vsub.f32 %v1723, %v1711
      %v1740 = vsub.f32 %v1724, %v1711
      %v1741 = vsub.f32 %v1725, %v1711
      %v1742 = vsub.f32 %v1726, %v1711
      %v1743 = vsub.f32 %v1727, %v1711
      %v1744 = vsub.f32 %v1728, %v1711
      %v1745 = vsub.f32 %v1729, %v1711
      %v1746 = vsub.f32 %v1730, %v1711
      %v1747 = vsub.f32 %v1731, %v1711
      %v1748 = vsub.f32 %v1732, %v1711
      %v1749 = vsub.f32 %v1733, %v1711
      %v1750 = vmul.f32 %v1734, %v1717
      %v1751 = vmul.f32 %v1735, %v1717
      %v1752 = vmul.f32 %v1736, %v1717
      %v1753 = vmul.f32 %v1737, %v1717
      %v1754 = vmul.f32 %v1738, %v1717
      %v1755 = vmul.f32 %v1739, %v1717
      %v1756 = vmul.f32 %v1740, %v1717
      %v1757 = vmul.f32 %v1741, %v1717
      %v1758 = vmul.f32 %v1742, %v1717
      %v1759 = vmul.f32 %v1743, %v1717
      %v1760 = vmul.f32 %v1744, %v1717
      %v1761 = vmul.f32 %v1745, %v1717
      %v1762 = vmul.f32 %v1746, %v1717
      %v1763 = vmul.f32 %v1747, %v1717
      %v1764 = vmul.f32 %v1748, %v1717
      %v1765 = vmul.f32 %v1749, %v1717
      %v1766 = vmax.f32 %v1750, 0.0
      %v1767 = vmax.f32 %v1751, 0.0
      %v1768 = vmax.f32 %v1752, 0.0
      %v1769 = vmax.f32 %v1753, 0.0
      %v1770 = vmax.f32 %v1754, 0.0
      %v1771 = vmax.f32 %v1755, 0.0
      %v1772 = vmax.f32 %v1756, 0.0
      %v1773 = vmax.f32 %v1757, 0.0
      %v1774 = vmax.f32 %v1758, 0.0
      %v1775 = vmax.f32 %v1759, 0.0
      %v1776 = vmax.f32 %v1760, 0.0
      %v1777 = vmax.f32 %v1761, 0.0
      %v1778 = vmax.f32 %v1762, 0.0
      %v1779 = vmax.f32 %v1763, 0.0
      %v1780 = vmax.f32 %v1764, 0.0
      %v1781 = vmax.f32 %v1765, 0.0
      %v1782 = vpack.c.bf16 %v1767, %v1766
      %v1783 = vpack.c.bf16 %v1769, %v1768
      %v1784 = vpack.c.bf16 %v1771, %v1770
      %v1785 = vpack.c.bf16 %v1773, %v1772
      %v1786 = vpack.c.bf16 %v1775, %v1774
      %v1787 = vpack.c.bf16 %v1777, %v1776
      %v1788 = vpack.c.bf16 %v1779, %v1778
      %v1789 = vpack.c.bf16 %v1781, %v1780
      %v1791 = vshrl.u32 %v1782, 16
      %v1794 = vshrl.u32 %v1783, 16
      %v1797 = vshrl.u32 %v1784, 16
      %v1800 = vshrl.u32 %v1785, 16
      %v1803 = vshrl.u32 %v1786, 16
      %v1806 = vshrl.u32 %v1787, 16
      %v1809 = vshrl.u32 %v1788, 16
      %v1812 = vshrl.u32 %v1789, 16
      %v1822 = vrot.slane %v1791, 7
      %v1823 = vshll.u32 %v1782, 16
      %v1825 = vor.u32 %v1822, %v1823
      %v1826 = vrot.slane %v1794, 7
      %v1827 = vshll.u32 %v1783, 16
      %v1829 = vor.u32 %v1826, %v1827
      %v1830 = vrot.slane %v1797, 7
      %v1831 = vshll.u32 %v1784, 16
      %v1833 = vor.u32 %v1830, %v1831
      %v1834 = vrot.slane %v1800, 7
      %v1835 = vshll.u32 %v1785, 16
      %v1837 = vor.u32 %v1834, %v1835
      %v1838 = vrot.slane %v1803, 7
      %v1839 = vshll.u32 %v1786, 16
      %v1841 = vor.u32 %v1838, %v1839
      %v1842 = vrot.slane %v1806, 7
      %v1843 = vshll.u32 %v1787, 16
      %v1845 = vor.u32 %v1842, %v1843
      %v1846 = vrot.slane %v1809, 7
      %v1847 = vshll.u32 %v1788, 16
      %v1849 = vor.u32 %v1846, %v1847
      %v1850 = vrot.slane %v1812, 7
      %v1851 = vshll.u32 %v1789, 16
      %v1853 = vor.u32 %v1850, %v1851
      %v1862 = vsel %vm270, %v1791, %v1825
      %v1863 = vsel %vm270, %v1794, %v1829
      %v1864 = vsel %vm270, %v1797, %v1833
      %v1865 = vsel %vm270, %v1800, %v1837
      %v1866 = vsel %vm270, %v1803, %v1841
      %v1867 = vsel %vm270, %v1806, %v1845
      %v1868 = vsel %vm270, %v1809, %v1849
      %v1869 = vsel %vm270, %v1812, %v1853
      %v1870 = vrot.slane %v1823, 1
      %v1871 = vor.u32 %v1791, %v1870
      %v1872 = vrot.slane %v1827, 1
      %v1873 = vor.u32 %v1794, %v1872
      %v1874 = vrot.slane %v1831, 1
      %v1875 = vor.u32 %v1797, %v1874
      %v1876 = vrot.slane %v1835, 1
      %v1877 = vor.u32 %v1800, %v1876
      %v1878 = vrot.slane %v1839, 1
      %v1879 = vor.u32 %v1803, %v1878
      %v1880 = vrot.slane %v1843, 1
      %v1881 = vor.u32 %v1806, %v1880
      %v1882 = vrot.slane %v1847, 1
      %v1883 = vor.u32 %v1809, %v1882
      %v1884 = vrot.slane %v1851, 1
      %v1885 = vor.u32 %v1812, %v1884
      %v1902 = vsel %vm313, %v1871, %v1823
      %v1903 = vsel %vm313, %v1873, %v1827
      %v1904 = vsel %vm313, %v1875, %v1831
      %v1905 = vsel %vm313, %v1877, %v1835
      %v1906 = vsel %vm313, %v1879, %v1839
      %v1907 = vsel %vm313, %v1881, %v1843
      %v1908 = vsel %vm313, %v1883, %v1847
      %v1909 = vsel %vm313, %v1885, %v1851
      %1918 = vrot.lane.b32.xlu0 %v1782, 4
      %v1919 = vpop.permute.xlu0 %1918
      %1920 = vrot.lane.b32.xlu0 %v1783, 4
      %v1921 = vpop.permute.xlu0 %1920
      %1922 = vrot.lane.b32.xlu0 %v1784, 4
      %v1923 = vpop.permute.xlu0 %1922
      %1924 = vrot.lane.b32.xlu0 %v1785, 4
      %v1925 = vpop.permute.xlu0 %1924
      %1926 = vrot.lane.b32.xlu0 %v1786, 4
      %v1927 = vpop.permute.xlu0 %1926
      %1928 = vrot.lane.b32.xlu0 %v1787, 4
      %v1929 = vpop.permute.xlu0 %1928
      %1930 = vrot.lane.b32.xlu0 %v1788, 4
      %v1931 = vpop.permute.xlu0 %1930
      %1932 = vrot.lane.b32.xlu0 %v1789, 4
      %v1933 = vpop.permute.xlu0 %1932
      %1942 = vrot.lane.b32.xlu0 %v1902, 8
      %v1943 = vpop.permute.xlu0 %1942
      %1944 = vrot.lane.b32.xlu0 %v1903, 8
      %v1945 = vpop.permute.xlu0 %1944
      %1946 = vrot.lane.b32.xlu0 %v1904, 8
      %v1947 = vpop.permute.xlu0 %1946
      %1948 = vrot.lane.b32.xlu0 %v1905, 8
      %v1949 = vpop.permute.xlu0 %1948
      %1950 = vrot.lane.b32.xlu0 %v1906, 8
      %v1951 = vpop.permute.xlu0 %1950
      %1952 = vrot.lane.b32.xlu0 %v1907, 8
      %v1953 = vpop.permute.xlu0 %1952
      %1954 = vrot.lane.b32.xlu0 %v1908, 8
      %v1955 = vpop.permute.xlu0 %1954
      %1956 = vrot.lane.b32.xlu0 %v1909, 8
      %v1957 = vpop.permute.xlu0 %1956
      %v1960 = vsel %vm370, %v1862, %v1919
      %v1963 = vsel %vm370, %v1863, %v1921
      %v1966 = vsel %vm370, %v1864, %v1923
      %v1969 = vsel %vm370, %v1865, %v1925
      %v1972 = vsel %vm370, %v1866, %v1927
      %v1975 = vsel %vm370, %v1867, %v1929
      %v1978 = vsel %vm370, %v1868, %v1931
      %v1981 = vsel %vm370, %v1869, %v1933
      %v1983 = vsel %vm395, %v1960, %v1943
      %v1986 = vsel %vm395, %v1963, %v1945
      %v1989 = vsel %vm395, %v1966, %v1947
      %v1992 = vsel %vm395, %v1969, %v1949
      %v1995 = vsel %vm395, %v1972, %v1951
      %v1998 = vsel %vm395, %v1975, %v1953
      %v2001 = vsel %vm395, %v1978, %v1955
      %v2004 = vsel %vm395, %v1981, %v1957
      %2006 = vst.msk [vmem:[#allocation2 + $0x8] sm:$0xff] %vm420, %v1983
      %2007 = vst.msk [vmem:[#allocation2 + $0x10] sm:$0xff] %vm420, %v1986
      %2008 = vst.msk [vmem:[#allocation2 + $0x18] sm:$0xff] %vm420, %v1989
      %2009 = vst.msk [vmem:[#allocation2 + $0x20] sm:$0xff] %vm420, %v1992
      %2010 = vst.msk [vmem:[#allocation2 + $0x28] sm:$0xff] %vm420, %v1995
      %2011 = vst.msk [vmem:[#allocation2 + $0x30] sm:$0xff] %vm420, %v1998
      %2012 = vst.msk [vmem:[#allocation2 + $0x38] sm:$0xff] %vm420, %v2001
      %2013 = vst.msk [vmem:[#allocation2 + $0x40] sm:$0xff] %vm420, %v2004
      %v2014 = vld [vmem:[#allocation3 + $0x80] sm:$0xff]
      %v2015 = vld [vmem:[#allocation3 + $0x88] sm:$0xff]
      %v2016 = vld [vmem:[#allocation3 + $0x90] sm:$0xff]
      %v2017 = vld [vmem:[#allocation3 + $0x98] sm:$0xff]
      %v2018 = vld [vmem:[#allocation3 + $0xa0] sm:$0xff]
      %v2019 = vld [vmem:[#allocation3 + $0xa8] sm:$0xff]
      %v2020 = vld [vmem:[#allocation3 + $0xb0] sm:$0xff]
      %v2021 = vld [vmem:[#allocation3 + $0xb8] sm:$0xff]
      %v2022 = vld [vmem:[#allocation3 + $0xc0] sm:$0xff]
      %v2023 = vld [vmem:[#allocation3 + $0xc8] sm:$0xff]
      %v2024 = vld [vmem:[#allocation3 + $0xd0] sm:$0xff]
      %v2025 = vld [vmem:[#allocation3 + $0xd8] sm:$0xff]
      %v2026 = vld [vmem:[#allocation3 + $0xe0] sm:$0xff]
      %v2027 = vld [vmem:[#allocation3 + $0xe8] sm:$0xff]
      %v2028 = vld [vmem:[#allocation3 + $0xf0] sm:$0xff]
      %v2029 = vld [vmem:[#allocation3 + $0xf8] sm:$0xff]
      %v2030 = vsub.f32 %v2014, %v1711
      %v2031 = vsub.f32 %v2015, %v1711
      %v2032 = vsub.f32 %v2016, %v1711
      %v2033 = vsub.f32 %v2017, %v1711
      %v2034 = vsub.f32 %v2018, %v1711
      %v2035 = vsub.f32 %v2019, %v1711
      %v2036 = vsub.f32 %v2020, %v1711
      %v2037 = vsub.f32 %v2021, %v1711
      %v2038 = vsub.f32 %v2022, %v1711
      %v2039 = vsub.f32 %v2023, %v1711
      %v2040 = vsub.f32 %v2024, %v1711
      %v2041 = vsub.f32 %v2025, %v1711
      %v2042 = vsub.f32 %v2026, %v1711
      %v2043 = vsub.f32 %v2027, %v1711
      %v2044 = vsub.f32 %v2028, %v1711
      %v2045 = vsub.f32 %v2029, %v1711
      %v2046 = vmul.f32 %v2030, %v1717
      %v2047 = vmul.f32 %v2031, %v1717
      %v2048 = vmul.f32 %v2032, %v1717
      %v2049 = vmul.f32 %v2033, %v1717
      %v2050 = vmul.f32 %v2034, %v1717
      %v2051 = vmul.f32 %v2035, %v1717
      %v2052 = vmul.f32 %v2036, %v1717
      %v2053 = vmul.f32 %v2037, %v1717
      %v2054 = vmul.f32 %v2038, %v1717
      %v2055 = vmul.f32 %v2039, %v1717
      %v2056 = vmul.f32 %v2040, %v1717
      %v2057 = vmul.f32 %v2041, %v1717
      %v2058 = vmul.f32 %v2042, %v1717
      %v2059 = vmul.f32 %v2043, %v1717
      %v2060 = vmul.f32 %v2044, %v1717
      %v2061 = vmul.f32 %v2045, %v1717
      %v2062 = vmax.f32 %v2046, 0.0
      %v2063 = vmax.f32 %v2047, 0.0
      %v2064 = vmax.f32 %v2048, 0.0
      %v2065 = vmax.f32 %v2049, 0.0
      %v2066 = vmax.f32 %v2050, 0.0
      %v2067 = vmax.f32 %v2051, 0.0
      %v2068 = vmax.f32 %v2052, 0.0
      %v2069 = vmax.f32 %v2053, 0.0
      %v2070 = vmax.f32 %v2054, 0.0
      %v2071 = vmax.f32 %v2055, 0.0
      %v2072 = vmax.f32 %v2056, 0.0
      %v2073 = vmax.f32 %v2057, 0.0
      %v2074 = vmax.f32 %v2058, 0.0
      %v2075 = vmax.f32 %v2059, 0.0
      %v2076 = vmax.f32 %v2060, 0.0
      %v2077 = vmax.f32 %v2061, 0.0
      %v2078 = vpack.c.bf16 %v2063, %v2062
      %v2079 = vpack.c.bf16 %v2065, %v2064
      %v2080 = vpack.c.bf16 %v2067, %v2066
      %v2081 = vpack.c.bf16 %v2069, %v2068
      %v2082 = vpack.c.bf16 %v2071, %v2070
      %v2083 = vpack.c.bf16 %v2073, %v2072
      %v2084 = vpack.c.bf16 %v2075, %v2074
      %v2085 = vpack.c.bf16 %v2077, %v2076
      %v2087 = vshrl.u32 %v2078, 16
      %v2090 = vshrl.u32 %v2079, 16
      %v2093 = vshrl.u32 %v2080, 16
      %v2096 = vshrl.u32 %v2081, 16
      %v2099 = vshrl.u32 %v2082, 16
      %v2102 = vshrl.u32 %v2083, 16
      %v2105 = vshrl.u32 %v2084, 16
      %v2108 = vshrl.u32 %v2085, 16
      %v2118 = vrot.slane %v2087, 7
      %v2119 = vshll.u32 %v2078, 16
      %v2121 = vor.u32 %v2118, %v2119
      %v2122 = vrot.slane %v2090, 7
      %v2123 = vshll.u32 %v2079, 16
      %v2125 = vor.u32 %v2122, %v2123
      %v2126 = vrot.slane %v2093, 7
      %v2127 = vshll.u32 %v2080, 16
      %v2129 = vor.u32 %v2126, %v2127
      %v2130 = vrot.slane %v2096, 7
      %v2131 = vshll.u32 %v2081, 16
      %v2133 = vor.u32 %v2130, %v2131
      %v2134 = vrot.slane %v2099, 7
      %v2135 = vshll.u32 %v2082, 16
      %v2137 = vor.u32 %v2134, %v2135
      %v2138 = vrot.slane %v2102, 7
      %v2139 = vshll.u32 %v2083, 16
      %v2141 = vor.u32 %v2138, %v2139
      %v2142 = vrot.slane %v2105, 7
      %v2143 = vshll.u32 %v2084, 16
      %v2145 = vor.u32 %v2142, %v2143
      %v2146 = vrot.slane %v2108, 7
      %v2147 = vshll.u32 %v2085, 16
      %v2149 = vor.u32 %v2146, %v2147
      %v2158 = vsel %vm270, %v2087, %v2121
      %v2159 = vsel %vm270, %v2090, %v2125
      %v2160 = vsel %vm270, %v2093, %v2129
      %v2161 = vsel %vm270, %v2096, %v2133
      %v2162 = vsel %vm270, %v2099, %v2137
      %v2163 = vsel %vm270, %v2102, %v2141
      %v2164 = vsel %vm270, %v2105, %v2145
      %v2165 = vsel %vm270, %v2108, %v2149
      %v2166 = vrot.slane %v2119, 1
      %v2167 = vor.u32 %v2087, %v2166
      %v2168 = vrot.slane %v2123, 1
      %v2169 = vor.u32 %v2090, %v2168
      %v2170 = vrot.slane %v2127, 1
      %v2171 = vor.u32 %v2093, %v2170
      %v2172 = vrot.slane %v2131, 1
      %v2173 = vor.u32 %v2096, %v2172
      %v2174 = vrot.slane %v2135, 1
      %v2175 = vor.u32 %v2099, %v2174
      %v2176 = vrot.slane %v2139, 1
      %v2177 = vor.u32 %v2102, %v2176
      %v2178 = vrot.slane %v2143, 1
      %v2179 = vor.u32 %v2105, %v2178
      %v2180 = vrot.slane %v2147, 1
      %v2181 = vor.u32 %v2108, %v2180
      %v2198 = vsel %vm313, %v2167, %v2119
      %v2199 = vsel %vm313, %v2169, %v2123
      %v2200 = vsel %vm313, %v2171, %v2127
      %v2201 = vsel %vm313, %v2173, %v2131
      %v2202 = vsel %vm313, %v2175, %v2135
      %v2203 = vsel %vm313, %v2177, %v2139
      %v2204 = vsel %vm313, %v2179, %v2143
      %v2205 = vsel %vm313, %v2181, %v2147
      %2214 = vrot.lane.b32.xlu0 %v2078, 4
      %v2215 = vpop.permute.xlu0 %2214
      %2216 = vrot.lane.b32.xlu0 %v2079, 4
      %v2217 = vpop.permute.xlu0 %2216
      %2218 = vrot.lane.b32.xlu0 %v2080, 4
      %v2219 = vpop.permute.xlu0 %2218
      %2220 = vrot.lane.b32.xlu0 %v2081, 4
      %v2221 = vpop.permute.xlu0 %2220
      %2222 = vrot.lane.b32.xlu0 %v2082, 4
      %v2223 = vpop.permute.xlu0 %2222
      %2224 = vrot.lane.b32.xlu0 %v2083, 4
      %v2225 = vpop.permute.xlu0 %2224
      %2226 = vrot.lane.b32.xlu0 %v2084, 4
      %v2227 = vpop.permute.xlu0 %2226
      %2228 = vrot.lane.b32.xlu0 %v2085, 4
      %v2229 = vpop.permute.xlu0 %2228
      %2238 = vrot.lane.b32.xlu0 %v2198, 8
      %v2239 = vpop.permute.xlu0 %2238
      %2240 = vrot.lane.b32.xlu0 %v2199, 8
      %v2241 = vpop.permute.xlu0 %2240
      %2242 = vrot.lane.b32.xlu0 %v2200, 8
      %v2243 = vpop.permute.xlu0 %2242
      %2244 = vrot.lane.b32.xlu0 %v2201, 8
      %v2245 = vpop.permute.xlu0 %2244
      %2246 = vrot.lane.b32.xlu0 %v2202, 8
      %v2247 = vpop.permute.xlu0 %2246
      %2248 = vrot.lane.b32.xlu0 %v2203, 8
      %v2249 = vpop.permute.xlu0 %2248
      %2250 = vrot.lane.b32.xlu0 %v2204, 8
      %v2251 = vpop.permute.xlu0 %2250
      %2252 = vrot.lane.b32.xlu0 %v2205, 8
      %v2253 = vpop.permute.xlu0 %2252
      %v2256 = vsel %vm370, %v2158, %v2215
      %v2259 = vsel %vm370, %v2159, %v2217
      %v2262 = vsel %vm370, %v2160, %v2219
      %v2265 = vsel %vm370, %v2161, %v2221
      %v2268 = vsel %vm370, %v2162, %v2223
      %v2271 = vsel %vm370, %v2163, %v2225
      %v2274 = vsel %vm370, %v2164, %v2227
      %v2277 = vsel %vm370, %v2165, %v2229
      %v2279 = vsel %vm395, %v2256, %v2239
      %v2282 = vsel %vm395, %v2259, %v2241
      %v2285 = vsel %vm395, %v2262, %v2243
      %v2288 = vsel %vm395, %v2265, %v2245
      %v2291 = vsel %vm395, %v2268, %v2247
      %v2294 = vsel %vm395, %v2271, %v2249
      %v2297 = vsel %vm395, %v2274, %v2251
      %v2300 = vsel %vm395, %v2277, %v2253
      %2302 = vst.msk [vmem:[#allocation2 + $0x48] sm:$0xff] %vm420, %v2279
      %2303 = vst.msk [vmem:[#allocation2 + $0x50] sm:$0xff] %vm420, %v2282
      %2304 = vst.msk [vmem:[#allocation2 + $0x58] sm:$0xff] %vm420, %v2285
      %2305 = vst.msk [vmem:[#allocation2 + $0x60] sm:$0xff] %vm420, %v2288
      %2306 = vst.msk [vmem:[#allocation2 + $0x68] sm:$0xff] %vm420, %v2291
      %2307 = vst.msk [vmem:[#allocation2 + $0x70] sm:$0xff] %vm420, %v2294
      %2308 = vst.msk [vmem:[#allocation2 + $0x78] sm:$0xff] %vm420, %v2297
      %2309 = vst.msk [vmem:[#allocation2 + $0x80] sm:$0xff] %vm420, %v2300
      %v2310 = vld [vmem:[#allocation2 + $0x10] sm:$0xff]
      %2311 = vst.msk [vmem:[#allocation2] sm:$0xff] %vm420, %v2310
      %v2312 = vld [vmem:[#allocation2 + $0x78] sm:$0xff]
      %2313 = vst.msk [vmem:[#allocation2 + $0x88] sm:$0xff] %vm420, %v2312
      %v2314 = vld [vmem:[#allocation2] sm:$0xff]
      %v2315 = vld [vmem:[#allocation2 + $0x8] sm:$0xff]
      %v2316 = vld [vmem:[#allocation2 + $0x10] sm:$0xff]
      %v2317 = vld [vmem:[#allocation2 + $0x18] sm:$0xff]
      %v2318 = vld [vmem:[#allocation2 + $0x20] sm:$0xff]
      %v2319 = vld [vmem:[#allocation2 + $0x28] sm:$0xff]
      %v2320 = vld [vmem:[#allocation2 + $0x30] sm:$0xff]
      %v2321 = vld [vmem:[#allocation2 + $0x38] sm:$0xff]
      %v2322 = vld [vmem:[%s2] sm:$0xf]
      %v2323 = vld [vmem:[%s2 + $0x4] sm:$0x3]
      %v2324 = vld [vmem:[#allocation2 + $0x40] sm:$0xff]
      %s2325 = scalar_lea.vmem %s2, 8
      %v2326 = vld [vmem:[%s2325] sm:$0xf]
      %v2327 = vld [vmem:[%s2325 + $0x4] sm:$0x3]
      %v2330 = vunpack.c.l.b16 %v2326
      %v2331 = vunpack.c.l.b16 %v2327
      %v2332 = vpack.c.b16 %v2331, %v2330
      %v2334 = vsel %vm420, %v2315, 0
      %v2337 = vsel %vm420, %v2316, 0
      %v2340 = vsel %vm420, %v2317, 0
      %v2343 = vsel %vm420, %v2318, 0
      %v2346 = vsel %vm420, %v2319, 0
      %v2349 = vsel %vm420, %v2320, 0
      %v2352 = vsel %vm420, %v2321, 0
      %v2355 = vsel %vm420, %v2324, 0
      %v2358 = vsel %vm725, %v2332, 0
      %2360 = vmatprep.subr.bf16.mxu0 0
      %2361 = vmatpush1.bf16.msra.mxu0 %v2358
      %2362 = vmatprep.subr.bf16.mxu0 0
      %2363 = vmatpush1.bf16.msra.mxu0 0
      %2364 = vmatprep.subr.bf16.mxu0 0
      %2365 = vmatpush1.bf16.msra.mxu0 0
      %2366 = vmatprep.subr.bf16.mxu0 0
      %2367 = vmatpush1.bf16.msra.mxu0 0
      %2368 = vmatprep.subr.bf16.mxu0 0
      %2369 = vmatpush1.bf16.msra.mxu0 0
      %2370 = vmatprep.subr.bf16.mxu0 0
      %2371 = vmatpush1.bf16.msra.mxu0 0
      %2372 = vmatprep.subr.bf16.mxu0 0
      %2373 = vmatpush1.bf16.msra.mxu0 0
      %2374 = vmatprep.subr.bf16.mxu0 0
      %2375 = vmatpush1.bf16.msra.mxu0 0
      %2376 = vmatprep.subr.bf16.mxu0 0
      %2377 = vmatpush1.bf16.msra.mxu0 0
      %2378 = vmatprep.subr.bf16.mxu0 0
      %2379 = vmatpush1.bf16.msra.mxu0 0
      %2380 = vmatprep.subr.bf16.mxu0 0
      %2381 = vmatpush1.bf16.msra.mxu0 0
      %2382 = vmatprep.subr.bf16.mxu0 0
      %2383 = vmatpush1.bf16.msra.mxu0 0
      %2384 = vmatprep.subr.bf16.mxu0 0
      %2385 = vmatpush1.bf16.msra.mxu0 0
      %2386 = vmatprep.subr.bf16.mxu0 0
      %2387 = vmatpush1.bf16.msra.mxu0 0
      %2388 = vmatprep.subr.bf16.mxu0 0
      %2389 = vmatpush1.bf16.msra.mxu0 0
      %2390 = vmatprep.subr.bf16.mxu0 0
      %2391 = vmatpush1.bf16.msra.mxu0 0
      %2392 = vmatprep.mubr.bf16.mxu0 0
      %2393 = vmatmul.mubr.bf16.gmra.mrb[0].mxu0 %v2334
      %v2394 = vpop.f32.mrb[0].mxu0
      %v2395 = vadd.f32 0.0, %v2394
      %v2396 = vpop.f32.mrb[0].mxu0
      %v2397 = vpop.f32.mrb[0].mxu0
      %v2398 = vadd.f32 0.0, %v2397
      %v2399 = vpop.f32.mrb[0].mxu0
      %2400 = vmatprep.mubr.bf16.mxu0 0
      %2401 = vmatmul.mubr.bf16.gmra.mrb[0].mxu0 %v2337
      %v2402 = vpop.f32.mrb[0].mxu0
      %v2403 = vadd.f32 0.0, %v2402
      %v2404 = vpop.f32.mrb[0].mxu0
      %v2405 = vpop.f32.mrb[0].mxu0
      %v2406 = vadd.f32 0.0, %v2405
      %v2407 = vpop.f32.mrb[0].mxu0
      %2408 = vmatprep.mubr.bf16.mxu0 0
      %2409 = vmatmul.mubr.bf16.gmra.mrb[0].mxu0 %v2340
      %v2410 = vpop.f32.mrb[0].mxu0
      %v2411 = vadd.f32 0.0, %v2410
      %v2412 = vpop.f32.mrb[0].mxu0
      %v2413 = vpop.f32.mrb[0].mxu0
      %v2414 = vadd.f32 0.0, %v2413
      %v2415 = vpop.f32.mrb[0].mxu0
      %2416 = vmatprep.mubr.bf16.mxu0 0
      %2417 = vmatmul.mubr.bf16.gmra.mrb[0].mxu0 %v2343
      %v2418 = vpop.f32.mrb[0].mxu0
      %v2419 = vadd.f32 0.0, %v2418
      %v2420 = vpop.f32.mrb[0].mxu0
      %v2421 = vpop.f32.mrb[0].mxu0
      %v2422 = vadd.f32 0.0, %v2421
      %v2423 = vpop.f32.mrb[0].mxu0
      %2424 = vmatprep.mubr.bf16.mxu0 0
      %2425 = vmatmul.mubr.bf16.gmra.mrb[0].mxu0 %v2346
      %v2426 = vpop.f32.mrb[0].mxu0
      %v2427 = vadd.f32 0.0, %v2426
      %v2428 = vpop.f32.mrb[0].mxu0
      %v2429 = vpop.f32.mrb[0].mxu0
      %v2430 = vadd.f32 0.0, %v2429
      %v2431 = vpop.f32.mrb[0].mxu0
      %2432 = vmatprep.mubr.bf16.mxu0 0
      %2433 = vmatmul.mubr.bf16.gmra.mrb[0].mxu0 %v2349
      %v2434 = vpop.f32.mrb[0].mxu0
      %v2435 = vadd.f32 0.0, %v2434
      %v2436 = vpop.f32.mrb[0].mxu0
      %v2437 = vpop.f32.mrb[0].mxu0
      %v2438 = vadd.f32 0.0, %v2437
      %v2439 = vpop.f32.mrb[0].mxu0
      %2440 = vmatprep.mubr.bf16.mxu0 0
      %2441 = vmatmul.mubr.bf16.gmra.mrb[0].mxu0 %v2352
      %v2442 = vpop.f32.mrb[0].mxu0
      %v2443 = vadd.f32 0.0, %v2442
      %v2444 = vpop.f32.mrb[0].mxu0
      %v2445 = vpop.f32.mrb[0].mxu0
      %v2446 = vadd.f32 0.0, %v2445
      %v2447 = vpop.f32.mrb[0].mxu0
      %2448 = vmatprep.mubr.bf16.mxu0 0
      %2449 = vmatmul.mubr.bf16.gmra.mrb[0].mxu0 %v2355
      %v2450 = vpop.f32.mrb[0].mxu0
      %v2451 = vadd.f32 0.0, %v2450
      %v2452 = vpop.f32.mrb[0].mxu0
      %v2453 = vpop.f32.mrb[0].mxu0
      %v2454 = vadd.f32 0.0, %v2453
      %v2455 = vpop.f32.mrb[0].mxu0
      %2456 = vdwg.mxu0
      %v2459 = vunpack.c.l.b16 %v2322
      %v2460 = vunpack.c.l.b16 %v2323
      %v2461 = vpack.c.b16 %v2460, %v2459
      %v2463 = vsel %vm420, %v2314, 0
      %v2466 = vsel %vm725, %v2461, 0
      %2468 = vmatprep.subr.bf16.mxu0 0
      %2469 = vmatpush1.bf16.msra.mxu0 %v2466
      %2470 = vmatprep.subr.bf16.mxu0 0
      %2471 = vmatpush1.bf16.msra.mxu0 0
      %2472 = vmatprep.subr.bf16.mxu0 0
      %2473 = vmatpush1.bf16.msra.mxu0 0
      %2474 = vmatprep.subr.bf16.mxu0 0
      %2475 = vmatpush1.bf16.msra.mxu0 0
      %2476 = vmatprep.subr.bf16.mxu0 0
      %2477 = vmatpush1.bf16.msra.mxu0 0
      %2478 = vmatprep.subr.bf16.mxu0 0
      %2479 = vmatpush1.bf16.msra.mxu0 0
      %2480 = vmatprep.subr.bf16.mxu0 0
      %2481 = vmatpush1.bf16.msra.mxu0 0
      %2482 = vmatprep.subr.bf16.mxu0 0
      %2483 = vmatpush1.bf16.msra.mxu0 0
      %2484 = vmatprep.subr.bf16.mxu0 0
      %2485 = vmatpush1.bf16.msra.mxu0 0
      %2486 = vmatprep.subr.bf16.mxu0 0
      %2487 = vmatpush1.bf16.msra.mxu0 0
      %2488 = vmatprep.subr.bf16.mxu0 0
      %2489 = vmatpush1.bf16.msra.mxu0 0
      %2490 = vmatprep.subr.bf16.mxu0 0
      %2491 = vmatpush1.bf16.msra.mxu0 0
      %2492 = vmatprep.subr.bf16.mxu0 0
      %2493 = vmatpush1.bf16.msra.mxu0 0
      %2494 = vmatprep.subr.bf16.mxu0 0
      %2495 = vmatpush1.bf16.msra.mxu0 0
      %2496 = vmatprep.subr.bf16.mxu0 0
      %2497 = vmatpush1.bf16.msra.mxu0 0
      %2498 = vmatprep.subr.bf16.mxu0 0
      %2499 = vmatpush1.bf16.msra.mxu0 0
      %2500 = vmatprep.mubr.bf16.mxu0 0
      %2501 = vmatmul.mubr.bf16.gmra.mrb[0].mxu0 %v2463
      %v2502 = vpop.f32.mrb[0].mxu0
      %v2503 = vadd.f32 %v2395, %v2502
      %v2504 = vpop.f32.mrb[0].mxu0
      %v2505 = vpop.f32.mrb[0].mxu0
      %v2506 = vadd.f32 %v2398, %v2505
      %v2507 = vpop.f32.mrb[0].mxu0
      %2508 = vmatprep.mubr.bf16.mxu0 0
      %2509 = vmatmul.mubr.bf16.gmra.mrb[0].mxu0 %v2334
      %v2510 = vpop.f32.mrb[0].mxu0
      %v2511 = vadd.f32 %v2403, %v2510
      %v2512 = vpop.f32.mrb[0].mxu0
      %v2513 = vpop.f32.mrb[0].mxu0
      %v2514 = vadd.f32 %v2406, %v2513
      %v2515 = vpop.f32.mrb[0].mxu0
      %2516 = vmatprep.mubr.bf16.mxu0 0
      %2517 = vmatmul.mubr.bf16.gmra.mrb[0].mxu0 %v2337
      %v2518 = vpop.f32.mrb[0].mxu0
      %v2519 = vadd.f32 %v2411, %v2518
      %v2520 = vpop.f32.mrb[0].mxu0
      %v2521 = vpop.f32.mrb[0].mxu0
      %v2522 = vadd.f32 %v2414, %v2521
      %v2523 = vpop.f32.mrb[0].mxu0
      %2524 = vmatprep.mubr.bf16.mxu0 0
      %2525 = vmatmul.mubr.bf16.gmra.mrb[0].mxu0 %v2340
      %v2526 = vpop.f32.mrb[0].mxu0
      %v2527 = vadd.f32 %v2419, %v2526
      %v2528 = vpop.f32.mrb[0].mxu0
      %v2529 = vpop.f32.mrb[0].mxu0
      %v2530 = vadd.f32 %v2422, %v2529
      %v2531 = vpop.f32.mrb[0].mxu0
      %2532 = vmatprep.mubr.bf16.mxu0 0
      %2533 = vmatmul.mubr.bf16.gmra.mrb[0].mxu0 %v2343
      %v2534 = vpop.f32.mrb[0].mxu0
      %v2535 = vadd.f32 %v2427, %v2534
      %v2536 = vpop.f32.mrb[0].mxu0
      %v2537 = vpop.f32.mrb[0].mxu0
      %v2538 = vadd.f32 %v2430, %v2537
      %v2539 = vpop.f32.mrb[0].mxu0
      %2540 = vmatprep.mubr.bf16.mxu0 0
      %2541 = vmatmul.mubr.bf16.gmra.mrb[0].mxu0 %v2346
      %v2542 = vpop.f32.mrb[0].mxu0
      %v2543 = vadd.f32 %v2435, %v2542
      %v2544 = vpop.f32.mrb[0].mxu0
      %v2545 = vpop.f32.mrb[0].mxu0
      %v2546 = vadd.f32 %v2438, %v2545
      %v2547 = vpop.f32.mrb[0].mxu0
      %2548 = vmatprep.mubr.bf16.mxu0 0
      %2549 = vmatmul.mubr.bf16.gmra.mrb[0].mxu0 %v2349
      %v2550 = vpop.f32.mrb[0].mxu0
      %v2551 = vadd.f32 %v2443, %v2550
      %v2552 = vpop.f32.mrb[0].mxu0
      %v2553 = vpop.f32.mrb[0].mxu0
      %v2554 = vadd.f32 %v2446, %v2553
      %v2555 = vpop.f32.mrb[0].mxu0
      %2556 = vmatprep.mubr.bf16.mxu0 0
      %2557 = vmatmul.mubr.bf16.gmra.mrb[0].mxu0 %v2352
      %v2558 = vpop.f32.mrb[0].mxu0
      %v2559 = vadd.f32 %v2451, %v2558
      %v2560 = vpop.f32.mrb[0].mxu0
      %v2561 = vpop.f32.mrb[0].mxu0
      %v2562 = vadd.f32 %v2454, %v2561
      %v2563 = vpop.f32.mrb[0].mxu0
      %2564 = vdwg.mxu0
      %v2565 = vld [vmem:[#allocation2 + $0x10] sm:$0xff]
      %v2566 = vld [vmem:[#allocation2 + $0x18] sm:$0xff]
      %v2567 = vld [vmem:[#allocation2 + $0x20] sm:$0xff]
      %v2568 = vld [vmem:[#allocation2 + $0x28] sm:$0xff]
      %v2569 = vld [vmem:[#allocation2 + $0x30] sm:$0xff]
      %v2570 = vld [vmem:[#allocation2 + $0x38] sm:$0xff]
      %v2571 = vld [vmem:[#allocation2 + $0x40] sm:$0xff]
      %v2572 = vld [vmem:[#allocation2 + $0x48] sm:$0xff]
      %s2573 = scalar_lea.vmem %s2, 16
      %v2574 = vld [vmem:[%s2573] sm:$0xf]
      %v2575 = vld [vmem:[%s2573 + $0x4] sm:$0x3]
      %v2578 = vunpack.c.l.b16 %v2574
      %v2579 = vunpack.c.l.b16 %v2575
      %v2580 = vpack.c.b16 %v2579, %v2578
      %v2582 = vsel %vm420, %v2565, 0
      %v2585 = vsel %vm420, %v2566, 0
      %v2588 = vsel %vm420, %v2567, 0
      %v2591 = vsel %vm420, %v2568, 0
      %v2594 = vsel %vm420, %v2569, 0
      %v2597 = vsel %vm420, %v2570, 0
      %v2600 = vsel %vm420, %v2571, 0
      %v2603 = vsel %vm420, %v2572, 0
      %v2606 = vsel %vm725, %v2580, 0
      %2608 = vmatprep.subr.bf16.mxu0 0
      %2609 = vmatpush1.bf16.msra.mxu0 %v2606
      %2610 = vmatprep.subr.bf16.mxu0 0
      %2611 = vmatpush1.bf16.msra.mxu0 0
      %2612 = vmatprep.subr.bf16.mxu0 0
      %2613 = vmatpush1.bf16.msra.mxu0 0
      %2614 = vmatprep.subr.bf16.mxu0 0
      %2615 = vmatpush1.bf16.msra.mxu0 0
      %2616 = vmatprep.subr.bf16.mxu0 0
      %2617 = vmatpush1.bf16.msra.mxu0 0
      %2618 = vmatprep.subr.bf16.mxu0 0
      %2619 = vmatpush1.bf16.msra.mxu0 0
      %2620 = vmatprep.subr.bf16.mxu0 0
      %2621 = vmatpush1.bf16.msra.mxu0 0
      %2622 = vmatprep.subr.bf16.mxu0 0
      %2623 = vmatpush1.bf16.msra.mxu0 0
      %2624 = vmatprep.subr.bf16.mxu0 0
      %2625 = vmatpush1.bf16.msra.mxu0 0
      %2626 = vmatprep.subr.bf16.mxu0 0
      %2627 = vmatpush1.bf16.msra.mxu0 0
      %2628 = vmatprep.subr.bf16.mxu0 0
      %2629 = vmatpush1.bf16.msra.mxu0 0
      %2630 = vmatprep.subr.bf16.mxu0 0
      %2631 = vmatpush1.bf16.msra.mxu0 0
      %2632 = vmatprep.subr.bf16.mxu0 0
      %2633 = vmatpush1.bf16.msra.mxu0 0
      %2634 = vmatprep.subr.bf16.mxu0 0
      %2635 = vmatpush1.bf16.msra.mxu0 0
      %2636 = vmatprep.subr.bf16.mxu0 0
      %2637 = vmatpush1.bf16.msra.mxu0 0
      %2638 = vmatprep.subr.bf16.mxu0 0
      %2639 = vmatpush1.bf16.msra.mxu0 0
      %2640 = vmatprep.mubr.bf16.mxu0 0
      %2641 = vmatmul.mubr.bf16.gmra.mrb[0].mxu0 %v2582
      %v2642 = vpop.f32.mrb[0].mxu0
      %v2643 = vadd.f32 0.0, %v2642
      %v2644 = vpop.f32.mrb[0].mxu0
      %v2645 = vpop.f32.mrb[0].mxu0
      %v2646 = vadd.f32 0.0, %v2645
      %v2647 = vpop.f32.mrb[0].mxu0
      %2648 = vmatprep.mubr.bf16.mxu0 0
      %2649 = vmatmul.mubr.bf16.gmra.mrb[0].mxu0 %v2585
      %v2650 = vpop.f32.mrb[0].mxu0
      %v2651 = vadd.f32 0.0, %v2650
      %v2652 = vpop.f32.mrb[0].mxu0
      %v2653 = vpop.f32.mrb[0].mxu0
      %v2654 = vadd.f32 0.0, %v2653
      %v2655 = vpop.f32.mrb[0].mxu0
      %2656 = vmatprep.mubr.bf16.mxu0 0
      %2657 = vmatmul.mubr.bf16.gmra.mrb[0].mxu0 %v2588
      %v2658 = vpop.f32.mrb[0].mxu0
      %v2659 = vadd.f32 0.0, %v2658
      %v2660 = vpop.f32.mrb[0].mxu0
      %v2661 = vpop.f32.mrb[0].mxu0
      %v2662 = vadd.f32 0.0, %v2661
      %v2663 = vpop.f32.mrb[0].mxu0
      %2664 = vmatprep.mubr.bf16.mxu0 0
      %2665 = vmatmul.mubr.bf16.gmra.mrb[0].mxu0 %v2591
      %v2666 = vpop.f32.mrb[0].mxu0
      %v2667 = vadd.f32 0.0, %v2666
      %v2668 = vpop.f32.mrb[0].mxu0
      %v2669 = vpop.f32.mrb[0].mxu0
      %v2670 = vadd.f32 0.0, %v2669
      %v2671 = vpop.f32.mrb[0].mxu0
      %2672 = vmatprep.mubr.bf16.mxu0 0
      %2673 = vmatmul.mubr.bf16.gmra.mrb[0].mxu0 %v2594
      %v2674 = vpop.f32.mrb[0].mxu0
      %v2675 = vadd.f32 0.0, %v2674
      %v2676 = vpop.f32.mrb[0].mxu0
      %v2677 = vpop.f32.mrb[0].mxu0
      %v2678 = vadd.f32 0.0, %v2677
      %v2679 = vpop.f32.mrb[0].mxu0
      %2680 = vmatprep.mubr.bf16.mxu0 0
      %2681 = vmatmul.mubr.bf16.gmra.mrb[0].mxu0 %v2597
      %v2682 = vpop.f32.mrb[0].mxu0
      %v2683 = vadd.f32 0.0, %v2682
      %v2684 = vpop.f32.mrb[0].mxu0
      %v2685 = vpop.f32.mrb[0].mxu0
      %v2686 = vadd.f32 0.0, %v2685
      %v2687 = vpop.f32.mrb[0].mxu0
      %2688 = vmatprep.mubr.bf16.mxu0 0
      %2689 = vmatmul.mubr.bf16.gmra.mrb[0].mxu0 %v2600
      %v2690 = vpop.f32.mrb[0].mxu0
      %v2691 = vadd.f32 0.0, %v2690
      %v2692 = vpop.f32.mrb[0].mxu0
      %v2693 = vpop.f32.mrb[0].mxu0
      %v2694 = vadd.f32 0.0, %v2693
      %v2695 = vpop.f32.mrb[0].mxu0
      %2696 = vmatprep.mubr.bf16.mxu0 0
      %2697 = vmatmul.mubr.bf16.gmra.mrb[0].mxu0 %v2603
      %v2698 = vpop.f32.mrb[0].mxu0
      %v2699 = vadd.f32 0.0, %v2698
      %v2700 = vpop.f32.mrb[0].mxu0
      %v2701 = vpop.f32.mrb[0].mxu0
      %v2702 = vadd.f32 0.0, %v2701
      %v2703 = vpop.f32.mrb[0].mxu0
      %2704 = vdwg.mxu0
      %v2705 = vadd.f32 %v2503, %v2643
      %v2706 = vadd.f32 %v2506, %v2646
      %v2707 = vadd.f32 %v2511, %v2651
      %v2708 = vadd.f32 %v2514, %v2654
      %v2709 = vadd.f32 %v2519, %v2659
      %v2710 = vadd.f32 %v2522, %v2662
      %v2711 = vadd.f32 %v2527, %v2667
      %v2712 = vadd.f32 %v2530, %v2670
      %v2713 = vadd.f32 %v2535, %v2675
      %v2714 = vadd.f32 %v2538, %v2678
      %v2715 = vadd.f32 %v2543, %v2683
      %v2716 = vadd.f32 %v2546, %v2686
      %v2717 = vadd.f32 %v2551, %v2691
      %v2718 = vadd.f32 %v2554, %v2694
      %v2719 = vadd.f32 %v2559, %v2699
      %v2720 = vadd.f32 %v2562, %v2702
      %2721 = vst.msk [vmem:[#allocation3] sm:$0xff] %vm370, %v2705
      %2722 = vst.msk [vmem:[#allocation3 + $0x8] sm:$0xff] %vm370, %v2706
      %2723 = vst.msk [vmem:[#allocation3 + $0x10] sm:$0xff] %vm370, %v2707
      %2724 = vst.msk [vmem:[#allocation3 + $0x18] sm:$0xff] %vm370, %v2708
      %2725 = vst.msk [vmem:[#allocation3 + $0x20] sm:$0xff] %vm370, %v2709
      %2726 = vst.msk [vmem:[#allocation3 + $0x28] sm:$0xff] %vm370, %v2710
      %2727 = vst.msk [vmem:[#allocation3 + $0x30] sm:$0xff] %vm370, %v2711
      %2728 = vst.msk [vmem:[#allocation3 + $0x38] sm:$0xff] %vm370, %v2712
      %2729 = vst.msk [vmem:[#allocation3 + $0x40] sm:$0xff] %vm370, %v2713
      %2730 = vst.msk [vmem:[#allocation3 + $0x48] sm:$0xff] %vm370, %v2714
      %2731 = vst.msk [vmem:[#allocation3 + $0x50] sm:$0xff] %vm370, %v2715
      %2732 = vst.msk [vmem:[#allocation3 + $0x58] sm:$0xff] %vm370, %v2716
      %2733 = vst.msk [vmem:[#allocation3 + $0x60] sm:$0xff] %vm370, %v2717
      %2734 = vst.msk [vmem:[#allocation3 + $0x68] sm:$0xff] %vm370, %v2718
      %2735 = vst.msk [vmem:[#allocation3 + $0x70] sm:$0xff] %vm370, %v2719
      %2736 = vst.msk [vmem:[#allocation3 + $0x78] sm:$0xff] %vm370, %v2720
      %v2737 = vsel %vm370, %v2705, 0.0
      %v2738 = vsel %vm370, %v2706, 0.0
      %v2739 = vadd.f32 %v2737, %v2738
      %v2740 = vsel %vm370, %v2707, 0.0
      %v2741 = vadd.f32 %v2739, %v2740
      %v2742 = vsel %vm370, %v2708, 0.0
      %v2743 = vadd.f32 %v2741, %v2742
      %v2744 = vsel %vm370, %v2709, 0.0
      %v2745 = vadd.f32 %v2743, %v2744
      %v2746 = vsel %vm370, %v2710, 0.0
      %v2747 = vadd.f32 %v2745, %v2746
      %v2748 = vsel %vm370, %v2711, 0.0
      %v2749 = vadd.f32 %v2747, %v2748
      %v2750 = vsel %vm370, %v2712, 0.0
      %v2751 = vadd.f32 %v2749, %v2750
      %v2752 = vsel %vm370, %v2713, 0.0
      %v2753 = vadd.f32 %v2751, %v2752
      %v2754 = vsel %vm370, %v2714, 0.0
      %v2755 = vadd.f32 %v2753, %v2754
      %v2756 = vsel %vm370, %v2715, 0.0
      %v2757 = vadd.f32 %v2755, %v2756
      %v2758 = vsel %vm370, %v2716, 0.0
      %v2759 = vadd.f32 %v2757, %v2758
      %v2760 = vsel %vm370, %v2717, 0.0
      %v2761 = vadd.f32 %v2759, %v2760
      %v2762 = vsel %vm370, %v2718, 0.0
      %v2763 = vadd.f32 %v2761, %v2762
      %v2764 = vsel %vm370, %v2719, 0.0
      %v2765 = vadd.f32 %v2763, %v2764
      %v2766 = vsel %vm370, %v2720, 0.0
      %v2767 = vadd.f32 %v2765, %v2766
      %v2768 = vrot.slane %v2767, 4
      %v2769 = vadd.f32 %v2767, %v2768
      %v2770 = vrot.slane %v2769, 2
      %v2771 = vadd.f32 %v2769, %v2770
      %v2772 = vrot.slane %v2771, 1
      %v2773 = vadd.f32 %v2771, %v2772
      %v2774 = vadd.f32 %v2773, 0.0
      %v2775 = vmul.f32 %v2705, %v2705
      %v2776 = vmul.f32 %v2706, %v2706
      %v2777 = vmul.f32 %v2707, %v2707
      %v2778 = vmul.f32 %v2708, %v2708
      %v2779 = vmul.f32 %v2709, %v2709
      %v2780 = vmul.f32 %v2710, %v2710
      %v2781 = vmul.f32 %v2711, %v2711
      %v2782 = vmul.f32 %v2712, %v2712
      %v2783 = vmul.f32 %v2713, %v2713
      %v2784 = vmul.f32 %v2714, %v2714
      %v2785 = vmul.f32 %v2715, %v2715
      %v2786 = vmul.f32 %v2716, %v2716
      %v2787 = vmul.f32 %v2717, %v2717
      %v2788 = vmul.f32 %v2718, %v2718
      %v2789 = vmul.f32 %v2719, %v2719
      %v2790 = vmul.f32 %v2720, %v2720
      %v2791 = vsel %vm370, %v2775, 0.0
      %v2792 = vsel %vm370, %v2776, 0.0
      %v2793 = vadd.f32 %v2791, %v2792
      %v2794 = vsel %vm370, %v2777, 0.0
      %v2795 = vadd.f32 %v2793, %v2794
      %v2796 = vsel %vm370, %v2778, 0.0
      %v2797 = vadd.f32 %v2795, %v2796
      %v2798 = vsel %vm370, %v2779, 0.0
      %v2799 = vadd.f32 %v2797, %v2798
      %v2800 = vsel %vm370, %v2780, 0.0
      %v2801 = vadd.f32 %v2799, %v2800
      %v2802 = vsel %vm370, %v2781, 0.0
      %v2803 = vadd.f32 %v2801, %v2802
      %v2804 = vsel %vm370, %v2782, 0.0
      %v2805 = vadd.f32 %v2803, %v2804
      %v2806 = vsel %vm370, %v2783, 0.0
      %v2807 = vadd.f32 %v2805, %v2806
      %v2808 = vsel %vm370, %v2784, 0.0
      %v2809 = vadd.f32 %v2807, %v2808
      %v2810 = vsel %vm370, %v2785, 0.0
      %v2811 = vadd.f32 %v2809, %v2810
      %v2812 = vsel %vm370, %v2786, 0.0
      %v2813 = vadd.f32 %v2811, %v2812
      %v2814 = vsel %vm370, %v2787, 0.0
      %v2815 = vadd.f32 %v2813, %v2814
      %v2816 = vsel %vm370, %v2788, 0.0
      %v2817 = vadd.f32 %v2815, %v2816
      %v2818 = vsel %vm370, %v2789, 0.0
      %v2819 = vadd.f32 %v2817, %v2818
      %v2820 = vsel %vm370, %v2790, 0.0
      %v2821 = vadd.f32 %v2819, %v2820
      %v2822 = vrot.slane %v2821, 4
      %v2823 = vadd.f32 %v2821, %v2822
      %v2824 = vrot.slane %v2823, 2
      %v2825 = vadd.f32 %v2823, %v2824
      %v2826 = vrot.slane %v2825, 1
      %v2827 = vadd.f32 %v2825, %v2826
      %v2828 = vadd.f32 %v2827, 0.0
      %v2829 = vld [vmem:[#allocation2 + $0x40] sm:$0xff]
      %v2830 = vld [vmem:[#allocation2 + $0x48] sm:$0xff]
      %v2831 = vld [vmem:[#allocation2 + $0x50] sm:$0xff]
      %v2832 = vld [vmem:[#allocation2 + $0x58] sm:$0xff]
      %v2833 = vld [vmem:[#allocation2 + $0x60] sm:$0xff]
      %v2834 = vld [vmem:[#allocation2 + $0x68] sm:$0xff]
      %v2835 = vld [vmem:[#allocation2 + $0x70] sm:$0xff]
      %v2836 = vld [vmem:[#allocation2 + $0x78] sm:$0xff]
      %v2837 = vld [vmem:[%s2] sm:$0xf]
      %v2838 = vld [vmem:[%s2 + $0x4] sm:$0x3]
      %v2839 = vld [vmem:[#allocation2 + $0x80] sm:$0xff]
      %v2840 = vld [vmem:[%s2325] sm:$0xf]
      %v2841 = vld [vmem:[%s2325 + $0x4] sm:$0x3]
      %v2844 = vunpack.c.l.b16 %v2840
      %v2845 = vunpack.c.l.b16 %v2841
      %v2846 = vpack.c.b16 %v2845, %v2844
      %v2848 = vsel %vm420, %v2830, 0
      %v2851 = vsel %vm420, %v2831, 0
      %v2854 = vsel %vm420, %v2832, 0
      %v2857 = vsel %vm420, %v2833, 0
      %v2860 = vsel %vm420, %v2834, 0
      %v2863 = vsel %vm420, %v2835, 0
      %v2866 = vsel %vm420, %v2836, 0
      %v2869 = vsel %vm420, %v2839, 0
      %v2872 = vsel %vm725, %v2846, 0
      %2874 = vmatprep.subr.bf16.mxu0 0
      %2875 = vmatpush1.bf16.msra.mxu0 %v2872
      %2876 = vmatprep.subr.bf16.mxu0 0
      %2877 = vmatpush1.bf16.msra.mxu0 0
      %2878 = vmatprep.subr.bf16.mxu0 0
      %2879 = vmatpush1.bf16.msra.mxu0 0
      %2880 = vmatprep.subr.bf16.mxu0 0
      %2881 = vmatpush1.bf16.msra.mxu0 0
      %2882 = vmatprep.subr.bf16.mxu0 0
      %2883 = vmatpush1.bf16.msra.mxu0 0
      %2884 = vmatprep.subr.bf16.mxu0 0
      %2885 = vmatpush1.bf16.msra.mxu0 0
      %2886 = vmatprep.subr.bf16.mxu0 0
      %2887 = vmatpush1.bf16.msra.mxu0 0
      %2888 = vmatprep.subr.bf16.mxu0 0
      %2889 = vmatpush1.bf16.msra.mxu0 0
      %2890 = vmatprep.subr.bf16.mxu0 0
      %2891 = vmatpush1.bf16.msra.mxu0 0
      %2892 = vmatprep.subr.bf16.mxu0 0
      %2893 = vmatpush1.bf16.msra.mxu0 0
      %2894 = vmatprep.subr.bf16.mxu0 0
      %2895 = vmatpush1.bf16.msra.mxu0 0
      %2896 = vmatprep.subr.bf16.mxu0 0
      %2897 = vmatpush1.bf16.msra.mxu0 0
      %2898 = vmatprep.subr.bf16.mxu0 0
      %2899 = vmatpush1.bf16.msra.mxu0 0
      %2900 = vmatprep.subr.bf16.mxu0 0
      %2901 = vmatpush1.bf16.msra.mxu0 0
      %2902 = vmatprep.subr.bf16.mxu0 0
      %2903 = vmatpush1.bf16.msra.mxu0 0
      %2904 = vmatprep.subr.bf16.mxu0 0
      %2905 = vmatpush1.bf16.msra.mxu0 0
      %2906 = vmatprep.mubr.bf16.mxu0 0
      %2907 = vmatmul.mubr.bf16.gmra.mrb[0].mxu0 %v2848
      %v2908 = vpop.f32.mrb[0].mxu0
      %v2909 = vadd.f32 0.0, %v2908
      %v2910 = vpop.f32.mrb[0].mxu0
      %v2911 = vpop.f32.mrb[0].mxu0
      %v2912 = vadd.f32 0.0, %v2911
      %v2913 = vpop.f32.mrb[0].mxu0
      %2914 = vmatprep.mubr.bf16.mxu0 0
      %2915 = vmatmul.mubr.bf16.gmra.mrb[0].mxu0 %v2851
      %v2916 = vpop.f32.mrb[0].mxu0
      %v2917 = vadd.f32 0.0, %v2916
      %v2918 = vpop.f32.mrb[0].mxu0
      %v2919 = vpop.f32.mrb[0].mxu0
      %v2920 = vadd.f32 0.0, %v2919
      %v2921 = vpop.f32.mrb[0].mxu0
      %2922 = vmatprep.mubr.bf16.mxu0 0
      %2923 = vmatmul.mubr.bf16.gmra.mrb[0].mxu0 %v2854
      %v2924 = vpop.f32.mrb[0].mxu0
      %v2925 = vadd.f32 0.0, %v2924
      %v2926 = vpop.f32.mrb[0].mxu0
      %v2927 = vpop.f32.mrb[0].mxu0
      %v2928 = vadd.f32 0.0, %v2927
      %v2929 = vpop.f32.mrb[0].mxu0
      %2930 = vmatprep.mubr.bf16.mxu0 0
      %2931 = vmatmul.mubr.bf16.gmra.mrb[0].mxu0 %v2857
      %v2932 = vpop.f32.mrb[0].mxu0
      %v2933 = vadd.f32 0.0, %v2932
      %v2934 = vpop.f32.mrb[0].mxu0
      %v2935 = vpop.f32.mrb[0].mxu0
      %v2936 = vadd.f32 0.0, %v2935
      %v2937 = vpop.f32.mrb[0].mxu0
      %2938 = vmatprep.mubr.bf16.mxu0 0
      %2939 = vmatmul.mubr.bf16.gmra.mrb[0].mxu0 %v2860
      %v2940 = vpop.f32.mrb[0].mxu0
      %v2941 = vadd.f32 0.0, %v2940
      %v2942 = vpop.f32.mrb[0].mxu0
      %v2943 = vpop.f32.mrb[0].mxu0
      %v2944 = vadd.f32 0.0, %v2943
      %v2945 = vpop.f32.mrb[0].mxu0
      %2946 = vmatprep.mubr.bf16.mxu0 0
      %2947 = vmatmul.mubr.bf16.gmra.mrb[0].mxu0 %v2863
      %v2948 = vpop.f32.mrb[0].mxu0
      %v2949 = vadd.f32 0.0, %v2948
      %v2950 = vpop.f32.mrb[0].mxu0
      %v2951 = vpop.f32.mrb[0].mxu0
      %v2952 = vadd.f32 0.0, %v2951
      %v2953 = vpop.f32.mrb[0].mxu0
      %2954 = vmatprep.mubr.bf16.mxu0 0
      %2955 = vmatmul.mubr.bf16.gmra.mrb[0].mxu0 %v2866
      %v2956 = vpop.f32.mrb[0].mxu0
      %v2957 = vadd.f32 0.0, %v2956
      %v2958 = vpop.f32.mrb[0].mxu0
      %v2959 = vpop.f32.mrb[0].mxu0
      %v2960 = vadd.f32 0.0, %v2959
      %v2961 = vpop.f32.mrb[0].mxu0
      %2962 = vmatprep.mubr.bf16.mxu0 0
      %2963 = vmatmul.mubr.bf16.gmra.mrb[0].mxu0 %v2869
      %v2964 = vpop.f32.mrb[0].mxu0
      %v2965 = vadd.f32 0.0, %v2964
      %v2966 = vpop.f32.mrb[0].mxu0
      %v2967 = vpop.f32.mrb[0].mxu0
      %v2968 = vadd.f32 0.0, %v2967
      %v2969 = vpop.f32.mrb[0].mxu0
      %2970 = vdwg.mxu0
      %v2973 = vunpack.c.l.b16 %v2837
      %v2974 = vunpack.c.l.b16 %v2838
      %v2975 = vpack.c.b16 %v2974, %v2973
      %v2977 = vsel %vm420, %v2829, 0
      %v2980 = vsel %vm725, %v2975, 0
      %2982 = vmatprep.subr.bf16.mxu0 0
      %2983 = vmatpush1.bf16.msra.mxu0 %v2980
      %2984 = vmatprep.subr.bf16.mxu0 0
      %2985 = vmatpush1.bf16.msra.mxu0 0
      %2986 = vmatprep.subr.bf16.mxu0 0
      %2987 = vmatpush1.bf16.msra.mxu0 0
      %2988 = vmatprep.subr.bf16.mxu0 0
      %2989 = vmatpush1.bf16.msra.mxu0 0
      %2990 = vmatprep.subr.bf16.mxu0 0
      %2991 = vmatpush1.bf16.msra.mxu0 0
      %2992 = vmatprep.subr.bf16.mxu0 0
      %2993 = vmatpush1.bf16.msra.mxu0 0
      %2994 = vmatprep.subr.bf16.mxu0 0
      %2995 = vmatpush1.bf16.msra.mxu0 0
      %2996 = vmatprep.subr.bf16.mxu0 0
      %2997 = vmatpush1.bf16.msra.mxu0 0
      %2998 = vmatprep.subr.bf16.mxu0 0
      %2999 = vmatpush1.bf16.msra.mxu0 0
      %3000 = vmatprep.subr.bf16.mxu0 0
      %3001 = vmatpush1.bf16.msra.mxu0 0
      %3002 = vmatprep.subr.bf16.mxu0 0
      %3003 = vmatpush1.bf16.msra.mxu0 0
      %3004 = vmatprep.subr.bf16.mxu0 0
      %3005 = vmatpush1.bf16.msra.mxu0 0
      %3006 = vmatprep.subr.bf16.mxu0 0
      %3007 = vmatpush1.bf16.msra.mxu0 0
      %3008 = vmatprep.subr.bf16.mxu0 0
      %3009 = vmatpush1.bf16.msra.mxu0 0
      %3010 = vmatprep.subr.bf16.mxu0 0
      %3011 = vmatpush1.bf16.msra.mxu0 0
      %3012 = vmatprep.subr.bf16.mxu0 0
      %3013 = vmatpush1.bf16.msra.mxu0 0
      %3014 = vmatprep.mubr.bf16.mxu0 0
      %3015 = vmatmul.mubr.bf16.gmra.mrb[0].mxu0 %v2977
      %v3016 = vpop.f32.mrb[0].mxu0
      %v3017 = vadd.f32 %v2909, %v3016
      %v3018 = vpop.f32.mrb[0].mxu0
      %v3019 = vpop.f32.mrb[0].mxu0
      %v3020 = vadd.f32 %v2912, %v3019
      %v3021 = vpop.f32.mrb[0].mxu0
      %3022 = vmatprep.mubr.bf16.mxu0 0
      %3023 = vmatmul.mubr.bf16.gmra.mrb[0].mxu0 %v2848
      %v3024 = vpop.f32.mrb[0].mxu0
      %v3025 = vadd.f32 %v2917, %v3024
      %v3026 = vpop.f32.mrb[0].mxu0
      %v3027 = vpop.f32.mrb[0].mxu0
      %v3028 = vadd.f32 %v2920, %v3027
      %v3029 = vpop.f32.mrb[0].mxu0
      %3030 = vmatprep.mubr.bf16.mxu0 0
      %3031 = vmatmul.mubr.bf16.gmra.mrb[0].mxu0 %v2851
      %v3032 = vpop.f32.mrb[0].mxu0
      %v3033 = vadd.f32 %v2925, %v3032
      %v3034 = vpop.f32.mrb[0].mxu0
      %v3035 = vpop.f32.mrb[0].mxu0
      %v3036 = vadd.f32 %v2928, %v3035
      %v3037 = vpop.f32.mrb[0].mxu0
      %3038 = vmatprep.mubr.bf16.mxu0 0
      %3039 = vmatmul.mubr.bf16.gmra.mrb[0].mxu0 %v2854
      %v3040 = vpop.f32.mrb[0].mxu0
      %v3041 = vadd.f32 %v2933, %v3040
      %v3042 = vpop.f32.mrb[0].mxu0
      %v3043 = vpop.f32.mrb[0].mxu0
      %v3044 = vadd.f32 %v2936, %v3043
      %v3045 = vpop.f32.mrb[0].mxu0
      %3046 = vmatprep.mubr.bf16.mxu0 0
      %3047 = vmatmul.mubr.bf16.gmra.mrb[0].mxu0 %v2857
      %v3048 = vpop.f32.mrb[0].mxu0
      %v3049 = vadd.f32 %v2941, %v3048
      %v3050 = vpop.f32.mrb[0].mxu0
      %v3051 = vpop.f32.mrb[0].mxu0
      %v3052 = vadd.f32 %v2944, %v3051
      %v3053 = vpop.f32.mrb[0].mxu0
      %3054 = vmatprep.mubr.bf16.mxu0 0
      %3055 = vmatmul.mubr.bf16.gmra.mrb[0].mxu0 %v2860
      %v3056 = vpop.f32.mrb[0].mxu0
      %v3057 = vadd.f32 %v2949, %v3056
      %v3058 = vpop.f32.mrb[0].mxu0
      %v3059 = vpop.f32.mrb[0].mxu0
      %v3060 = vadd.f32 %v2952, %v3059
      %v3061 = vpop.f32.mrb[0].mxu0
      %3062 = vmatprep.mubr.bf16.mxu0 0
      %3063 = vmatmul.mubr.bf16.gmra.mrb[0].mxu0 %v2863
      %v3064 = vpop.f32.mrb[0].mxu0
      %v3065 = vadd.f32 %v2957, %v3064
      %v3066 = vpop.f32.mrb[0].mxu0
      %v3067 = vpop.f32.mrb[0].mxu0
      %v3068 = vadd.f32 %v2960, %v3067
      %v3069 = vpop.f32.mrb[0].mxu0
      %3070 = vmatprep.mubr.bf16.mxu0 0
      %3071 = vmatmul.mubr.bf16.gmra.mrb[0].mxu0 %v2866
      %v3072 = vpop.f32.mrb[0].mxu0
      %v3073 = vadd.f32 %v2965, %v3072
      %v3074 = vpop.f32.mrb[0].mxu0
      %v3075 = vpop.f32.mrb[0].mxu0
      %v3076 = vadd.f32 %v2968, %v3075
      %v3077 = vpop.f32.mrb[0].mxu0
      %3078 = vdwg.mxu0
      %v3079 = vld [vmem:[#allocation2 + $0x50] sm:$0xff]
      %v3080 = vld [vmem:[#allocation2 + $0x58] sm:$0xff]
      %v3081 = vld [vmem:[#allocation2 + $0x60] sm:$0xff]
      %v3082 = vld [vmem:[#allocation2 + $0x68] sm:$0xff]
      %v3083 = vld [vmem:[#allocation2 + $0x70] sm:$0xff]
      %v3084 = vld [vmem:[#allocation2 + $0x78] sm:$0xff]
      %v3085 = vld [vmem:[#allocation2 + $0x80] sm:$0xff]
      %v3086 = vld [vmem:[#allocation2 + $0x88] sm:$0xff]
      %v3087 = vld [vmem:[%s2573] sm:$0xf]
      %v3088 = vld [vmem:[%s2573 + $0x4] sm:$0x3]
      %v3091 = vunpack.c.l.b16 %v3087
      %v3092 = vunpack.c.l.b16 %v3088
      %v3093 = vpack.c.b16 %v3092, %v3091
      %v3095 = vsel %vm420, %v3079, 0
      %v3098 = vsel %vm420, %v3080, 0
      %v3101 = vsel %vm420, %v3081, 0
      %v3104 = vsel %vm420, %v3082, 0
      %v3107 = vsel %vm420, %v3083, 0
      %v3110 = vsel %vm420, %v3084, 0
      %v3113 = vsel %vm420, %v3085, 0
      %v3116 = vsel %vm420, %v3086, 0
      %v3119 = vsel %vm725, %v3093, 0
      %3121 = vmatprep.subr.bf16.mxu0 0
      %3122 = vmatpush1.bf16.msra.mxu0 %v3119
      %3123 = vmatprep.subr.bf16.mxu0 0
      %3124 = vmatpush1.bf16.msra.mxu0 0
      %3125 = vmatprep.subr.bf16.mxu0 0
      %3126 = vmatpush1.bf16.msra.mxu0 0
      %3127 = vmatprep.subr.bf16.mxu0 0
      %3128 = vmatpush1.bf16.msra.mxu0 0
      %3129 = vmatprep.subr.bf16.mxu0 0
      %3130 = vmatpush1.bf16.msra.mxu0 0
      %3131 = vmatprep.subr.bf16.mxu0 0
      %3132 = vmatpush1.bf16.msra.mxu0 0
      %3133 = vmatprep.subr.bf16.mxu0 0
      %3134 = vmatpush1.bf16.msra.mxu0 0
      %3135 = vmatprep.subr.bf16.mxu0 0
      %3136 = vmatpush1.bf16.msra.mxu0 0
      %3137 = vmatprep.subr.bf16.mxu0 0
      %3138 = vmatpush1.bf16.msra.mxu0 0
      %3139 = vmatprep.subr.bf16.mxu0 0
      %3140 = vmatpush1.bf16.msra.mxu0 0
      %3141 = vmatprep.subr.bf16.mxu0 0
      %3142 = vmatpush1.bf16.msra.mxu0 0
      %3143 = vmatprep.subr.bf16.mxu0 0
      %3144 = vmatpush1.bf16.msra.mxu0 0
      %3145 = vmatprep.subr.bf16.mxu0 0
      %3146 = vmatpush1.bf16.msra.mxu0 0
      %3147 = vmatprep.subr.bf16.mxu0 0
      %3148 = vmatpush1.bf16.msra.mxu0 0
      %3149 = vmatprep.subr.bf16.mxu0 0
      %3150 = vmatpush1.bf16.msra.mxu0 0
      %3151 = vmatprep.subr.bf16.mxu0 0
      %3152 = vmatpush1.bf16.msra.mxu0 0
      %3153 = vmatprep.mubr.bf16.mxu0 0
      %3154 = vmatmul.mubr.bf16.gmra.mrb[0].mxu0 %v3095
      %v3155 = vpop.f32.mrb[0].mxu0
      %v3156 = vadd.f32 0.0, %v3155
      %v3157 = vpop.f32.mrb[0].mxu0
      %v3158 = vpop.f32.mrb[0].mxu0
      %v3159 = vadd.f32 0.0, %v3158
      %v3160 = vpop.f32.mrb[0].mxu0
      %3161 = vmatprep.mubr.bf16.mxu0 0
      %3162 = vmatmul.mubr.bf16.gmra.mrb[0].mxu0 %v3098
      %v3163 = vpop.f32.mrb[0].mxu0
      %v3164 = vadd.f32 0.0, %v3163
      %v3165 = vpop.f32.mrb[0].mxu0
      %v3166 = vpop.f32.mrb[0].mxu0
      %v3167 = vadd.f32 0.0, %v3166
      %v3168 = vpop.f32.mrb[0].mxu0
      %3169 = vmatprep.mubr.bf16.mxu0 0
      %3170 = vmatmul.mubr.bf16.gmra.mrb[0].mxu0 %v3101
      %v3171 = vpop.f32.mrb[0].mxu0
      %v3172 = vadd.f32 0.0, %v3171
      %v3173 = vpop.f32.mrb[0].mxu0
      %v3174 = vpop.f32.mrb[0].mxu0
      %v3175 = vadd.f32 0.0, %v3174
      %v3176 = vpop.f32.mrb[0].mxu0
      %3177 = vmatprep.mubr.bf16.mxu0 0
      %3178 = vmatmul.mubr.bf16.gmra.mrb[0].mxu0 %v3104
      %v3179 = vpop.f32.mrb[0].mxu0
      %v3180 = vadd.f32 0.0, %v3179
      %v3181 = vpop.f32.mrb[0].mxu0
      %v3182 = vpop.f32.mrb[0].mxu0
      %v3183 = vadd.f32 0.0, %v3182
      %v3184 = vpop.f32.mrb[0].mxu0
      %3185 = vmatprep.mubr.bf16.mxu0 0
      %3186 = vmatmul.mubr.bf16.gmra.mrb[0].mxu0 %v3107
      %v3187 = vpop.f32.mrb[0].mxu0
      %v3188 = vadd.f32 0.0, %v3187
      %v3189 = vpop.f32.mrb[0].mxu0
      %v3190 = vpop.f32.mrb[0].mxu0
      %v3191 = vadd.f32 0.0, %v3190
      %v3192 = vpop.f32.mrb[0].mxu0
      %3193 = vmatprep.mubr.bf16.mxu0 0
      %3194 = vmatmul.mubr.bf16.gmra.mrb[0].mxu0 %v3110
      %v3195 = vpop.f32.mrb[0].mxu0
      %v3196 = vadd.f32 0.0, %v3195
      %v3197 = vpop.f32.mrb[0].mxu0
      %v3198 = vpop.f32.mrb[0].mxu0
      %v3199 = vadd.f32 0.0, %v3198
      %v3200 = vpop.f32.mrb[0].mxu0
      %3201 = vmatprep.mubr.bf16.mxu0 0
      %3202 = vmatmul.mubr.bf16.gmra.mrb[0].mxu0 %v3113
      %v3203 = vpop.f32.mrb[0].mxu0
      %v3204 = vadd.f32 0.0, %v3203
      %v3205 = vpop.f32.mrb[0].mxu0
      %v3206 = vpop.f32.mrb[0].mxu0
      %v3207 = vadd.f32 0.0, %v3206
      %v3208 = vpop.f32.mrb[0].mxu0
      %3209 = vmatprep.mubr.bf16.mxu0 0
      %3210 = vmatmul.mubr.bf16.gmra.mrb[0].mxu0 %v3116
      %v3211 = vpop.f32.mrb[0].mxu0
      %v3212 = vadd.f32 0.0, %v3211
      %v3213 = vpop.f32.mrb[0].mxu0
      %v3214 = vpop.f32.mrb[0].mxu0
      %v3215 = vadd.f32 0.0, %v3214
      %v3216 = vpop.f32.mrb[0].mxu0
      %3217 = vdwg.mxu0
      %v3218 = vadd.f32 %v3017, %v3156
      %v3219 = vadd.f32 %v3020, %v3159
      %v3220 = vadd.f32 %v3025, %v3164
      %v3221 = vadd.f32 %v3028, %v3167
      %v3222 = vadd.f32 %v3033, %v3172
      %v3223 = vadd.f32 %v3036, %v3175
      %v3224 = vadd.f32 %v3041, %v3180
      %v3225 = vadd.f32 %v3044, %v3183
      %v3226 = vadd.f32 %v3049, %v3188
      %v3227 = vadd.f32 %v3052, %v3191
      %v3228 = vadd.f32 %v3057, %v3196
      %v3229 = vadd.f32 %v3060, %v3199
      %v3230 = vadd.f32 %v3065, %v3204
      %v3231 = vadd.f32 %v3068, %v3207
      %v3232 = vadd.f32 %v3073, %v3212
      %v3233 = vadd.f32 %v3076, %v3215
      %3234 = vst.msk [vmem:[#allocation3 + $0x80] sm:$0xff] %vm370, %v3218
      %3235 = vst.msk [vmem:[#allocation3 + $0x88] sm:$0xff] %vm370, %v3219
      %3236 = vst.msk [vmem:[#allocation3 + $0x90] sm:$0xff] %vm370, %v3220
      %3237 = vst.msk [vmem:[#allocation3 + $0x98] sm:$0xff] %vm370, %v3221
      %3238 = vst.msk [vmem:[#allocation3 + $0xa0] sm:$0xff] %vm370, %v3222
      %3239 = vst.msk [vmem:[#allocation3 + $0xa8] sm:$0xff] %vm370, %v3223
      %3240 = vst.msk [vmem:[#allocation3 + $0xb0] sm:$0xff] %vm370, %v3224
      %3241 = vst.msk [vmem:[#allocation3 + $0xb8] sm:$0xff] %vm370, %v3225
      %3242 = vst.msk [vmem:[#allocation3 + $0xc0] sm:$0xff] %vm370, %v3226
      %3243 = vst.msk [vmem:[#allocation3 + $0xc8] sm:$0xff] %vm370, %v3227
      %3244 = vst.msk [vmem:[#allocation3 + $0xd0] sm:$0xff] %vm370, %v3228
      %3245 = vst.msk [vmem:[#allocation3 + $0xd8] sm:$0xff] %vm370, %v3229
      %3246 = vst.msk [vmem:[#allocation3 + $0xe0] sm:$0xff] %vm370, %v3230
      %3247 = vst.msk [vmem:[#allocation3 + $0xe8] sm:$0xff] %vm370, %v3231
      %3248 = vst.msk [vmem:[#allocation3 + $0xf0] sm:$0xff] %vm370, %v3232
      %3249 = vst.msk [vmem:[#allocation3 + $0xf8] sm:$0xff] %vm370, %v3233
      %v3250 = vsel %vm370, %v3218, 0.0
      %v3251 = vsel %vm370, %v3219, 0.0
      %v3252 = vadd.f32 %v3250, %v3251
      %v3253 = vsel %vm370, %v3220, 0.0
      %v3254 = vadd.f32 %v3252, %v3253
      %v3255 = vsel %vm370, %v3221, 0.0
      %v3256 = vadd.f32 %v3254, %v3255
      %v3257 = vsel %vm370, %v3222, 0.0
      %v3258 = vadd.f32 %v3256, %v3257
      %v3259 = vsel %vm370, %v3223, 0.0
      %v3260 = vadd.f32 %v3258, %v3259
      %v3261 = vsel %vm370, %v3224, 0.0
      %v3262 = vadd.f32 %v3260, %v3261
      %v3263 = vsel %vm370, %v3225, 0.0
      %v3264 = vadd.f32 %v3262, %v3263
      %v3265 = vsel %vm370, %v3226, 0.0
      %v3266 = vadd.f32 %v3264, %v3265
      %v3267 = vsel %vm370, %v3227, 0.0
      %v3268 = vadd.f32 %v3266, %v3267
      %v3269 = vsel %vm370, %v3228, 0.0
      %v3270 = vadd.f32 %v3268, %v3269
      %v3271 = vsel %vm370, %v3229, 0.0
      %v3272 = vadd.f32 %v3270, %v3271
      %v3273 = vsel %vm370, %v3230, 0.0
      %v3274 = vadd.f32 %v3272, %v3273
      %v3275 = vsel %vm370, %v3231, 0.0
      %v3276 = vadd.f32 %v3274, %v3275
      %v3277 = vsel %vm370, %v3232, 0.0
      %v3278 = vadd.f32 %v3276, %v3277
      %v3279 = vsel %vm370, %v3233, 0.0
      %v3280 = vadd.f32 %v3278, %v3279
      %v3281 = vrot.slane %v3280, 4
      %v3282 = vadd.f32 %v3280, %v3281
      %v3283 = vrot.slane %v3282, 2
      %v3284 = vadd.f32 %v3282, %v3283
      %v3285 = vrot.slane %v3284, 1
      %v3286 = vadd.f32 %v3284, %v3285
      %v3287 = vadd.f32 %v2774, %v3286
      %v3288 = vmul.f32 %v3218, %v3218
      %v3289 = vmul.f32 %v3219, %v3219
      %v3290 = vmul.f32 %v3220, %v3220
      %v3291 = vmul.f32 %v3221, %v3221
      %v3292 = vmul.f32 %v3222, %v3222
      %v3293 = vmul.f32 %v3223, %v3223
      %v3294 = vmul.f32 %v3224, %v3224
      %v3295 = vmul.f32 %v3225, %v3225
      %v3296 = vmul.f32 %v3226, %v3226
      %v3297 = vmul.f32 %v3227, %v3227
      %v3298 = vmul.f32 %v3228, %v3228
      %v3299 = vmul.f32 %v3229, %v3229
      %v3300 = vmul.f32 %v3230, %v3230
      %v3301 = vmul.f32 %v3231, %v3231
      %v3302 = vmul.f32 %v3232, %v3232
      %v3303 = vmul.f32 %v3233, %v3233
      %v3304 = vsel %vm370, %v3288, 0.0
      %v3305 = vsel %vm370, %v3289, 0.0
      %v3306 = vadd.f32 %v3304, %v3305
      %v3307 = vsel %vm370, %v3290, 0.0
      %v3308 = vadd.f32 %v3306, %v3307
      %v3309 = vsel %vm370, %v3291, 0.0
      %v3310 = vadd.f32 %v3308, %v3309
      %v3311 = vsel %vm370, %v3292, 0.0
      %v3312 = vadd.f32 %v3310, %v3311
      %v3313 = vsel %vm370, %v3293, 0.0
      %v3314 = vadd.f32 %v3312, %v3313
      %v3315 = vsel %vm370, %v3294, 0.0
      %v3316 = vadd.f32 %v3314, %v3315
      %v3317 = vsel %vm370, %v3295, 0.0
      %v3318 = vadd.f32 %v3316, %v3317
      %v3319 = vsel %vm370, %v3296, 0.0
      %v3320 = vadd.f32 %v3318, %v3319
      %v3321 = vsel %vm370, %v3297, 0.0
      %v3322 = vadd.f32 %v3320, %v3321
      %v3323 = vsel %vm370, %v3298, 0.0
      %v3324 = vadd.f32 %v3322, %v3323
      %v3325 = vsel %vm370, %v3299, 0.0
      %v3326 = vadd.f32 %v3324, %v3325
      %v3327 = vsel %vm370, %v3300, 0.0
      %v3328 = vadd.f32 %v3326, %v3327
      %v3329 = vsel %vm370, %v3301, 0.0
      %v3330 = vadd.f32 %v3328, %v3329
      %v3331 = vsel %vm370, %v3302, 0.0
      %v3332 = vadd.f32 %v3330, %v3331
      %v3333 = vsel %vm370, %v3303, 0.0
      %v3334 = vadd.f32 %v3332, %v3333
      %v3335 = vrot.slane %v3334, 4
      %v3336 = vadd.f32 %v3334, %v3335
      %v3337 = vrot.slane %v3336, 2
      %v3338 = vadd.f32 %v3336, %v3337
      %v3339 = vrot.slane %v3338, 1
      %v3340 = vadd.f32 %v3338, %v3339
      %v3341 = vadd.f32 %v2828, %v3340
      %v3342 = vmul.f32 %v3287, 0.00390625
      %v3343 = vmul.f32 %v3341, 0.00390625
      %v3344 = vmul.f32 %v3342, %v3342
      %v3345 = vsub.f32 %v3343, %v3344
      %v3346 = vmax.f32 %v3345, 0.0
      %v3347 = vadd.f32 %v3346, 1e-05
      %v3348 = vrsqrt.pop %v3347
      %v3349 = vld [vmem:[#allocation3] sm:$0xff]
      %v3350 = vld [vmem:[#allocation3 + $0x8] sm:$0xff]
      %v3351 = vld [vmem:[#allocation3 + $0x10] sm:$0xff]
      %v3352 = vld [vmem:[#allocation3 + $0x18] sm:$0xff]
      %v3353 = vld [vmem:[#allocation3 + $0x20] sm:$0xff]
      %v3354 = vld [vmem:[#allocation3 + $0x28] sm:$0xff]
      %v3355 = vld [vmem:[#allocation3 + $0x30] sm:$0xff]
      %v3356 = vld [vmem:[#allocation3 + $0x38] sm:$0xff]
      %v3357 = vld [vmem:[#allocation3 + $0x40] sm:$0xff]
      %v3358 = vld [vmem:[#allocation3 + $0x48] sm:$0xff]
      %v3359 = vld [vmem:[#allocation3 + $0x50] sm:$0xff]
      %v3360 = vld [vmem:[#allocation3 + $0x58] sm:$0xff]
      %v3361 = vld [vmem:[#allocation3 + $0x60] sm:$0xff]
      %v3362 = vld [vmem:[#allocation3 + $0x68] sm:$0xff]
      %v3363 = vld [vmem:[#allocation3 + $0x70] sm:$0xff]
      %v3364 = vld [vmem:[#allocation3 + $0x78] sm:$0xff]
      %v3365 = vsub.f32 %v3349, %v3342
      %v3366 = vsub.f32 %v3350, %v3342
      %v3367 = vsub.f32 %v3351, %v3342
      %v3368 = vsub.f32 %v3352, %v3342
      %v3369 = vsub.f32 %v3353, %v3342
      %v3370 = vsub.f32 %v3354, %v3342
      %v3371 = vsub.f32 %v3355, %v3342
      %v3372 = vsub.f32 %v3356, %v3342
      %v3373 = vsub.f32 %v3357, %v3342
      %v3374 = vsub.f32 %v3358, %v3342
      %v3375 = vsub.f32 %v3359, %v3342
      %v3376 = vsub.f32 %v3360, %v3342
      %v3377 = vsub.f32 %v3361, %v3342
      %v3378 = vsub.f32 %v3362, %v3342
      %v3379 = vsub.f32 %v3363, %v3342
      %v3380 = vsub.f32 %v3364, %v3342
      %v3381 = vmul.f32 %v3365, %v3348
      %v3382 = vmul.f32 %v3366, %v3348
      %v3383 = vmul.f32 %v3367, %v3348
      %v3384 = vmul.f32 %v3368, %v3348
      %v3385 = vmul.f32 %v3369, %v3348
      %v3386 = vmul.f32 %v3370, %v3348
      %v3387 = vmul.f32 %v3371, %v3348
      %v3388 = vmul.f32 %v3372, %v3348
      %v3389 = vmul.f32 %v3373, %v3348
      %v3390 = vmul.f32 %v3374, %v3348
      %v3391 = vmul.f32 %v3375, %v3348
      %v3392 = vmul.f32 %v3376, %v3348
      %v3393 = vmul.f32 %v3377, %v3348
      %v3394 = vmul.f32 %v3378, %v3348
      %v3395 = vmul.f32 %v3379, %v3348
      %v3396 = vmul.f32 %v3380, %v3348
      %v3397 = vld [vmem:[%s165] sm:$0xff]
      %v3398 = vld [vmem:[%s165 + $0x8] sm:$0xff]
      %v3399 = vld [vmem:[%s165 + $0x10] sm:$0xff]
      %v3400 = vld [vmem:[%s165 + $0x18] sm:$0xff]
      %v3401 = vld [vmem:[%s165 + $0x20] sm:$0xff]
      %v3402 = vld [vmem:[%s165 + $0x28] sm:$0xff]
      %v3403 = vld [vmem:[%s165 + $0x30] sm:$0xff]
      %v3404 = vld [vmem:[%s165 + $0x38] sm:$0xff]
      %v3405 = vld [vmem:[%s165 + $0x40] sm:$0xff]
      %v3406 = vld [vmem:[%s165 + $0x48] sm:$0xff]
      %v3407 = vld [vmem:[%s165 + $0x50] sm:$0xff]
      %v3408 = vld [vmem:[%s165 + $0x58] sm:$0xff]
      %v3409 = vld [vmem:[%s165 + $0x60] sm:$0xff]
      %v3410 = vld [vmem:[%s165 + $0x68] sm:$0xff]
      %v3411 = vld [vmem:[%s165 + $0x70] sm:$0xff]
      %v3412 = vld [vmem:[%s165 + $0x78] sm:$0xff]
      %v3413 = vadd.f32 %v3397, %v3381
      %v3414 = vadd.f32 %v3398, %v3382
      %v3415 = vadd.f32 %v3399, %v3383
      %v3416 = vadd.f32 %v3400, %v3384
      %v3417 = vadd.f32 %v3401, %v3385
      %v3418 = vadd.f32 %v3402, %v3386
      %v3419 = vadd.f32 %v3403, %v3387
      %v3420 = vadd.f32 %v3404, %v3388
      %v3421 = vadd.f32 %v3405, %v3389
      %v3422 = vadd.f32 %v3406, %v3390
      %v3423 = vadd.f32 %v3407, %v3391
      %v3424 = vadd.f32 %v3408, %v3392
      %v3425 = vadd.f32 %v3409, %v3393
      %v3426 = vadd.f32 %v3410, %v3394
      %v3427 = vadd.f32 %v3411, %v3395
      %v3428 = vadd.f32 %v3412, %v3396
      %3429 = vst.msk [vmem:[%s170] sm:$0xff] %vm370, %v3413
      %3430 = vst.msk [vmem:[%s170 + $0x8] sm:$0xff] %vm370, %v3414
      %3431 = vst.msk [vmem:[%s170 + $0x10] sm:$0xff] %vm370, %v3415
      %3432 = vst.msk [vmem:[%s170 + $0x18] sm:$0xff] %vm370, %v3416
      %3433 = vst.msk [vmem:[%s170 + $0x20] sm:$0xff] %vm370, %v3417
      %3434 = vst.msk [vmem:[%s170 + $0x28] sm:$0xff] %vm370, %v3418
      %3435 = vst.msk [vmem:[%s170 + $0x30] sm:$0xff] %vm370, %v3419
      %3436 = vst.msk [vmem:[%s170 + $0x38] sm:$0xff] %vm370, %v3420
      %3437 = vst.msk [vmem:[%s170 + $0x40] sm:$0xff] %vm370, %v3421
      %3438 = vst.msk [vmem:[%s170 + $0x48] sm:$0xff] %vm370, %v3422
      %3439 = vst.msk [vmem:[%s170 + $0x50] sm:$0xff] %vm370, %v3423
      %3440 = vst.msk [vmem:[%s170 + $0x58] sm:$0xff] %vm370, %v3424
      %3441 = vst.msk [vmem:[%s170 + $0x60] sm:$0xff] %vm370, %v3425
      %3442 = vst.msk [vmem:[%s170 + $0x68] sm:$0xff] %vm370, %v3426
      %3443 = vst.msk [vmem:[%s170 + $0x70] sm:$0xff] %vm370, %v3427
      %3444 = vst.msk [vmem:[%s170 + $0x78] sm:$0xff] %vm370, %v3428
      %v3445 = vld [vmem:[#allocation3 + $0x80] sm:$0xff]
      %v3446 = vld [vmem:[#allocation3 + $0x88] sm:$0xff]
      %v3447 = vld [vmem:[#allocation3 + $0x90] sm:$0xff]
      %v3448 = vld [vmem:[#allocation3 + $0x98] sm:$0xff]
      %v3449 = vld [vmem:[#allocation3 + $0xa0] sm:$0xff]
      %v3450 = vld [vmem:[#allocation3 + $0xa8] sm:$0xff]
      %v3451 = vld [vmem:[#allocation3 + $0xb0] sm:$0xff]
      %v3452 = vld [vmem:[#allocation3 + $0xb8] sm:$0xff]
      %v3453 = vld [vmem:[#allocation3 + $0xc0] sm:$0xff]
      %v3454 = vld [vmem:[#allocation3 + $0xc8] sm:$0xff]
      %v3455 = vld [vmem:[#allocation3 + $0xd0] sm:$0xff]
      %v3456 = vld [vmem:[#allocation3 + $0xd8] sm:$0xff]
      %v3457 = vld [vmem:[#allocation3 + $0xe0] sm:$0xff]
      %v3458 = vld [vmem:[#allocation3 + $0xe8] sm:$0xff]
      %v3459 = vld [vmem:[#allocation3 + $0xf0] sm:$0xff]
      %v3460 = vld [vmem:[#allocation3 + $0xf8] sm:$0xff]
      %v3461 = vsub.f32 %v3445, %v3342
      %v3462 = vsub.f32 %v3446, %v3342
      %v3463 = vsub.f32 %v3447, %v3342
      %v3464 = vsub.f32 %v3448, %v3342
      %v3465 = vsub.f32 %v3449, %v3342
      %v3466 = vsub.f32 %v3450, %v3342
      %v3467 = vsub.f32 %v3451, %v3342
      %v3468 = vsub.f32 %v3452, %v3342
      %v3469 = vsub.f32 %v3453, %v3342
      %v3470 = vsub.f32 %v3454, %v3342
      %v3471 = vsub.f32 %v3455, %v3342
      %v3472 = vsub.f32 %v3456, %v3342
      %v3473 = vsub.f32 %v3457, %v3342
      %v3474 = vsub.f32 %v3458, %v3342
      %v3475 = vsub.f32 %v3459, %v3342
      %v3476 = vsub.f32 %v3460, %v3342
      %v3477 = vmul.f32 %v3461, %v3348
      %v3478 = vmul.f32 %v3462, %v3348
      %v3479 = vmul.f32 %v3463, %v3348
      %v3480 = vmul.f32 %v3464, %v3348
      %v3481 = vmul.f32 %v3465, %v3348
      %v3482 = vmul.f32 %v3466, %v3348
      %v3483 = vmul.f32 %v3467, %v3348
      %v3484 = vmul.f32 %v3468, %v3348
      %v3485 = vmul.f32 %v3469, %v3348
      %v3486 = vmul.f32 %v3470, %v3348
      %v3487 = vmul.f32 %v3471, %v3348
      %v3488 = vmul.f32 %v3472, %v3348
      %v3489 = vmul.f32 %v3473, %v3348
      %v3490 = vmul.f32 %v3474, %v3348
      %v3491 = vmul.f32 %v3475, %v3348
      %v3492 = vmul.f32 %v3476, %v3348
      %v3493 = vld [vmem:[%s429] sm:$0xff]
      %v3494 = vld [vmem:[%s429 + $0x8] sm:$0xff]
      %v3495 = vld [vmem:[%s429 + $0x10] sm:$0xff]
      %v3496 = vld [vmem:[%s429 + $0x18] sm:$0xff]
      %v3497 = vld [vmem:[%s429 + $0x20] sm:$0xff]
      %v3498 = vld [vmem:[%s429 + $0x28] sm:$0xff]
      %v3499 = vld [vmem:[%s429 + $0x30] sm:$0xff]
      %v3500 = vld [vmem:[%s429 + $0x38] sm:$0xff]
      %v3501 = vld [vmem:[%s429 + $0x40] sm:$0xff]
      %v3502 = vld [vmem:[%s429 + $0x48] sm:$0xff]
      %v3503 = vld [vmem:[%s429 + $0x50] sm:$0xff]
      %v3504 = vld [vmem:[%s429 + $0x58] sm:$0xff]
      %v3505 = vld [vmem:[%s429 + $0x60] sm:$0xff]
      %v3506 = vld [vmem:[%s429 + $0x68] sm:$0xff]
      %v3507 = vld [vmem:[%s429 + $0x70] sm:$0xff]
      %v3508 = vld [vmem:[%s429 + $0x78] sm:$0xff]
      %v3509 = vadd.f32 %v3493, %v3477
      %v3510 = vadd.f32 %v3494, %v3478
      %v3511 = vadd.f32 %v3495, %v3479
      %v3512 = vadd.f32 %v3496, %v3480
      %v3513 = vadd.f32 %v3497, %v3481
      %v3514 = vadd.f32 %v3498, %v3482
      %v3515 = vadd.f32 %v3499, %v3483
      %v3516 = vadd.f32 %v3500, %v3484
      %v3517 = vadd.f32 %v3501, %v3485
      %v3518 = vadd.f32 %v3502, %v3486
      %v3519 = vadd.f32 %v3503, %v3487
      %v3520 = vadd.f32 %v3504, %v3488
      %v3521 = vadd.f32 %v3505, %v3489
      %v3522 = vadd.f32 %v3506, %v3490
      %v3523 = vadd.f32 %v3507, %v3491
      %v3524 = vadd.f32 %v3508, %v3492
      %s3525 = scalar_lea.vmem %s170, 128
      %3526 = vst.msk [vmem:[%s3525] sm:$0xff] %vm370, %v3509
      %3527 = vst.msk [vmem:[%s3525 + $0x8] sm:$0xff] %vm370, %v3510
      %3528 = vst.msk [vmem:[%s3525 + $0x10] sm:$0xff] %vm370, %v3511
      %3529 = vst.msk [vmem:[%s3525 + $0x18] sm:$0xff] %vm370, %v3512
      %3530 = vst.msk [vmem:[%s3525 + $0x20] sm:$0xff] %vm370, %v3513
      %3531 = vst.msk [vmem:[%s3525 + $0x28] sm:$0xff] %vm370, %v3514
      %3532 = vst.msk [vmem:[%s3525 + $0x30] sm:$0xff] %vm370, %v3515
      %3533 = vst.msk [vmem:[%s3525 + $0x38] sm:$0xff] %vm370, %v3516
      %3534 = vst.msk [vmem:[%s3525 + $0x40] sm:$0xff] %vm370, %v3517
      %3535 = vst.msk [vmem:[%s3525 + $0x48] sm:$0xff] %vm370, %v3518
      %3536 = vst.msk [vmem:[%s3525 + $0x50] sm:$0xff] %vm370, %v3519
      %3537 = vst.msk [vmem:[%s3525 + $0x58] sm:$0xff] %vm370, %v3520
      %3538 = vst.msk [vmem:[%s3525 + $0x60] sm:$0xff] %vm370, %v3521
      %3539 = vst.msk [vmem:[%s3525 + $0x68] sm:$0xff] %vm370, %v3522
      %3540 = vst.msk [vmem:[%s3525 + $0x70] sm:$0xff] %vm370, %v3523
      %3541 = vst.msk [vmem:[%s3525 + $0x78] sm:$0xff] %vm370, %v3524
      %p3542 = scmp.lt.s32.totalorder %s14, 1
      %s3543 = scalar_select %p3542, %s14, 1
      %s3544 = smul.addr %s3543, 32
      %s3545 = smul.addr %s3544, 8
      %s3546 = scalar_lea.vmem %s3, %s3545
      // Predicated region
      $region33: #{tpu_custom_call.1} parent=31 // pred_check
        %p3547 = pneg %p100
      $region34: #{tpu_custom_call.1} parent=31 // pred_check_branch
        %3549 = sbr.rel (%p3547) target = $region36
      $region35: #{tpu_custom_call.1} parent=31 // pred_region
        _
      $region36: #{tpu_custom_call.1} parent=31 // pred_fallthru
        _
    $region32: #{tpu_custom_call.1} parent=5 // pred_fallthru
      _
    %p3550 = scmp.le.s32.totalorder 2, %s9
    // Predicated region
    $region37: #{tpu_custom_call.1} parent=5 // pred_check
      %p3551 = pneg %p3550
    $region38: #{tpu_custom_call.1} parent=5 // pred_check_branch
      %3553 = sbr.rel (%p3551) target = $region40
    $region39: #{tpu_custom_call.1} parent=5 // pred_region
      %s3554 = ssub.s32 %s9, 2
      // Predicated region
      $region41: #{tpu_custom_call.1} parent=39 // pred_check
        %p3555 = pneg %p106
      $region42: #{tpu_custom_call.1} parent=39 // pred_check_branch
        %3557 = sbr.rel (%p3555) target = $region44
      $region43: #{tpu_custom_call.1} parent=39 // pred_region
        %p3558 = scmp.lt.s32.totalorder %s15, 1
        %s3559 = scalar_select %p3558, %s15, 1
        %s3560 = smul.addr %s3559, 32
        %s3561 = smul.addr %s3560, 8
        %s3562 = scalar_lea.vmem %s3, %s3561
      $region44: #{tpu_custom_call.1} parent=39 // pred_fallthru
        _
    $region40: #{tpu_custom_call.1} parent=5 // pred_fallthru
      _
  $region6: #{tpu_custom_call.1} parent=0 // loop_footer
    %s13 = sadd.s32 1, %s9
  $region7: #{tpu_custom_call.1} parent=0 // loop_footer_branch
    %8 = sbr.rel target = $region3
  $region8: #{tpu_custom_call.1} parent=0 // loop_exit
    _

</llo_original>
